<compile_context>
chip_gen: v5e
topology: v5e:2x2
jax: 0.10.0
libtpu: 0.0.40
codegen_flags: <defaults>
</compile_context>

<pallas_src>
import functools
import math

import jax
import jax.numpy as jnp
from jax.experimental import pallas as pl
from jax.experimental.pallas import tpu as pltpu


def _round_up(x, m):
    return ((x + m - 1) // m) * m


def _act(y, act):
    if act == "none":
        return y
    if act == "relu":
        return jnp.maximum(y, 0.0)
    if act == "lrelu":
        return jnp.where(y > 0, y, 0.2 * y)
    if act == "tanh":
        return jnp.tanh(y)
    raise ValueError(act)


# ---------------- Pallas batched matmul with fused bias/activation -----------

def _mm_kernel(a_ref, b_ref, bias_ref, o_ref, acc_ref, *, act):
    @pl.when(pl.program_id(3) == 0)
    def _():
        acc_ref[...] = jnp.zeros_like(acc_ref)

    acc_ref[...] += jnp.dot(a_ref[0], b_ref[0],
                            preferred_element_type=jnp.float32)

    @pl.when(pl.program_id(3) == pl.num_programs(3) - 1)
    def _():
        y = acc_ref[...] + bias_ref[...]
        o_ref[0] = _act(y, act).astype(o_ref.dtype)


@functools.partial(jax.jit, static_argnames=("tm", "tn", "tk", "act", "out_dtype"))
def _bmm_core(a, b, bias, *, tm, tn, tk, act, out_dtype):
    G, Mp, Kp = a.shape
    _, _, Np = b.shape
    grid = (G, Mp // tm, Np // tn, Kp // tk)
    return pl.pallas_call(
        functools.partial(_mm_kernel, act=act),
        out_shape=jax.ShapeDtypeStruct((G, Mp, Np), out_dtype),
        grid_spec=pltpu.PrefetchScalarGridSpec(
            num_scalar_prefetch=0,
            grid=grid,
            in_specs=[
                pl.BlockSpec((1, tm, tk), lambda g, i, j, k: (g, i, k)),
                pl.BlockSpec((1, tk, tn), lambda g, i, j, k: (g, k, j)),
                pl.BlockSpec((1, tn), lambda g, i, j, k: (0, j)),
            ],
            out_specs=pl.BlockSpec((1, tm, tn), lambda g, i, j, k: (g, i, j)),
            scratch_shapes=[pltpu.VMEM((tm, tn), jnp.float32)],
        ),
        compiler_params=pltpu.CompilerParams(
            dimension_semantics=("parallel", "parallel", "parallel", "arbitrary"),
            vmem_limit_bytes=32 * 1024 * 1024,
        ),
    )(a, b, bias)


def pallas_bmm(a, b, bias=None, act="none", out_dtype=jnp.float32):
    """a: (G, M, K), b: (G, K, N) -> (G, M, N); bf16 MXU inputs, f32 acc,
    fused bias + activation epilogue.  Small K / N (< 128) stay unpadded."""
    G, M, K = a.shape
    _, _, N = b.shape

    if K < 8:
        Kp = 8
    elif K < 128:
        Kp = K
    else:
        Kp = _round_up(K, 128)
    if Kp < 128:
        tk = Kp
    else:
        tk = (1024 if Kp % 1024 == 0 else
              512 if Kp % 512 == 0 else
              256 if Kp % 256 == 0 else 128)

    if N < 8:
        Np = 8
    elif N < 128:
        Np = N
    else:
        Np = _round_up(N, 128)
    if Np < 128:
        tn = Np
    else:
        tn = (512 if Np % 512 == 0 else
              256 if Np % 256 == 0 else 128)

    if M < 256:
        tm = _round_up(max(M, 1), 16)
    else:
        tm = int(min(1024, _round_up(M, 256)))
    Mp = _round_up(M, tm)

    a_p = a.astype(jnp.bfloat16)
    if (Mp, Kp) != (M, K):
        a_p = jnp.pad(a_p, ((0, 0), (0, Mp - M), (0, Kp - K)))
    b_p = b.astype(jnp.bfloat16)
    if (Kp, Np) != (K, N):
        b_p = jnp.pad(b_p, ((0, 0), (0, Kp - K), (0, Np - N)))
    if bias is None:
        bias_p = jnp.zeros((1, Np), jnp.float32)
    else:
        bias_p = bias.astype(jnp.float32).reshape(1, N)
        if Np != N:
            bias_p = jnp.pad(bias_p, ((0, 0), (0, Np - N)))

    out = _bmm_core(a_p, b_p, bias_p, tm=tm, tn=tn, tk=tk, act=act,
                    out_dtype=out_dtype)
    return out[:, :M, :N]


def linear(x2d, w_io, b=None, act="none", out_dtype=jnp.bfloat16):
    """PyTorch Linear; weight stored pre-transposed as (in, out)."""
    return pallas_bmm(x2d[None], w_io[None], bias=b, act=act,
                      out_dtype=out_dtype)[0]


# ------------------- Pallas instance norm (token-major, NHWC) ----------------

def _inorm_kernel(x_ref, o_ref, *, act, chunk):
    hw, tc = x_ref.shape
    nchunk = hw // chunk
    inv_n = 1.0 / hw

    def sum_body(i, s):
        off = pl.multiple_of(i * chunk, chunk)
        xc = x_ref[pl.ds(off, chunk), :].astype(jnp.float32)
        return s + jnp.sum(xc, axis=0, keepdims=True)

    mu = jax.lax.fori_loop(0, nchunk, sum_body,
                           jnp.zeros((1, tc), jnp.float32)) * inv_n

    def var_body(i, v):
        off = pl.multiple_of(i * chunk, chunk)
        xc = x_ref[pl.ds(off, chunk), :].astype(jnp.float32) - mu
        return v + jnp.sum(xc * xc, axis=0, keepdims=True)

    var = jax.lax.fori_loop(0, nchunk, var_body,
                            jnp.zeros((1, tc), jnp.float32)) * inv_n
    scale = jax.lax.rsqrt(var + 1e-5)

    def out_body(i, carry):
        off = pl.multiple_of(i * chunk, chunk)
        xc = x_ref[pl.ds(off, chunk), :].astype(jnp.float32)
        o_ref[pl.ds(off, chunk), :] = _act((xc - mu) * scale, act).astype(o_ref.dtype)
        return carry

    jax.lax.fori_loop(0, nchunk, out_body, 0)


@functools.partial(jax.jit, static_argnames=("tc", "act", "chunk"))
def _inorm_core(x, *, tc, act, chunk):
    B, N, C = x.shape
    return pl.pallas_call(
        functools.partial(_inorm_kernel, act=act, chunk=chunk),
        out_shape=jax.ShapeDtypeStruct((B, N, C), jnp.bfloat16),
        grid_spec=pltpu.PrefetchScalarGridSpec(
            num_scalar_prefetch=0,
            grid=(B, C // tc),
            in_specs=[pl.BlockSpec((None, N, tc), lambda b, c: (b, 0, c))],
            out_specs=pl.BlockSpec((None, N, tc), lambda b, c: (b, 0, c)),
        ),
        compiler_params=pltpu.CompilerParams(
            dimension_semantics=("parallel", "parallel"),
            vmem_limit_bytes=32 * 1024 * 1024,
        ),
    )(x)


# ------------------- Pallas row-normalize (+affine, +activation) -------------

def _rownorm_kernel(x_ref, g_ref, b_ref, o_ref, *, eps, act):
    x = x_ref[...].astype(jnp.float32)
    mu = jnp.mean(x, axis=-1, keepdims=True)
    xc = x - mu
    var = jnp.mean(xc * xc, axis=-1, keepdims=True)
    y = xc * jax.lax.rsqrt(var + eps) * g_ref[...] + b_ref[...]
    o_ref[...] = _act(y, act).astype(o_ref.dtype)


@functools.partial(jax.jit, static_argnames=("rt", "eps", "act"))
def _rownorm_core(xp, gamma, beta, *, rt, eps, act):
    Rp, F = xp.shape
    return pl.pallas_call(
        functools.partial(_rownorm_kernel, eps=eps, act=act),
        out_shape=jax.ShapeDtypeStruct((Rp, F), jnp.bfloat16),
        grid_spec=pltpu.PrefetchScalarGridSpec(
            num_scalar_prefetch=0,
            grid=(Rp // rt,),
            in_specs=[
                pl.BlockSpec((rt, F), lambda i: (i, 0)),
                pl.BlockSpec((1, F), lambda i: (0, 0)),
                pl.BlockSpec((1, F), lambda i: (0, 0)),
            ],
            out_specs=pl.BlockSpec((rt, F), lambda i: (i, 0)),
        ),
        compiler_params=pltpu.CompilerParams(
            dimension_semantics=("parallel",),
            vmem_limit_bytes=32 * 1024 * 1024,
        ),
    )(xp, gamma, beta)


def _pick_rows(R, F):
    cap = max(8, ((2 * 1024 * 1024) // (4 * F)) // 8 * 8)
    return int(min(_round_up(R, 8), 256, cap))


def row_norm_act(x2d, gamma, beta, eps=1e-5, act="none"):
    """Normalize each row of x2d; bf16 in / bf16 out; optional affine."""
    R, F = x2d.shape
    if F < 128:  # tiny rows: a Pallas kernel would be pure masked-lane overhead
        x = x2d.astype(jnp.float32)
        mu = jnp.mean(x, axis=-1, keepdims=True)
        var = jnp.mean(jnp.square(x - mu), axis=-1, keepdims=True)
        y = (x - mu) * jax.lax.rsqrt(var + eps)
        if gamma is not None:
            y = y * gamma + beta
        return _act(y, act).astype(jnp.bfloat16)
    rt = _pick_rows(R, F)
    Rp = _round_up(R, rt)
    xpad = x2d.astype(jnp.bfloat16)
    if Rp != R:
        xpad = jnp.pad(xpad, ((0, Rp - R), (0, 0)))
    if gamma is None:
        g = jnp.ones((1, F), jnp.float32)
        b = jnp.zeros((1, F), jnp.float32)
    else:
        g = gamma.astype(jnp.float32).reshape(1, F)
        b = beta.astype(jnp.float32).reshape(1, F)
    out = _rownorm_core(xpad, g, b, rt=rt, eps=eps, act=act)
    return out[:R]


def layer_norm(x, g, b):  # (..., D) -> bf16
    D = x.shape[-1]
    return row_norm_act(x.reshape(-1, D), g, b, eps=1e-5,
                        act="none").reshape(x.shape)


def instance_norm_act_tokens(x, act):
    """x: (B, N, C) tokens; InstanceNorm over N per (B, C) with a fused
    activation.  Matches nn.InstanceNorm2d(affine=False, eps=1e-5) after
    flattening the spatial dims (norm is permutation invariant over N)."""
    B, N, C = x.shape
    if N * C < 8192 or N % 8 != 0:  # tiny maps: Pallas would be pure overhead
        x32 = x.astype(jnp.float32)
        mu = jnp.mean(x32, axis=1, keepdims=True)
        var = jnp.mean(jnp.square(x32 - mu), axis=1, keepdims=True)
        y = (x32 - mu) * jax.lax.rsqrt(var + 1e-5)
        return _act(y, act).astype(jnp.bfloat16)
    tc = 128 if C % 128 == 0 else C
    chunk = math.gcd(N, 2048)
    if N * _round_up(tc, 128) * 2 <= 6 * 1024 * 1024 and chunk % 8 == 0:
        return _inorm_core(x.astype(jnp.bfloat16), tc=tc, act=act, chunk=chunk)
    # Huge N with few channels: put N on the lane axis instead (row-norm).
    x2 = jnp.transpose(x, (0, 2, 1)).reshape(B * C, N)
    y = row_norm_act(x2, None, None, eps=1e-5, act=act)
    return jnp.transpose(y.reshape(B, C, N), (0, 2, 1))


# ----------------------------- Fused attention --------------------------------

def _attn_kernel(q_ref, k_ref, v_ref, o_ref, *, scale):
    q = (q_ref[0].astype(jnp.float32) * scale).astype(jnp.bfloat16)
    k = k_ref[0]
    v = v_ref[0]
    s = jax.lax.dot_general(q, k, (((1,), (1,)), ((), ())),
                            preferred_element_type=jnp.float32)
    m = jnp.max(s, axis=-1, keepdims=True)
    e = jnp.exp(s - m)
    l = jnp.sum(e, axis=-1, keepdims=True)
    o = jnp.dot(e.astype(jnp.bfloat16), v, preferred_element_type=jnp.float32)
    o_ref[0] = (o * pl.reciprocal(l, approx=True)).astype(o_ref.dtype)


@functools.partial(jax.jit, static_argnames=("scale",))
def _attn_core(q, k, v, *, scale):
    G, N, dh = q.shape
    return pl.pallas_call(
        functools.partial(_attn_kernel, scale=scale),
        out_shape=jax.ShapeDtypeStruct((G, N, dh), jnp.bfloat16),
        grid_spec=pltpu.PrefetchScalarGridSpec(
            num_scalar_prefetch=0,
            grid=(G,),
            in_specs=[pl.BlockSpec((1, N, dh), lambda g: (g, 0, 0))] * 3,
            out_specs=pl.BlockSpec((1, N, dh), lambda g: (g, 0, 0)),
        ),
        compiler_params=pltpu.CompilerParams(
            dimension_semantics=("parallel",),
            vmem_limit_bytes=32 * 1024 * 1024,
        ),
    )(q, k, v)


def fused_attention(q, k, v, scale):
    """q,k,v: (B*heads, N, dh).  Scores/softmax/@V stay in VMEM; no head-dim
    padding in HBM; bf16 output."""
    return _attn_core(q.astype(jnp.bfloat16), k.astype(jnp.bfloat16),
                      v.astype(jnp.bfloat16), scale=float(scale))


# ----------------------- Convolutions (Pallas matmuls) ------------------------

def conv2d(x, w, bias=None, stride=1, pad=1, act="none", out_dtype=jnp.bfloat16):
    """x: NHWC, w: PyTorch Conv2d weight (O, I, kh, kw)."""
    x = x.astype(jnp.bfloat16)
    B, H, W, C = x.shape
    O, I, kh, kw = w.shape
    oh = (H + 2 * pad - kh) // stride + 1
    ow = (W + 2 * pad - kw) // stride + 1

    if kh == 1 and kw == 1 and stride == 1 and pad == 0:
        w2 = jnp.transpose(w[:, :, 0, 0], (1, 0))                 # (I, O)
        out = pallas_bmm(x.reshape(1, B * H * W, C), w2[None],
                         bias=bias, act=act, out_dtype=out_dtype)[0]
        return out.reshape(B, oh, ow, O)

    xp = jnp.pad(x, ((0, 0), (pad, pad), (pad, pad), (0, 0)))

    if stride == 1 and O < I:
        # Input-stationary (O << C): one matmul C -> kh*kw*O per input pixel
        # plus a cheap shifted tap-sum (no kh*kw*C im2col).
        Hp, Wp = H + 2 * pad, W + 2 * pad
        w2 = jnp.transpose(w, (1, 2, 3, 0)).reshape(I, kh * kw * O)
        z = pallas_bmm(xp.reshape(1, B * Hp * Wp, C), w2[None],
                       act="none", out_dtype=jnp.float32)[0]
        z = z.reshape(B, Hp, Wp, kh, kw, O)
        y = z[:, 0:oh, 0:ow, 0, 0, :]
        for di in range(kh):
            for dj in range(kw):
                if di == 0 and dj == 0:
                    continue
                y = y + z[:, di:di + oh, dj:dj + ow, di, dj, :]
        if bias is not None:
            y = y + bias
        return _act(y, act).astype(out_dtype)

    # im2col path (stride-2 down convs), built in bf16; bias/act fused in matmul.
    # TODO(synk): stream the kh*kw taps inside the matmul kernel (tap grid axis)
    # to avoid this HBM patch materialization.
    cols = [xp[:, i:i + oh * stride:stride, j:j + ow * stride:stride, :]
            for i in range(kh) for j in range(kw)]
    patches = jnp.stack(cols, axis=3).reshape(1, B * oh * ow, kh * kw * C)
    wr = jnp.transpose(w, (2, 3, 1, 0)).reshape(1, kh * kw * I, O)
    out = pallas_bmm(patches, wr, bias=bias, act=act, out_dtype=out_dtype)[0]
    return out.reshape(B, oh, ow, O)


def conv_transpose2d_phases(x, w):
    """PyTorch ConvTranspose2d(kernel=4, stride=2, pad=1, bias=False).

    Phase decomposition: each of the 4 output-pixel parities is a stride-1
    2x2 conv of x (no zero-dilated input).  Returns the PHASE-MAJOR result
    Y of shape (B, 4, H, W, O), where Y[b, 2r+c, h, w] = out[b, 2h+r, 2w+c];
    the interleave to (B, 2H, 2W, O) is deferred until after the norm."""
    x = x.astype(jnp.bfloat16)
    B, H, W, C = x.shape
    I, O, kh, kw = w.shape
    assert (kh, kw) == (4, 4) and I == C
    wf = jnp.transpose(jnp.flip(w, axis=(2, 3)), (1, 0, 2, 3))    # (O, I, 4, 4)
    xp = jnp.pad(x, ((0, 0), (1, 1), (1, 1), (0, 0)))

    patches, weights = [], []
    for r in range(2):
        for c in range(2):
            taps = [xp[:, r + a:r + a + H, c + b:c + b + W, :]
                    for a in range(2) for b in range(2)]
            patches.append(jnp.stack(taps, axis=3).reshape(B, H * W, 4 * C))
            wsub = wf[:, :, r::2, c::2]                           # (O, I, 2, 2)
            weights.append(jnp.transpose(wsub, (2, 3, 1, 0)).reshape(4 * C, O))
    A = jnp.stack(patches, axis=1).reshape(B * 4, H * W, 4 * C)
    Wm = jnp.tile(jnp.stack(weights)[None], (B, 1, 1, 1)).reshape(B * 4, 4 * C, O)
    Y = pallas_bmm(A, Wm, act="none", out_dtype=jnp.bfloat16)     # (B*4, H*W, O)
    return Y.reshape(B, 4, H, W, O)


# ------------------------------ Module pieces ---------------------------------

def unet_down(x, w, normalize=True):
    # dropout: identity (eval mode)
    if not normalize:
        return conv2d(x, w, None, stride=2, pad=1, act="lrelu")
    y = conv2d(x, w, None, stride=2, pad=1, act="none")
    B, H, W, O = y.shape
    yn = instance_norm_act_tokens(y.reshape(B, H * W, O), act="lrelu")
    return yn.reshape(B, H, W, O)


def unet_up(x, skip, w):
    yp = conv_transpose2d_phases(x, w)                 # (B, 4, H, W, O) phase-major
    B, _, H, W, O = yp.shape
    # InstanceNorm is spatial-permutation invariant -> normalize phase-major,
    # interleave only once, right before the skip concat.
    yn = instance_norm_act_tokens(yp.reshape(B, 4 * H * W, O), act="relu")
    y = yn.reshape(B, 2, 2, H, W, O).transpose(0, 3, 1, 4, 2, 5)
    y = y.reshape(B, 2 * H, 2 * W, O)
    return jnp.concatenate([y, skip.astype(y.dtype)], axis=-1)


def attention(x, p, heads):
    B, N, D = x.shape
    dh = D // heads
    qkv = linear(x.reshape(B * N, D), p["qkv_w"], out_dtype=jnp.bfloat16)
    qkv = qkv.reshape(B, N, 3, heads, dh).transpose(2, 0, 3, 1, 4)
    q = qkv[0].reshape(B * heads, N, dh)
    k = qkv[1].reshape(B * heads, N, dh)
    v = qkv[2].reshape(B * heads, N, dh)
    o = fused_attention(q, k, v, scale=1.0 / math.sqrt(dh))
    o = o.reshape(B, heads, N, dh).transpose(0, 2, 1, 3).reshape(B * N, D)
    o = linear(o, p["proj_w"], p["proj_b"], out_dtype=jnp.bfloat16)
    return o.reshape(B, N, D)


def encoder_block(x, p, heads):
    B, N, D = x.shape
    h = layer_norm(x, p["ln1_g"], p["ln1_b"])
    x = x + attention(h, p, heads)
    h = layer_norm(x, p["ln2_g"], p["ln2_b"])
    y = linear(h.reshape(B * N, D), p["fc1_w"], p["fc1_b"], out_dtype=jnp.bfloat16)
    y = jax.nn.gelu(y.astype(jnp.float32), approximate=False).astype(jnp.bfloat16)
    y = linear(y, p["fc2_w"], p["fc2_b"], out_dtype=jnp.bfloat16)
    return x + y.reshape(B, N, D)


def token_upsample(x, H, W):
    # permute -> view(B,C,H,W) -> PixelShuffle(2) -> back to tokens.
    B, N, C = x.shape
    r = 2
    y = jnp.transpose(x, (0, 2, 1)).reshape(B, C // (r * r), r, r, H, W)
    y = jnp.transpose(y, (0, 1, 4, 2, 5, 3)).reshape(B, C // (r * r),
                                                     H * r, W * r)
    H, W = H * r, W * r
    return jnp.transpose(y.reshape(B, C // (r * r), H * W), (0, 2, 1)), H, W


def final_block(u7, w, b):
    """nn.Upsample(x2) -> ZeroPad2d((1,0,1,0)) -> Conv2d(C,1,4,padding=1) -> Tanh.
    Reordered: per-pixel C -> kh*kw*O matmul on the un-upsampled SxS map, then
    x2 nearest upsample / shift / tap-sum on the 16-channel result."""
    B, S, _, C = u7.shape
    O, I, kh, kw = w.shape
    w2 = jnp.transpose(w, (1, 2, 3, 0)).reshape(1, I, kh * kw * O)
    z = pallas_bmm(u7.reshape(1, B * S * S, C), w2,
                   act="none", out_dtype=jnp.float32)[0]
    z = z.reshape(B, S, S, kh, kw, O)
    zu = jnp.repeat(jnp.repeat(z, 2, axis=1), 2, axis=2)          # (B,2S,2S,4,4,O)
    zup = jnp.pad(zu, ((0, 0), (2, 2), (2, 2), (0, 0), (0, 0), (0, 0)))
    S2 = 2 * S
    out = zup[:, 0:S2, 0:S2, 0, 0, :]
    for di in range(kh):
        for dj in range(kw):
            if di == 0 and dj == 0:
                continue
            out = out + zup[:, di:di + S2, dj:dj + S2, di, dj, :]
    return jnp.tanh(out + b)                                       # (B,2S,2S,O) f32


# ------------------------------- Parameters -----------------------------------

def make_v4_params(key, *, dim=256, initial_size=8, heads=4, mlp_ratio=4,
                   depth1=5, depth2=4, depth3=2, base=8, tch=8, in_channels=1):
    keys = iter(jax.random.split(key, 128))

    def conv_w(o, i, k):
        return jax.random.normal(next(keys), (o, i, k, k),
                                 jnp.float32) / math.sqrt(i * k * k)

    def convt_w(i, o, k):
        return jax.random.normal(next(keys), (i, o, k, k),
                                 jnp.float32) / math.sqrt(i * k * k)

    def lin_w(i, o):  # pre-transposed: stored (in, out)
        return jax.random.normal(next(keys), (i, o), jnp.float32) / math.sqrt(i)

    def enc_block(d):
        return dict(
            ln1_g=jnp.ones((d,), jnp.float32), ln1_b=jnp.zeros((d,), jnp.float32),
            qkv_w=lin_w(d, 3 * d),
            proj_w=lin_w(d, d), proj_b=jnp.zeros((d,), jnp.float32),
            ln2_g=jnp.ones((d,), jnp.float32), ln2_b=jnp.zeros((d,), jnp.float32),
            fc1_w=lin_w(d, d * mlp_ratio),
            fc1_b=jnp.zeros((d * mlp_ratio,), jnp.float32),
            fc2_w=lin_w(d * mlp_ratio, d),
            fc2_b=jnp.zeros((d,), jnp.float32),
        )

    b1, b2, b4, b8 = base, 2 * base, 4 * base, 8 * base
    return dict(
        cfg=dict(dim=dim, initial_size=initial_size, heads=heads),
        # shallow "trans" UNet
        td1_w=conv_w(tch, in_channels, 4), td2_w=conv_w(tch, tch, 4),
        td3_w=conv_w(3, tch, 4),
        linear1_w=lin_w(3 * 32 * 32, 1024),
        linear1_b=jnp.zeros((1024,), jnp.float32),
        mlp_w=lin_w(1024, initial_size ** 2 * dim),
        mlp_b=jnp.zeros((initial_size ** 2 * dim,), jnp.float32),
        pos1=jnp.zeros((1, initial_size ** 2, dim), jnp.float32),
        pos2=jnp.zeros((1, (initial_size * 2) ** 2, dim // 4), jnp.float32),
        pos3=jnp.zeros((1, (initial_size * 4) ** 2, dim // 16), jnp.float32),
        lin_conv_w=conv_w(3, dim // 16, 1),
        lin_conv_b=jnp.zeros((3,), jnp.float32),
        tu1_w=convt_w(3, tch, 4), tu2_w=convt_w(2 * tch, tch, 4),
        tu3_w=convt_w(2 * tch, 1, 4),
        out_layer_w=conv_w(1, 2, 3), out_layer_b=jnp.zeros((1,), jnp.float32),
        # deep UNet
        d1_w=conv_w(b1, in_channels, 4), d2_w=conv_w(b2, b1, 4),
        d3_w=conv_w(b4, b2, 4), d4_w=conv_w(b8, b4, 4),
        d5_w=conv_w(b8, b8, 4), d6_w=conv_w(b8, b8, 4),
        d7_w=conv_w(b8, b8, 4), d8_w=conv_w(b8, b8, 4),
        u1_w=convt_w(b8, b8, 4), u2_w=convt_w(2 * b8, b8, 4),
        u3_w=convt_w(2 * b8, b8, 4), u4_w=convt_w(2 * b8, b8, 4),
        u5_w=convt_w(2 * b8, b4, 4), u6_w=convt_w(2 * b4, b2, 4),
        u7_w=convt_w(2 * b2, b1, 4),
        final_w=conv_w(1, 2 * b1, 4), final_b=jnp.zeros((1,), jnp.float32),
        # up8 exists in __init__ but is never used in forward -> omitted.
        enc1=[enc_block(dim) for _ in range(depth1)],
        enc2=[enc_block(dim // 4) for _ in range(depth2)],
        enc3=[enc_block(dim // 16) for _ in range(depth3)],
    )


# ----------------------------- Forward (one AB) --------------------------------

def forward_v4(p, x_nchw):
    cfg = p["cfg"]
    dim, isz, heads = cfg["dim"], cfg["initial_size"], cfg["heads"]
    x = jnp.transpose(x_nchw, (0, 2, 3, 1)).astype(jnp.bfloat16)  # NCHW -> NHWC
    B = x.shape[0]
    tmp_input = x

    t1 = unet_down(x, p["td1_w"], normalize=False)
    t2 = unet_down(t1, p["td2_w"])
    t3 = unet_down(t2, p["td3_w"])

    z = jnp.transpose(t3, (0, 3, 1, 2)).reshape(B, -1)            # NCHW flatten
    z = linear(z, p["linear1_w"], p["linear1_b"], out_dtype=jnp.bfloat16)
    z = linear(z, p["mlp_w"], p["mlp_b"], out_dtype=jnp.bfloat16)
    z = z.reshape(B, isz * isz, dim)
    z = z + p["pos1"].astype(z.dtype)
    H = W = isz
    for blk in p["enc1"]:
        z = encoder_block(z, blk, heads)
    z, H, W = token_upsample(z, H, W)
    z = z + p["pos2"].astype(z.dtype)
    for blk in p["enc2"]:
        z = encoder_block(z, blk, heads)
    z, H, W = token_upsample(z, H, W)
    z = z + p["pos3"].astype(z.dtype)
    for blk in p["enc3"]:
        z = encoder_block(z, blk, heads)

    feat = z.reshape(B, H, W, dim // 16)          # token n = h*W + w -> NHWC
    feat = conv2d(feat, p["lin_conv_w"], p["lin_conv_b"], stride=1, pad=0)
    y = unet_up(feat, t2, p["tu1_w"])
    y = unet_up(y, t1, p["tu2_w"])
    y = unet_up(y, tmp_input, p["tu3_w"])
    trans_out = conv2d(y, p["out_layer_w"], p["out_layer_b"], stride=1, pad=1)

    new_in = ((trans_out.astype(jnp.float32) + tmp_input.astype(jnp.float32))
              * 0.5).astype(jnp.bfloat16)

    d1 = unet_down(new_in, p["d1_w"], normalize=False)
    d2 = unet_down(d1, p["d2_w"]); d3 = unet_down(d2, p["d3_w"])
    d4 = unet_down(d3, p["d4_w"]); d5 = unet_down(d4, p["d5_w"])
    d6 = unet_down(d5, p["d6_w"]); d7 = unet_down(d6, p["d7_w"])
    d8 = unet_down(d7, p["d8_w"], normalize=False)

    u1 = unet_up(d8, d7, p["u1_w"]); u2 = unet_up(u1, d6, p["u2_w"])
    u3 = unet_up(u2, d5, p["u3_w"]); u4 = unet_up(u3, d4, p["u4_w"])
    u5 = unet_up(u4, d3, p["u5_w"]); u6 = unet_up(u5, d2, p["u6_w"])
    u7 = unet_up(u6, d1, p["u7_w"])

    f = final_block(u7, p["final_w"], p["final_b"])   # matmul before upsample
    return jnp.transpose(f, (0, 3, 1, 2))             # back to NCHW, f32


def trans_generator_unet_ababab(params3, x):
    p1, p2, p3 = params3
    out1 = forward_v4(p1, x)
    out2 = forward_v4(p2, (out1 + x) / 2.0)
    out3 = forward_v4(p3, (x + out1 + out2) / 3.0)
    return out3


# ----------------------------------- Main --------------------------------------

if __name__ == "__main__":
    key = jax.random.PRNGKey(0)
    kx, k1, k2, k3 = jax.random.split(key, 4)
    # The architecture hard-wires 3*(256/8)^2 = 3072 flatten features and eight
    # stride-2 UNet stages, so the spatial size must be 256x256.  Channel /
    # embedding widths are reduced here so the 3-generator forward stays small;
    # the full-size configuration is dim=1024, base=64, tch=16 with the same code.
    cfg = dict(dim=256, initial_size=8, heads=4, mlp_ratio=4,
               depth1=5, depth2=4, depth3=2, base=8, tch=8, in_channels=1)
    x = jax.random.normal(kx, (1, 1, 256, 256), jnp.float32)
    params3 = tuple(make_v4_params(k, **cfg) for k in (k1, k2, k3))

    out = trans_generator_unet_ababab(params3, x)
    out = jax.block_until_ready(out)
    assert out.shape == (1, 1, 256, 256), out.shape
    assert bool(jnp.all(jnp.isfinite(out)))
    print("KERNEL_OK")
</pallas_src>

<mosaic_0001>
module attributes {stable_mosaic.version = 11 : i64} {
  func.func @_mm_kernel(%arg0: i32, %arg1: i32, %arg2: i32, %arg3: i32, %arg4: memref<1x1024x16xbf16, #tpu.memory_space<vmem>>, %arg5: memref<1x16x8xbf16, #tpu.memory_space<vmem>>, %arg6: memref<1x8xf32, #tpu.memory_space<vmem>>, %arg7: memref<1x1024x8xbf16, #tpu.memory_space<vmem>>, %arg8: memref<1024x8xf32, #tpu.memory_space<vmem>>) attributes {dimension_semantics = [#tpu.dimension_semantics<parallel>, #tpu.dimension_semantics<parallel>, #tpu.dimension_semantics<parallel>, #tpu.dimension_semantics<arbitrary>], iteration_bounds = array<i64: 1, 16, 1, 1>, scalar_prefetch = 0 : i64, scratch_operands = 1 : i64, tpu.core_type = #tpu.core_type<tc>, window_params = [{transform_indices = @transform_0, window_bounds = array<i64: 1, 1024, 16>}, {transform_indices = @transform_1, window_bounds = array<i64: 1, 16, 8>}, {transform_indices = @transform_2, window_bounds = array<i64: 1, 8>}, {transform_indices = @transform_3, window_bounds = array<i64: 1, 1024, 8>}]} {
    %c0_i32 = arith.constant 0 : i32
    %0 = arith.cmpi eq, %arg3, %c0_i32 : i32
    %1 = arith.extui %0 : i1 to i32
    %c0_i32_0 = arith.constant 0 : i32
    %2 = arith.cmpi ne, %1, %c0_i32_0 : i32
    scf.if %2 {
      %cst_12 = arith.constant 0.000000e+00 : f32
      %14 = vector.broadcast %cst_12 : f32 to vector<1024x8xf32>
      %c0_13 = arith.constant 0 : index
      %c0_14 = arith.constant 0 : index
      %15 = vector.load %arg8[%c0_13, %c0_14] : memref<1024x8xf32, #tpu.memory_space<vmem>>, vector<1024x8xf32>
      tpu.vector_store %arg8[%c0_13, %c0_14], %14 {strides = array<i32>} : memref<1024x8xf32, #tpu.memory_space<vmem>>, vector<1024x8xf32>,
    } else {
    }
    %c0 = arith.constant 0 : index
    %c0_1 = arith.constant 0 : index
    %3 = vector.load %arg8[%c0, %c0_1] : memref<1024x8xf32, #tpu.memory_space<vmem>>, vector<1024x8xf32>
    %c0_2 = arith.constant 0 : index
    %c0_3 = arith.constant 0 : index
    %c0_4 = arith.constant 0 : index
    %4 = vector.load %arg4[%c0_2, %c0_3, %c0_4] : memref<1x1024x16xbf16, #tpu.memory_space<vmem>>, vector<1x1024x16xbf16>
    %5 = vector.shape_cast %4 : vector<1x1024x16xbf16> to vector<1024x16xbf16>
    %c0_5 = arith.constant 0 : index
    %c0_6 = arith.constant 0 : index
    %c0_7 = arith.constant 0 : index
    %6 = vector.load %arg5[%c0_5, %c0_6, %c0_7] : memref<1x16x8xbf16, #tpu.memory_space<vmem>>, vector<1x16x8xbf16>
    %7 = vector.shape_cast %6 : vector<1x16x8xbf16> to vector<16x8xbf16>
    %cst = arith.constant dense<0.000000e+00> : vector<1024x8xf32>
    %8 = tpu.matmul %5, %7, %cst {dimension_numbers = #tpu.dot_dimension_numbers<[1], [0], [0], [1], [0, 0, 1, 1], [], []>} : vector<1024x16xbf16>, vector<16x8xbf16>, vector<1024x8xf32> -> vector<1024x8xf32>
    %9 = arith.addf %3, %8 : vector<1024x8xf32>
    %c0_8 = arith.constant 0 : index
    %c0_9 = arith.constant 0 : index
    %10 = vector.load %arg8[%c0_8, %c0_9] : memref<1024x8xf32, #tpu.memory_space<vmem>>, vector<1024x8xf32>
    tpu.vector_store %arg8[%c0_8, %c0_9], %9 {strides = array<i32>} : memref<1024x8xf32, #tpu.memory_space<vmem>>, vector<1024x8xf32>,
    %c0_i32_10 = arith.constant 0 : i32
    %11 = arith.cmpi eq, %arg3, %c0_i32_10 : i32
    %12 = arith.extui %11 : i1 to i32
    %c0_i32_11 = arith.constant 0 : i32
    %13 = arith.cmpi ne, %12, %c0_i32_11 : i32
    scf.if %13 {
      %c0_12 = arith.constant 0 : index
      %c0_13 = arith.constant 0 : index
      %14 = vector.load %arg8[%c0_12, %c0_13] : memref<1024x8xf32, #tpu.memory_space<vmem>>, vector<1024x8xf32>
      %c0_14 = arith.constant 0 : index
      %c0_15 = arith.constant 0 : index
      %15 = vector.load %arg6[%c0_14, %c0_15] : memref<1x8xf32, #tpu.memory_space<vmem>>, vector<1x8xf32>
      %16 = vector.broadcast %15 : vector<1x8xf32> to vector<1024x8xf32>
      %17 = arith.addf %14, %16 : vector<1024x8xf32>
      %cst_16 = arith.constant 0.000000e+00 : f32
      %18 = vector.broadcast %cst_16 : f32 to vector<1024x8xf32>
      %19 = arith.cmpf ogt, %17, %18 : vector<1024x8xf32>
      %cst_17 = arith.constant 2.000000e-01 : f32
      %20 = vector.broadcast %cst_17 : f32 to vector<1024x8xf32>
      %21 = arith.mulf %20, %17 : vector<1024x8xf32>
      %22 = arith.select %19, %17, %21 : vector<1024x8xi1>, vector<1024x8xf32>
      %23 = arith.truncf %22 : vector<1024x8xf32> to vector<1024x8xbf16>
      %c0_18 = arith.constant 0 : index
      %c0_19 = arith.constant 0 : index
      %c0_20 = arith.constant 0 : index
      %24 = vector.load %arg7[%c0_18, %c0_19, %c0_20] : memref<1x1024x8xbf16, #tpu.memory_space<vmem>>, vector<1x1024x8xbf16>
      %25 = vector.shape_cast %24 : vector<1x1024x8xbf16> to vector<1024x8xbf16>
      %26 = vector.shape_cast %23 : vector<1024x8xbf16> to vector<1x1024x8xbf16>
      tpu.vector_store %arg7[%c0_18, %c0_19, %c0_20], %26 {strides = array<i32>} : memref<1x1024x8xbf16, #tpu.memory_space<vmem>>, vector<1x1024x8xbf16>,
    } else {
    }
    return
  }
  func.func @transform_0(%arg0: i32, %arg1: i32, %arg2: i32, %arg3: i32) -> (i32, i32, i32) {
    %c0_i32 = arith.constant 0 : i32
    return %arg0, %arg1, %arg3 : i32, i32, i32
  }
  func.func @transform_1(%arg0: i32, %arg1: i32, %arg2: i32, %arg3: i32) -> (i32, i32, i32) {
    %c0_i32 = arith.constant 0 : i32
    return %arg0, %arg3, %arg2 : i32, i32, i32
  }
  func.func @transform_2(%arg0: i32, %arg1: i32, %arg2: i32, %arg3: i32) -> (i32, i32) {
    %c0_i32 = arith.constant 0 : i32
    %c0_i32_0 = arith.constant 0 : i32
    return %c0_i32, %arg2 : i32, i32
  }
  func.func @transform_3(%arg0: i32, %arg1: i32, %arg2: i32, %arg3: i32) -> (i32, i32, i32) {
    %c0_i32 = arith.constant 0 : i32
    return %arg0, %arg1, %arg2 : i32, i32, i32
  }
}

</mosaic_0001>

<llo_original>
// kernel: _bmm_core.1
$region0: #{_bmm_core.1}
  #allocation0 [shape = 'u32[]', space=smem, size = 0x4, offset = 0x4, fixed_abs, tag = 'smem constant byte address 0x4 - core index']
  #allocation1 [shape = 'u32[72,128]{1,0:T(1,128)}', space=vmem, size = 0x9000, scoped, tag = 'internal scratch']
  #allocation2 [shape = 'f32[1024,8]{1,0:T(8,128)}', space=vmem, size = 0x80000, scoped, tag = 'scratch operand']
  %s0 = inlined_call_operand.vmem [shape: bf16[1,16384,16], index: 0, kind: input, shape index: {}]
  %s1 = inlined_call_operand.vmem [shape: bf16[1,16,8], index: 1, kind: input, shape index: {}]
  %s2 = inlined_call_operand.vmem [shape: f32[1,8], index: 2, kind: input, shape index: {}]
  %s3 = inlined_call_operand.vmem [shape: bf16[1,16384,8], index: 3, kind: output, shape index: {}]
  %s4 = sld [smem:[#allocation0]]
  $region53: #{_bmm_core.1} parent=0
    _
  %s6 = ssub.s32 1, %s4
  %s7 = scalar_select 0, %s6, %s4
  loop: start=0, step=1, limit=18
  $region2: #{_bmm_core.1} parent=0 // loop_pre_header
    _
  $region3: #{_bmm_core.1} parent=0 // loop_header
    %s9 = sphi 0, %s13
    %p10 = scmp.ge.s32.totalorder %s9, 18
    %s16 = sphi 0, %s42
    %s17 = sphi 0, %s38
    %s18 = sphi 0, %s34
    %s19 = sphi 0, %s30
    %s20 = sphi 0, %s16
    %s21 = sphi 0, %s17
    %s22 = sphi 0, %s18
    %s23 = sphi 0, %s19
    %s24 = sphi 0, %s20
    %s25 = sphi 0, %s21
    %s26 = sphi 0, %s22
    %s27 = sphi 0, %s23
    %s49 = sphi 0, %s51
    %s52 = sphi 0, %s49
    %s53 = sphi 0, %s52
    %s69 = sphi 0, %s53
    %s79 = sphi 0, %s81
    %s82 = sphi 0, %s79
    %s83 = sphi 0, %s82
    %s99 = sphi 0, %s83
    %s105 = sphi 0, %s107
    %s108 = sphi 0, %s105
    %s109 = sphi 0, %s108
    %s125 = sphi 0, %s109
    %s135 = sphi 0, %s137
    %s138 = sphi 0, %s135
    %s139 = sphi 0, %s138
    %s155 = sphi 0, %s139
  $region4: #{_bmm_core.1} parent=0 // loop_header_branch
    %12 = sbr.rel (%p10) target = $region8
  $region5: #{_bmm_core.1} parent=0 // loop_body
    %s14 = ssub.s32 %s9, 1
    %s15 = ssub.s32 %s9, 2
    %s28 = sadd.s32 1, %s19
    %p29 = scmp.ge.s32.totalorder %s28, 1
    %s30 = scalar_select %p29, 0, %s28
    %s31 = sadd.s32 1, %s18
    %s32 = scalar_select %p29, %s31, %s18
    %p33 = scmp.ge.s32.totalorder %s32, 1
    %s34 = scalar_select %p33, 0, %s32
    %s35 = sadd.s32 1, %s17
    %s36 = scalar_select %p33, %s35, %s17
    %p37 = scmp.ge.s32.totalorder %s36, 16
    %s38 = scalar_select %p37, 0, %s36
    %s39 = sadd.s32 1, %s16
    %s40 = scalar_select %p37, %s39, %s16
    %p41 = scmp.ge.s32.totalorder %s40, 1
    %s42 = scalar_select %p41, 0, %s40
    %s43 = ssub.s32 %s16, %s42
    %s44 = ssub.s32 %s17, %s38
    %s45 = sor.u32 %s43, %s44
    %s46 = ssub.s32 %s19, %s30
    %s47 = sor.u32 %s45, %s46
    %p48 = scmp.eq.s32.totalorder %s47, 0
    %s50 = sadd.s32 %s49, 1
    %s51 = scalar_select %p48, %s49, %s50
    %p54 = pneg %p48
    %p55 = scmp.eq.s32.totalorder %s9, 15
    %p56 = por %p54, %p55
    %p57 = scmp.ne.s32.totalorder %s49, %s52
    %p58 = scmp.eq.s32.totalorder %s9, 0
    %p59 = por %p57, %p58
    %p60 = scmp.ne.s32.totalorder %s49, %s52
    %p61 = scmp.eq.s32.totalorder %s14, 15
    %p62 = por %p60, %p61
    %p63 = scmp.ne.s32.totalorder %s52, %s53
    %p64 = scmp.eq.s32.totalorder %s14, 0
    %p65 = por %p63, %p64
    %p66 = scmp.ne.s32.totalorder %s52, %s53
    %p67 = scmp.eq.s32.totalorder %s15, 15
    %p68 = por %p66, %p67
    %p70 = scmp.ne.s32.totalorder %s53, %s69
    %p71 = scmp.eq.s32.totalorder %s15, 0
    %p72 = por %p70, %p71
    %s73 = ssub.s32 %s16, %s42
    %s74 = ssub.s32 %s19, %s30
    %s75 = sor.u32 %s73, %s74
    %s76 = ssub.s32 %s18, %s34
    %s77 = sor.u32 %s75, %s76
    %p78 = scmp.eq.s32.totalorder %s77, 0
    %s80 = sadd.s32 %s79, 1
    %s81 = scalar_select %p78, %s79, %s80
    %p84 = pneg %p78
    %p85 = scmp.eq.s32.totalorder %s9, 15
    %p86 = por %p84, %p85
    %p87 = scmp.ne.s32.totalorder %s79, %s82
    %p88 = scmp.eq.s32.totalorder %s9, 0
    %p89 = por %p87, %p88
    %p90 = scmp.ne.s32.totalorder %s79, %s82
    %p91 = scmp.eq.s32.totalorder %s14, 15
    %p92 = por %p90, %p91
    %p93 = scmp.ne.s32.totalorder %s82, %s83
    %p94 = scmp.eq.s32.totalorder %s14, 0
    %p95 = por %p93, %p94
    %p96 = scmp.ne.s32.totalorder %s82, %s83
    %p97 = scmp.eq.s32.totalorder %s15, 15
    %p98 = por %p96, %p97
    %p100 = scmp.ne.s32.totalorder %s83, %s99
    %p101 = scmp.eq.s32.totalorder %s15, 0
    %p102 = por %p100, %p101
    %s103 = ssub.s32 %s18, %s34
    %p104 = scmp.eq.s32.totalorder %s103, 0
    %s106 = sadd.s32 %s105, 1
    %s107 = scalar_select %p104, %s105, %s106
    %p110 = pneg %p104
    %p111 = scmp.eq.s32.totalorder %s9, 15
    %p112 = por %p110, %p111
    %p113 = scmp.ne.s32.totalorder %s105, %s108
    %p114 = scmp.eq.s32.totalorder %s9, 0
    %p115 = por %p113, %p114
    %p116 = scmp.ne.s32.totalorder %s105, %s108
    %p117 = scmp.eq.s32.totalorder %s14, 15
    %p118 = por %p116, %p117
    %p119 = scmp.ne.s32.totalorder %s108, %s109
    %p120 = scmp.eq.s32.totalorder %s14, 0
    %p121 = por %p119, %p120
    %p122 = scmp.ne.s32.totalorder %s108, %s109
    %p123 = scmp.eq.s32.totalorder %s15, 15
    %p124 = por %p122, %p123
    %p126 = scmp.ne.s32.totalorder %s109, %s125
    %p127 = scmp.eq.s32.totalorder %s15, 0
    %p128 = por %p126, %p127
    %s129 = ssub.s32 %s16, %s42
    %s130 = ssub.s32 %s17, %s38
    %s131 = sor.u32 %s129, %s130
    %s132 = ssub.s32 %s18, %s34
    %s133 = sor.u32 %s131, %s132
    %p134 = scmp.eq.s32.totalorder %s133, 0
    %s136 = sadd.s32 %s135, 1
    %s137 = scalar_select %p134, %s135, %s136
    %p140 = pneg %p134
    %p141 = scmp.eq.s32.totalorder %s9, 15
    %p142 = por %p140, %p141
    %p143 = scmp.ne.s32.totalorder %s135, %s138
    %p144 = scmp.eq.s32.totalorder %s9, 0
    %p145 = por %p143, %p144
    %p146 = scmp.ne.s32.totalorder %s135, %s138
    %p147 = scmp.eq.s32.totalorder %s14, 15
    %p148 = por %p146, %p147
    %p149 = scmp.ne.s32.totalorder %s138, %s139
    %p150 = scmp.eq.s32.totalorder %s14, 0
    %p151 = por %p149, %p150
    %p152 = scmp.ne.s32.totalorder %s138, %s139
    %p153 = scmp.eq.s32.totalorder %s15, 15
    %p154 = por %p152, %p153
    %p156 = scmp.ne.s32.totalorder %s139, %s155
    %p157 = scmp.eq.s32.totalorder %s15, 0
    %p158 = por %p156, %p157
    %p159 = scmp.le.s32.totalorder 1, %s9
    %p160 = scmp.lt.s32.totalorder %s9, 17
    %p161 = pnand %p159, %p160
    %p162 = pneg %p161
    // Predicated region
    $region9: #{_bmm_core.1} parent=5 // pred_check
      _
    $region10: #{_bmm_core.1} parent=5 // pred_check_branch
      %164 = sbr.rel (%p161) target = $region12
    $region11: #{_bmm_core.1} parent=5 // pred_region
      %s165 = ssub.s32 %s9, 1
      // Predicated region
      $region13: #{_bmm_core.1} parent=11 // pred_check
        %p166 = pneg %p95
      $region14: #{_bmm_core.1} parent=11 // pred_check_branch
        %168 = sbr.rel (%p166) target = $region16
      $region15: #{_bmm_core.1} parent=11 // pred_region
        %s169 = smul.u32 2, %s23
        %p170 = scmp.lt.s32.totalorder %s20, 0
        %s171 = scalar_select %p170, %s20, 0
        %p172 = scmp.lt.s32.totalorder %s169, 1
        %s173 = scalar_select %p172, %s169, 1
        %p174 = scmp.lt.s32.totalorder %s22, 0
        %s175 = scalar_select %p174, %s22, 0
        %s176 = sadd.s32 %s175, %s173
        %s177 = smul.addr %s171, 2
        %s178 = sadd.s32 %s176, %s177
        %s179 = smul.addr %s178, 4
        %s180 = scalar_lea.vmem %s1, %s179
        %s181 = smul.u32 2, %s23
      $region16: #{_bmm_core.1} parent=11 // pred_fallthru
        _
      // Predicated region
      $region17: #{_bmm_core.1} parent=11 // pred_check
        %p182 = pneg %p121
      $region18: #{_bmm_core.1} parent=11 // pred_check_branch
        %184 = sbr.rel (%p182) target = $region20
      $region19: #{_bmm_core.1} parent=11 // pred_region
        %p185 = scmp.lt.s32.totalorder %s22, 0
        %s186 = scalar_select %p185, %s22, 0
        %s187 = scalar_lea.vmem %s2, %s186
      $region20: #{_bmm_core.1} parent=11 // pred_fallthru
        _
    $region12: #{_bmm_core.1} parent=5 // pred_fallthru
      _
    %p188 = scmp.lt.s32.totalorder %s9, 16
    // Predicated region
    $region21: #{_bmm_core.1} parent=5 // pred_check
      %p189 = pneg %p188
    $region22: #{_bmm_core.1} parent=5 // pred_check_branch
      %191 = sbr.rel (%p189) target = $region24
    $region23: #{_bmm_core.1} parent=5 // pred_region
      // Predicated region
      $region25: #{_bmm_core.1} parent=23 // pred_check
        %p192 = pneg %p59
      $region26: #{_bmm_core.1} parent=23 // pred_check_branch
        %194 = sbr.rel (%p192) target = $region28
      $region27: #{_bmm_core.1} parent=23 // pred_region
        %s195 = smul.u32 128, %s17
        %p196 = scmp.lt.s32.totalorder %s16, 0
        %s197 = scalar_select %p196, %s16, 0
        %p198 = scmp.lt.s32.totalorder %s195, 2047
        %s199 = scalar_select %p198, %s195, 2047
        %p200 = scmp.lt.s32.totalorder %s19, 0
        %s201 = scalar_select %p200, %s19, 0
        %s202 = sadd.s32 %s201, %s199
        %s203 = smul.addr %s197, 2048
        %s204 = sadd.s32 %s202, %s203
        %s205 = smul.addr %s204, 4
        %s206 = scalar_lea.vmem %s0, %s205
        %s207 = smul.u32 128, %s17
      $region28: #{_bmm_core.1} parent=23 // pred_fallthru
        _
    $region24: #{_bmm_core.1} parent=5 // pred_fallthru
      _
    %p208 = scmp.le.s32.totalorder 1, %s9
    %p209 = scmp.lt.s32.totalorder %s9, 17
    %p210 = pnand %p208, %p209
    %p211 = pneg %p210
    // Predicated region
    $region29: #{_bmm_core.1} parent=5 // pred_check
      _
    $region30: #{_bmm_core.1} parent=5 // pred_check_branch
      %213 = sbr.rel (%p210) target = $region32
    $region31: #{_bmm_core.1} parent=5 // pred_region
      %s214 = ssub.s32 %s9, 1
      %s215 = smul.u32 128, %s21
      %p216 = scmp.lt.s32.totalorder %s20, 0
      %s217 = scalar_select %p216, %s20, 0
      %p218 = scmp.lt.s32.totalorder %s215, 2047
      %s219 = scalar_select %p218, %s215, 2047
      %p220 = scmp.lt.s32.totalorder %s23, 0
      %s221 = scalar_select %p220, %s23, 0
      %s222 = sadd.s32 %s221, %s219
      %s223 = smul.addr %s217, 2048
      %s224 = sadd.s32 %s222, %s223
      %s225 = smul.addr %s224, 4
      %s226 = scalar_lea.vmem %s0, %s225
      %p227 = pneg %p65
      %p228 = pneg %p62
      %s229 = smul.u32 2, %s23
      %p230 = scmp.lt.s32.totalorder %s20, 0
      %s231 = scalar_select %p230, %s20, 0
      %p232 = scmp.lt.s32.totalorder %s229, 1
      %s233 = scalar_select %p232, %s229, 1
      %p234 = scmp.lt.s32.totalorder %s22, 0
      %s235 = scalar_select %p234, %s22, 0
      %s236 = sadd.s32 %s235, %s233
      %s237 = smul.addr %s231, 2
      %s238 = sadd.s32 %s236, %s237
      %s239 = smul.addr %s238, 4
      %s240 = scalar_lea.vmem %s1, %s239
      %p241 = pneg %p95
      %p242 = pneg %p92
      %p243 = scmp.lt.s32.totalorder %s22, 0
      %s244 = scalar_select %p243, %s22, 0
      %s245 = scalar_lea.vmem %s2, %s244
      %p246 = pneg %p121
      %p247 = pneg %p118
      %p248 = pneg %p151
      %p249 = pneg %p148
      %s250 = smul.u32 128, %s21
      %p251 = scmp.lt.s32.totalorder %s20, 0
      %s252 = scalar_select %p251, %s20, 0
      %p253 = scmp.lt.s32.totalorder %s250, 2047
      %s254 = scalar_select %p253, %s250, 2047
      %p255 = scmp.lt.s32.totalorder %s22, 0
      %s256 = scalar_select %p255, %s22, 0
      %s257 = sadd.s32 %s256, %s254
      %s258 = smul.addr %s252, 2048
      %s259 = sadd.s32 %s257, %s258
      %s260 = smul.addr %s259, 4
      %s261 = scalar_lea.vmem %s3, %s260
      %s262 = smul.u32 128, %s21
      %p263 = scmp.lt.s32.totalorder %s20, 0
      %s264 = scalar_select %p263, %s20, 0
      %p265 = scmp.lt.s32.totalorder %s262, 2047
      %s266 = scalar_select %p265, %s262, 2047
      %p267 = scmp.lt.s32.totalorder %s23, 0
      %s268 = scalar_select %p267, %s23, 0
      %s269 = sadd.s32 %s268, %s266
      %s270 = smul.addr %s264, 2048
      %s271 = sadd.s32 %s269, %s270
      %s272 = smul.addr %s271, 4
      %s273 = scalar_lea.vmem %s0, %s272
      %s274 = smul.u32 128, %s21
      %s275 = smul.u32 2, %s23
      %p276 = scmp.lt.s32.totalorder %s20, 0
      %s277 = scalar_select %p276, %s20, 0
      %p278 = scmp.lt.s32.totalorder %s275, 1
      %s279 = scalar_select %p278, %s275, 1
      %p280 = scmp.lt.s32.totalorder %s22, 0
      %s281 = scalar_select %p280, %s22, 0
      %s282 = sadd.s32 %s281, %s279
      %s283 = smul.addr %s277, 2
      %s284 = sadd.s32 %s282, %s283
      %s285 = smul.addr %s284, 4
      %s286 = scalar_lea.vmem %s1, %s285
      %s287 = smul.u32 2, %s23
      %p288 = scmp.lt.s32.totalorder %s22, 0
      %s289 = scalar_select %p288, %s22, 0
      %s290 = scalar_lea.vmem %s2, %s289
      %s291 = smul.u32 128, %s21
      %p292 = scmp.lt.s32.totalorder %s20, 0
      %s293 = scalar_select %p292, %s20, 0
      %p294 = scmp.lt.s32.totalorder %s291, 2047
      %s295 = scalar_select %p294, %s291, 2047
      %p296 = scmp.lt.s32.totalorder %s22, 0
      %s297 = scalar_select %p296, %s22, 0
      %s298 = sadd.s32 %s297, %s295
      %s299 = smul.addr %s293, 2048
      %s300 = sadd.s32 %s298, %s299
      %s301 = smul.addr %s300, 4
      %s302 = scalar_lea.vmem %s3, %s301
      %s303 = smul.u32 128, %s21
      %p305 = scmp.eq.s32.totalorder %s23, 0
      // Predicated region
      $region33: #{_bmm_core.1} parent=31 // pred_check
        %p306 = pneg %p305
      $region34: #{_bmm_core.1} parent=31 // pred_check_branch
        %308 = sbr.rel (%p306) target = $region36
      $region35: #{_bmm_core.1} parent=31 // pred_region
        %vm309 = vcmask 64512
        %310 = vst.msk [vmem:[#allocation2] sm:$0xff] %vm309, 0.0
        %311 = vst.msk [vmem:[#allocation2 + $0x8] sm:$0xff] %vm309, 0.0
        %312 = vst.msk [vmem:[#allocation2 + $0x10] sm:$0xff] %vm309, 0.0
        %313 = vst.msk [vmem:[#allocation2 + $0x18] sm:$0xff] %vm309, 0.0
        %314 = vst.msk [vmem:[#allocation2 + $0x20] sm:$0xff] %vm309, 0.0
        %315 = vst.msk [vmem:[#allocation2 + $0x28] sm:$0xff] %vm309, 0.0
        %316 = vst.msk [vmem:[#allocation2 + $0x30] sm:$0xff] %vm309, 0.0
        %317 = vst.msk [vmem:[#allocation2 + $0x38] sm:$0xff] %vm309, 0.0
        %318 = vst.msk [vmem:[#allocation2 + $0x40] sm:$0xff] %vm309, 0.0
        %319 = vst.msk [vmem:[#allocation2 + $0x48] sm:$0xff] %vm309, 0.0
        %320 = vst.msk [vmem:[#allocation2 + $0x50] sm:$0xff] %vm309, 0.0
        %321 = vst.msk [vmem:[#allocation2 + $0x58] sm:$0xff] %vm309, 0.0
        %322 = vst.msk [vmem:[#allocation2 + $0x60] sm:$0xff] %vm309, 0.0
        %323 = vst.msk [vmem:[#allocation2 + $0x68] sm:$0xff] %vm309, 0.0
        %324 = vst.msk [vmem:[#allocation2 + $0x70] sm:$0xff] %vm309, 0.0
        %325 = vst.msk [vmem:[#allocation2 + $0x78] sm:$0xff] %vm309, 0.0
        %326 = vst.msk [vmem:[#allocation2 + $0x80] sm:$0xff] %vm309, 0.0
        %327 = vst.msk [vmem:[#allocation2 + $0x88] sm:$0xff] %vm309, 0.0
        %328 = vst.msk [vmem:[#allocation2 + $0x90] sm:$0xff] %vm309, 0.0
        %329 = vst.msk [vmem:[#allocation2 + $0x98] sm:$0xff] %vm309, 0.0
        %330 = vst.msk [vmem:[#allocation2 + $0xa0] sm:$0xff] %vm309, 0.0
        %331 = vst.msk [vmem:[#allocation2 + $0xa8] sm:$0xff] %vm309, 0.0
        %332 = vst.msk [vmem:[#allocation2 + $0xb0] sm:$0xff] %vm309, 0.0
        %333 = vst.msk [vmem:[#allocation2 + $0xb8] sm:$0xff] %vm309, 0.0
        %334 = vst.msk [vmem:[#allocation2 + $0xc0] sm:$0xff] %vm309, 0.0
        %335 = vst.msk [vmem:[#allocation2 + $0xc8] sm:$0xff] %vm309, 0.0
        %336 = vst.msk [vmem:[#allocation2 + $0xd0] sm:$0xff] %vm309, 0.0
        %337 = vst.msk [vmem:[#allocation2 + $0xd8] sm:$0xff] %vm309, 0.0
        %338 = vst.msk [vmem:[#allocation2 + $0xe0] sm:$0xff] %vm309, 0.0
        %339 = vst.msk [vmem:[#allocation2 + $0xe8] sm:$0xff] %vm309, 0.0
        %340 = vst.msk [vmem:[#allocation2 + $0xf0] sm:$0xff] %vm309, 0.0
        %341 = vst.msk [vmem:[#allocation2 + $0xf8] sm:$0xff] %vm309, 0.0
        %342 = vst.msk [vmem:[#allocation2 + $0x100] sm:$0xff] %vm309, 0.0
        %343 = vst.msk [vmem:[#allocation2 + $0x108] sm:$0xff] %vm309, 0.0
        %344 = vst.msk [vmem:[#allocation2 + $0x110] sm:$0xff] %vm309, 0.0
        %345 = vst.msk [vmem:[#allocation2 + $0x118] sm:$0xff] %vm309, 0.0
        %346 = vst.msk [vmem:[#allocation2 + $0x120] sm:$0xff] %vm309, 0.0
        %347 = vst.msk [vmem:[#allocation2 + $0x128] sm:$0xff] %vm309, 0.0
        %348 = vst.msk [vmem:[#allocation2 + $0x130] sm:$0xff] %vm309, 0.0
        %349 = vst.msk [vmem:[#allocation2 + $0x138] sm:$0xff] %vm309, 0.0
        %350 = vst.msk [vmem:[#allocation2 + $0x140] sm:$0xff] %vm309, 0.0
        %351 = vst.msk [vmem:[#allocation2 + $0x148] sm:$0xff] %vm309, 0.0
        %352 = vst.msk [vmem:[#allocation2 + $0x150] sm:$0xff] %vm309, 0.0
        %353 = vst.msk [vmem:[#allocation2 + $0x158] sm:$0xff] %vm309, 0.0
        %354 = vst.msk [vmem:[#allocation2 + $0x160] sm:$0xff] %vm309, 0.0
        %355 = vst.msk [vmem:[#allocation2 + $0x168] sm:$0xff] %vm309, 0.0
        %356 = vst.msk [vmem:[#allocation2 + $0x170] sm:$0xff] %vm309, 0.0
        %357 = vst.msk [vmem:[#allocation2 + $0x178] sm:$0xff] %vm309, 0.0
        %358 = vst.msk [vmem:[#allocation2 + $0x180] sm:$0xff] %vm309, 0.0
        %359 = vst.msk [vmem:[#allocation2 + $0x188] sm:$0xff] %vm309, 0.0
        %360 = vst.msk [vmem:[#allocation2 + $0x190] sm:$0xff] %vm309, 0.0
        %361 = vst.msk [vmem:[#allocation2 + $0x198] sm:$0xff] %vm309, 0.0
        %362 = vst.msk [vmem:[#allocation2 + $0x1a0] sm:$0xff] %vm309, 0.0
        %363 = vst.msk [vmem:[#allocation2 + $0x1a8] sm:$0xff] %vm309, 0.0
        %364 = vst.msk [vmem:[#allocation2 + $0x1b0] sm:$0xff] %vm309, 0.0
        %365 = vst.msk [vmem:[#allocation2 + $0x1b8] sm:$0xff] %vm309, 0.0
        %366 = vst.msk [vmem:[#allocation2 + $0x1c0] sm:$0xff] %vm309, 0.0
        %367 = vst.msk [vmem:[#allocation2 + $0x1c8] sm:$0xff] %vm309, 0.0
        %368 = vst.msk [vmem:[#allocation2 + $0x1d0] sm:$0xff] %vm309, 0.0
        %369 = vst.msk [vmem:[#allocation2 + $0x1d8] sm:$0xff] %vm309, 0.0
        %370 = vst.msk [vmem:[#allocation2 + $0x1e0] sm:$0xff] %vm309, 0.0
        %371 = vst.msk [vmem:[#allocation2 + $0x1e8] sm:$0xff] %vm309, 0.0
        %372 = vst.msk [vmem:[#allocation2 + $0x1f0] sm:$0xff] %vm309, 0.0
        %373 = vst.msk [vmem:[#allocation2 + $0x1f8] sm:$0xff] %vm309, 0.0
        %374 = vst.msk [vmem:[#allocation2 + $0x200] sm:$0xff] %vm309, 0.0
        %375 = vst.msk [vmem:[#allocation2 + $0x208] sm:$0xff] %vm309, 0.0
        %376 = vst.msk [vmem:[#allocation2 + $0x210] sm:$0xff] %vm309, 0.0
        %377 = vst.msk [vmem:[#allocation2 + $0x218] sm:$0xff] %vm309, 0.0
        %378 = vst.msk [vmem:[#allocation2 + $0x220] sm:$0xff] %vm309, 0.0
        %379 = vst.msk [vmem:[#allocation2 + $0x228] sm:$0xff] %vm309, 0.0
        %380 = vst.msk [vmem:[#allocation2 + $0x230] sm:$0xff] %vm309, 0.0
        %381 = vst.msk [vmem:[#allocation2 + $0x238] sm:$0xff] %vm309, 0.0
        %382 = vst.msk [vmem:[#allocation2 + $0x240] sm:$0xff] %vm309, 0.0
        %383 = vst.msk [vmem:[#allocation2 + $0x248] sm:$0xff] %vm309, 0.0
        %384 = vst.msk [vmem:[#allocation2 + $0x250] sm:$0xff] %vm309, 0.0
        %385 = vst.msk [vmem:[#allocation2 + $0x258] sm:$0xff] %vm309, 0.0
        %386 = vst.msk [vmem:[#allocation2 + $0x260] sm:$0xff] %vm309, 0.0
        %387 = vst.msk [vmem:[#allocation2 + $0x268] sm:$0xff] %vm309, 0.0
        %388 = vst.msk [vmem:[#allocation2 + $0x270] sm:$0xff] %vm309, 0.0
        %389 = vst.msk [vmem:[#allocation2 + $0x278] sm:$0xff] %vm309, 0.0
        %390 = vst.msk [vmem:[#allocation2 + $0x280] sm:$0xff] %vm309, 0.0
        %391 = vst.msk [vmem:[#allocation2 + $0x288] sm:$0xff] %vm309, 0.0
        %392 = vst.msk [vmem:[#allocation2 + $0x290] sm:$0xff] %vm309, 0.0
        %393 = vst.msk [vmem:[#allocation2 + $0x298] sm:$0xff] %vm309, 0.0
        %394 = vst.msk [vmem:[#allocation2 + $0x2a0] sm:$0xff] %vm309, 0.0
        %395 = vst.msk [vmem:[#allocation2 + $0x2a8] sm:$0xff] %vm309, 0.0
        %396 = vst.msk [vmem:[#allocation2 + $0x2b0] sm:$0xff] %vm309, 0.0
        %397 = vst.msk [vmem:[#allocation2 + $0x2b8] sm:$0xff] %vm309, 0.0
        %398 = vst.msk [vmem:[#allocation2 + $0x2c0] sm:$0xff] %vm309, 0.0
        %399 = vst.msk [vmem:[#allocation2 + $0x2c8] sm:$0xff] %vm309, 0.0
        %400 = vst.msk [vmem:[#allocation2 + $0x2d0] sm:$0xff] %vm309, 0.0
        %401 = vst.msk [vmem:[#allocation2 + $0x2d8] sm:$0xff] %vm309, 0.0
        %402 = vst.msk [vmem:[#allocation2 + $0x2e0] sm:$0xff] %vm309, 0.0
        %403 = vst.msk [vmem:[#allocation2 + $0x2e8] sm:$0xff] %vm309, 0.0
        %404 = vst.msk [vmem:[#allocation2 + $0x2f0] sm:$0xff] %vm309, 0.0
        %405 = vst.msk [vmem:[#allocation2 + $0x2f8] sm:$0xff] %vm309, 0.0
        %406 = vst.msk [vmem:[#allocation2 + $0x300] sm:$0xff] %vm309, 0.0
        %407 = vst.msk [vmem:[#allocation2 + $0x308] sm:$0xff] %vm309, 0.0
        %408 = vst.msk [vmem:[#allocation2 + $0x310] sm:$0xff] %vm309, 0.0
        %409 = vst.msk [vmem:[#allocation2 + $0x318] sm:$0xff] %vm309, 0.0
        %410 = vst.msk [vmem:[#allocation2 + $0x320] sm:$0xff] %vm309, 0.0
        %411 = vst.msk [vmem:[#allocation2 + $0x328] sm:$0xff] %vm309, 0.0
        %412 = vst.msk [vmem:[#allocation2 + $0x330] sm:$0xff] %vm309, 0.0
        %413 = vst.msk [vmem:[#allocation2 + $0x338] sm:$0xff] %vm309, 0.0
        %414 = vst.msk [vmem:[#allocation2 + $0x340] sm:$0xff] %vm309, 0.0
        %415 = vst.msk [vmem:[#allocation2 + $0x348] sm:$0xff] %vm309, 0.0
        %416 = vst.msk [vmem:[#allocation2 + $0x350] sm:$0xff] %vm309, 0.0
        %417 = vst.msk [vmem:[#allocation2 + $0x358] sm:$0xff] %vm309, 0.0
        %418 = vst.msk [vmem:[#allocation2 + $0x360] sm:$0xff] %vm309, 0.0
        %419 = vst.msk [vmem:[#allocation2 + $0x368] sm:$0xff] %vm309, 0.0
        %420 = vst.msk [vmem:[#allocation2 + $0x370] sm:$0xff] %vm309, 0.0
        %421 = vst.msk [vmem:[#allocation2 + $0x378] sm:$0xff] %vm309, 0.0
        %422 = vst.msk [vmem:[#allocation2 + $0x380] sm:$0xff] %vm309, 0.0
        %423 = vst.msk [vmem:[#allocation2 + $0x388] sm:$0xff] %vm309, 0.0
        %424 = vst.msk [vmem:[#allocation2 + $0x390] sm:$0xff] %vm309, 0.0
        %425 = vst.msk [vmem:[#allocation2 + $0x398] sm:$0xff] %vm309, 0.0
        %426 = vst.msk [vmem:[#allocation2 + $0x3a0] sm:$0xff] %vm309, 0.0
        %427 = vst.msk [vmem:[#allocation2 + $0x3a8] sm:$0xff] %vm309, 0.0
        %428 = vst.msk [vmem:[#allocation2 + $0x3b0] sm:$0xff] %vm309, 0.0
        %429 = vst.msk [vmem:[#allocation2 + $0x3b8] sm:$0xff] %vm309, 0.0
        %430 = vst.msk [vmem:[#allocation2 + $0x3c0] sm:$0xff] %vm309, 0.0
        %431 = vst.msk [vmem:[#allocation2 + $0x3c8] sm:$0xff] %vm309, 0.0
        %432 = vst.msk [vmem:[#allocation2 + $0x3d0] sm:$0xff] %vm309, 0.0
        %433 = vst.msk [vmem:[#allocation2 + $0x3d8] sm:$0xff] %vm309, 0.0
        %434 = vst.msk [vmem:[#allocation2 + $0x3e0] sm:$0xff] %vm309, 0.0
        %435 = vst.msk [vmem:[#allocation2 + $0x3e8] sm:$0xff] %vm309, 0.0
        %436 = vst.msk [vmem:[#allocation2 + $0x3f0] sm:$0xff] %vm309, 0.0
        %437 = vst.msk [vmem:[#allocation2 + $0x3f8] sm:$0xff] %vm309, 0.0
      $region36: #{_bmm_core.1} parent=31 // pred_fallthru
        _
      %v438 = vld [vmem:[#allocation2] sm:$0xff]
      %v439 = vld [vmem:[#allocation2 + $0x8] sm:$0xff]
      %v440 = vld [vmem:[#allocation2 + $0x10] sm:$0xff]
      %v441 = vld [vmem:[#allocation2 + $0x18] sm:$0xff]
      %v442 = vld [vmem:[#allocation2 + $0x20] sm:$0xff]
      %v443 = vld [vmem:[#allocation2 + $0x28] sm:$0xff]
      %v444 = vld [vmem:[#allocation2 + $0x30] sm:$0xff]
      %v445 = vld [vmem:[#allocation2 + $0x38] sm:$0xff]
      %v446 = vld [vmem:[#allocation2 + $0x40] sm:$0xff]
      %v447 = vld [vmem:[#allocation2 + $0x48] sm:$0xff]
      %v448 = vld [vmem:[#allocation2 + $0x50] sm:$0xff]
      %v449 = vld [vmem:[#allocation2 + $0x58] sm:$0xff]
      %v450 = vld [vmem:[#allocation2 + $0x60] sm:$0xff]
      %v451 = vld [vmem:[#allocation2 + $0x68] sm:$0xff]
      %v452 = vld [vmem:[#allocation2 + $0x70] sm:$0xff]
      %v453 = vld [vmem:[#allocation2 + $0x78] sm:$0xff]
      %v454 = vld [vmem:[#allocation2 + $0x80] sm:$0xff]
      %v455 = vld [vmem:[#allocation2 + $0x88] sm:$0xff]
      %v456 = vld [vmem:[#allocation2 + $0x90] sm:$0xff]
      %v457 = vld [vmem:[#allocation2 + $0x98] sm:$0xff]
      %v458 = vld [vmem:[#allocation2 + $0xa0] sm:$0xff]
      %v459 = vld [vmem:[#allocation2 + $0xa8] sm:$0xff]
      %v460 = vld [vmem:[#allocation2 + $0xb0] sm:$0xff]
      %v461 = vld [vmem:[#allocation2 + $0xb8] sm:$0xff]
      %v462 = vld [vmem:[#allocation2 + $0xc0] sm:$0xff]
      %v463 = vld [vmem:[#allocation2 + $0xc8] sm:$0xff]
      %v464 = vld [vmem:[#allocation2 + $0xd0] sm:$0xff]
      %v465 = vld [vmem:[#allocation2 + $0xd8] sm:$0xff]
      %v466 = vld [vmem:[#allocation2 + $0xe0] sm:$0xff]
      %v467 = vld [vmem:[#allocation2 + $0xe8] sm:$0xff]
      %v468 = vld [vmem:[#allocation2 + $0xf0] sm:$0xff]
      %v469 = vld [vmem:[#allocation2 + $0xf8] sm:$0xff]
      %v470 = vld [vmem:[#allocation2 + $0x100] sm:$0xff]
      %v471 = vld [vmem:[#allocation2 + $0x108] sm:$0xff]
      %v472 = vld [vmem:[#allocation2 + $0x110] sm:$0xff]
      %v473 = vld [vmem:[#allocation2 + $0x118] sm:$0xff]
      %v474 = vld [vmem:[#allocation2 + $0x120] sm:$0xff]
      %v475 = vld [vmem:[#allocation2 + $0x128] sm:$0xff]
      %v476 = vld [vmem:[#allocation2 + $0x130] sm:$0xff]
      %v477 = vld [vmem:[#allocation2 + $0x138] sm:$0xff]
      %v478 = vld [vmem:[#allocation2 + $0x140] sm:$0xff]
      %v479 = vld [vmem:[#allocation2 + $0x148] sm:$0xff]
      %v480 = vld [vmem:[#allocation2 + $0x150] sm:$0xff]
      %v481 = vld [vmem:[#allocation2 + $0x158] sm:$0xff]
      %v482 = vld [vmem:[#allocation2 + $0x160] sm:$0xff]
      %v483 = vld [vmem:[#allocation2 + $0x168] sm:$0xff]
      %v484 = vld [vmem:[#allocation2 + $0x170] sm:$0xff]
      %v485 = vld [vmem:[#allocation2 + $0x178] sm:$0xff]
      %v486 = vld [vmem:[#allocation2 + $0x180] sm:$0xff]
      %v487 = vld [vmem:[#allocation2 + $0x188] sm:$0xff]
      %v488 = vld [vmem:[#allocation2 + $0x190] sm:$0xff]
      %v489 = vld [vmem:[#allocation2 + $0x198] sm:$0xff]
      %v490 = vld [vmem:[#allocation2 + $0x1a0] sm:$0xff]
      %v491 = vld [vmem:[#allocation2 + $0x1a8] sm:$0xff]
      %v492 = vld [vmem:[#allocation2 + $0x1b0] sm:$0xff]
      %v493 = vld [vmem:[#allocation2 + $0x1b8] sm:$0xff]
      %v494 = vld [vmem:[#allocation2 + $0x1c0] sm:$0xff]
      %v495 = vld [vmem:[#allocation2 + $0x1c8] sm:$0xff]
      %v496 = vld [vmem:[#allocation2 + $0x1d0] sm:$0xff]
      %v497 = vld [vmem:[#allocation2 + $0x1d8] sm:$0xff]
      %v498 = vld [vmem:[#allocation2 + $0x1e0] sm:$0xff]
      %v499 = vld [vmem:[#allocation2 + $0x1e8] sm:$0xff]
      %v500 = vld [vmem:[#allocation2 + $0x1f0] sm:$0xff]
      %v501 = vld [vmem:[#allocation2 + $0x1f8] sm:$0xff]
      %v502 = vld [vmem:[#allocation2 + $0x200] sm:$0xff]
      %v503 = vld [vmem:[#allocation2 + $0x208] sm:$0xff]
      %v504 = vld [vmem:[#allocation2 + $0x210] sm:$0xff]
      %v505 = vld [vmem:[#allocation2 + $0x218] sm:$0xff]
      %v506 = vld [vmem:[#allocation2 + $0x220] sm:$0xff]
      %v507 = vld [vmem:[#allocation2 + $0x228] sm:$0xff]
      %v508 = vld [vmem:[#allocation2 + $0x230] sm:$0xff]
      %v509 = vld [vmem:[#allocation2 + $0x238] sm:$0xff]
      %v510 = vld [vmem:[#allocation2 + $0x240] sm:$0xff]
      %v511 = vld [vmem:[#allocation2 + $0x248] sm:$0xff]
      %v512 = vld [vmem:[#allocation2 + $0x250] sm:$0xff]
      %v513 = vld [vmem:[#allocation2 + $0x258] sm:$0xff]
      %v514 = vld [vmem:[#allocation2 + $0x260] sm:$0xff]
      %v515 = vld [vmem:[#allocation2 + $0x268] sm:$0xff]
      %v516 = vld [vmem:[#allocation2 + $0x270] sm:$0xff]
      %v517 = vld [vmem:[#allocation2 + $0x278] sm:$0xff]
      %v518 = vld [vmem:[#allocation2 + $0x280] sm:$0xff]
      %v519 = vld [vmem:[#allocation2 + $0x288] sm:$0xff]
      %v520 = vld [vmem:[#allocation2 + $0x290] sm:$0xff]
      %v521 = vld [vmem:[#allocation2 + $0x298] sm:$0xff]
      %v522 = vld [vmem:[#allocation2 + $0x2a0] sm:$0xff]
      %v523 = vld [vmem:[#allocation2 + $0x2a8] sm:$0xff]
      %v524 = vld [vmem:[#allocation2 + $0x2b0] sm:$0xff]
      %v525 = vld [vmem:[#allocation2 + $0x2b8] sm:$0xff]
      %v526 = vld [vmem:[#allocation2 + $0x2c0] sm:$0xff]
      %v527 = vld [vmem:[#allocation2 + $0x2c8] sm:$0xff]
      %v528 = vld [vmem:[#allocation2 + $0x2d0] sm:$0xff]
      %v529 = vld [vmem:[#allocation2 + $0x2d8] sm:$0xff]
      %v530 = vld [vmem:[#allocation2 + $0x2e0] sm:$0xff]
      %v531 = vld [vmem:[#allocation2 + $0x2e8] sm:$0xff]
      %v532 = vld [vmem:[#allocation2 + $0x2f0] sm:$0xff]
      %v533 = vld [vmem:[#allocation2 + $0x2f8] sm:$0xff]
      %v534 = vld [vmem:[#allocation2 + $0x300] sm:$0xff]
      %v535 = vld [vmem:[#allocation2 + $0x308] sm:$0xff]
      %v536 = vld [vmem:[#allocation2 + $0x310] sm:$0xff]
      %v537 = vld [vmem:[#allocation2 + $0x318] sm:$0xff]
      %v538 = vld [vmem:[#allocation2 + $0x320] sm:$0xff]
      %v539 = vld [vmem:[#allocation2 + $0x328] sm:$0xff]
      %v540 = vld [vmem:[#allocation2 + $0x330] sm:$0xff]
      %v541 = vld [vmem:[#allocation2 + $0x338] sm:$0xff]
      %v542 = vld [vmem:[#allocation2 + $0x340] sm:$0xff]
      %v543 = vld [vmem:[#allocation2 + $0x348] sm:$0xff]
      %v544 = vld [vmem:[#allocation2 + $0x350] sm:$0xff]
      %v545 = vld [vmem:[#allocation2 + $0x358] sm:$0xff]
      %v546 = vld [vmem:[#allocation2 + $0x360] sm:$0xff]
      %v547 = vld [vmem:[#allocation2 + $0x368] sm:$0xff]
      %v548 = vld [vmem:[#allocation2 + $0x370] sm:$0xff]
      %v549 = vld [vmem:[#allocation2 + $0x378] sm:$0xff]
      %v550 = vld [vmem:[#allocation2 + $0x380] sm:$0xff]
      %v551 = vld [vmem:[#allocation2 + $0x388] sm:$0xff]
      %v552 = vld [vmem:[#allocation2 + $0x390] sm:$0xff]
      %v553 = vld [vmem:[#allocation2 + $0x398] sm:$0xff]
      %v554 = vld [vmem:[#allocation2 + $0x3a0] sm:$0xff]
      %v555 = vld [vmem:[#allocation2 + $0x3a8] sm:$0xff]
      %v556 = vld [vmem:[#allocation2 + $0x3b0] sm:$0xff]
      %v557 = vld [vmem:[#allocation2 + $0x3b8] sm:$0xff]
      %v558 = vld [vmem:[#allocation2 + $0x3c0] sm:$0xff]
      %v559 = vld [vmem:[#allocation2 + $0x3c8] sm:$0xff]
      %v560 = vld [vmem:[#allocation2 + $0x3d0] sm:$0xff]
      %v561 = vld [vmem:[#allocation2 + $0x3d8] sm:$0xff]
      %v562 = vld [vmem:[#allocation2 + $0x3e0] sm:$0xff]
      %v563 = vld [vmem:[#allocation2 + $0x3e8] sm:$0xff]
      %v564 = vld [vmem:[#allocation2 + $0x3f0] sm:$0xff]
      %v565 = vld [vmem:[#allocation2 + $0x3f8] sm:$0xff]
      %v566 = vld [vmem:[%s273] sm:$0xf]
      %v567 = vld [vmem:[%s273 + $0x4] sm:$0xf]
      %v568 = vld [vmem:[%s273 + $0x8] sm:$0xf]
      %v569 = vld [vmem:[%s273 + $0xc] sm:$0xf]
      %v570 = vld [vmem:[%s273 + $0x10] sm:$0xf]
      %v571 = vld [vmem:[%s273 + $0x14] sm:$0xf]
      %v572 = vld [vmem:[%s273 + $0x18] sm:$0xf]
      %v573 = vld [vmem:[%s273 + $0x1c] sm:$0xf]
      %v574 = vld [vmem:[%s273 + $0x20] sm:$0xf]
      %v575 = vld [vmem:[%s273 + $0x24] sm:$0xf]
      %v576 = vld [vmem:[%s273 + $0x28] sm:$0xf]
      %v577 = vld [vmem:[%s273 + $0x2c] sm:$0xf]
      %v578 = vld [vmem:[%s273 + $0x30] sm:$0xf]
      %v579 = vld [vmem:[%s273 + $0x34] sm:$0xf]
      %v580 = vld [vmem:[%s273 + $0x38] sm:$0xf]
      %v581 = vld [vmem:[%s273 + $0x3c] sm:$0xf]
      %v582 = vld [vmem:[%s273 + $0x40] sm:$0xf]
      %v583 = vld [vmem:[%s273 + $0x44] sm:$0xf]
      %v584 = vld [vmem:[%s273 + $0x48] sm:$0xf]
      %v585 = vld [vmem:[%s273 + $0x4c] sm:$0xf]
      %v586 = vld [vmem:[%s273 + $0x50] sm:$0xf]
      %v587 = vld [vmem:[%s273 + $0x54] sm:$0xf]
      %v588 = vld [vmem:[%s273 + $0x58] sm:$0xf]
      %v589 = vld [vmem:[%s273 + $0x5c] sm:$0xf]
      %v590 = vld [vmem:[%s273 + $0x60] sm:$0xf]
      %v591 = vld [vmem:[%s273 + $0x64] sm:$0xf]
      %v592 = vld [vmem:[%s273 + $0x68] sm:$0xf]
      %v593 = vld [vmem:[%s273 + $0x6c] sm:$0xf]
      %v594 = vld [vmem:[%s273 + $0x70] sm:$0xf]
      %v595 = vld [vmem:[%s273 + $0x74] sm:$0xf]
      %v596 = vld [vmem:[%s273 + $0x78] sm:$0xf]
      %v597 = vld [vmem:[%s273 + $0x7c] sm:$0xf]
      %v598 = vld [vmem:[%s273 + $0x80] sm:$0xf]
      %v599 = vld [vmem:[%s273 + $0x84] sm:$0xf]
      %v600 = vld [vmem:[%s273 + $0x88] sm:$0xf]
      %v601 = vld [vmem:[%s273 + $0x8c] sm:$0xf]
      %v602 = vld [vmem:[%s273 + $0x90] sm:$0xf]
      %v603 = vld [vmem:[%s273 + $0x94] sm:$0xf]
      %v604 = vld [vmem:[%s273 + $0x98] sm:$0xf]
      %v605 = vld [vmem:[%s273 + $0x9c] sm:$0xf]
      %v606 = vld [vmem:[%s273 + $0xa0] sm:$0xf]
      %v607 = vld [vmem:[%s273 + $0xa4] sm:$0xf]
      %v608 = vld [vmem:[%s273 + $0xa8] sm:$0xf]
      %v609 = vld [vmem:[%s273 + $0xac] sm:$0xf]
      %v610 = vld [vmem:[%s273 + $0xb0] sm:$0xf]
      %v611 = vld [vmem:[%s273 + $0xb4] sm:$0xf]
      %v612 = vld [vmem:[%s273 + $0xb8] sm:$0xf]
      %v613 = vld [vmem:[%s273 + $0xbc] sm:$0xf]
      %v614 = vld [vmem:[%s273 + $0xc0] sm:$0xf]
      %v615 = vld [vmem:[%s273 + $0xc4] sm:$0xf]
      %v616 = vld [vmem:[%s273 + $0xc8] sm:$0xf]
      %v617 = vld [vmem:[%s273 + $0xcc] sm:$0xf]
      %v618 = vld [vmem:[%s273 + $0xd0] sm:$0xf]
      %v619 = vld [vmem:[%s273 + $0xd4] sm:$0xf]
      %v620 = vld [vmem:[%s273 + $0xd8] sm:$0xf]
      %v621 = vld [vmem:[%s273 + $0xdc] sm:$0xf]
      %v622 = vld [vmem:[%s273 + $0xe0] sm:$0xf]
      %v623 = vld [vmem:[%s273 + $0xe4] sm:$0xf]
      %v624 = vld [vmem:[%s273 + $0xe8] sm:$0xf]
      %v625 = vld [vmem:[%s273 + $0xec] sm:$0xf]
      %v626 = vld [vmem:[%s273 + $0xf0] sm:$0xf]
      %v627 = vld [vmem:[%s273 + $0xf4] sm:$0xf]
      %v628 = vld [vmem:[%s273 + $0xf8] sm:$0xf]
      %v629 = vld [vmem:[%s273 + $0xfc] sm:$0xf]
      %v630 = vld [vmem:[%s273 + $0x100] sm:$0xf]
      %v631 = vld [vmem:[%s273 + $0x104] sm:$0xf]
      %v632 = vld [vmem:[%s273 + $0x108] sm:$0xf]
      %v633 = vld [vmem:[%s273 + $0x10c] sm:$0xf]
      %v634 = vld [vmem:[%s273 + $0x110] sm:$0xf]
      %v635 = vld [vmem:[%s273 + $0x114] sm:$0xf]
      %v636 = vld [vmem:[%s273 + $0x118] sm:$0xf]
      %v637 = vld [vmem:[%s273 + $0x11c] sm:$0xf]
      %v638 = vld [vmem:[%s273 + $0x120] sm:$0xf]
      %v639 = vld [vmem:[%s273 + $0x124] sm:$0xf]
      %v640 = vld [vmem:[%s273 + $0x128] sm:$0xf]
      %v641 = vld [vmem:[%s273 + $0x12c] sm:$0xf]
      %v642 = vld [vmem:[%s273 + $0x130] sm:$0xf]
      %v643 = vld [vmem:[%s273 + $0x134] sm:$0xf]
      %v644 = vld [vmem:[%s273 + $0x138] sm:$0xf]
      %v645 = vld [vmem:[%s273 + $0x13c] sm:$0xf]
      %v646 = vld [vmem:[%s273 + $0x140] sm:$0xf]
      %v647 = vld [vmem:[%s273 + $0x144] sm:$0xf]
      %v648 = vld [vmem:[%s273 + $0x148] sm:$0xf]
      %v649 = vld [vmem:[%s273 + $0x14c] sm:$0xf]
      %v650 = vld [vmem:[%s273 + $0x150] sm:$0xf]
      %v651 = vld [vmem:[%s273 + $0x154] sm:$0xf]
      %v652 = vld [vmem:[%s273 + $0x158] sm:$0xf]
      %v653 = vld [vmem:[%s273 + $0x15c] sm:$0xf]
      %v654 = vld [vmem:[%s273 + $0x160] sm:$0xf]
      %v655 = vld [vmem:[%s273 + $0x164] sm:$0xf]
      %v656 = vld [vmem:[%s273 + $0x168] sm:$0xf]
      %v657 = vld [vmem:[%s273 + $0x16c] sm:$0xf]
      %v658 = vld [vmem:[%s273 + $0x170] sm:$0xf]
      %v659 = vld [vmem:[%s273 + $0x174] sm:$0xf]
      %v660 = vld [vmem:[%s273 + $0x178] sm:$0xf]
      %v661 = vld [vmem:[%s273 + $0x17c] sm:$0xf]
      %v662 = vld [vmem:[%s273 + $0x180] sm:$0xf]
      %v663 = vld [vmem:[%s273 + $0x184] sm:$0xf]
      %v664 = vld [vmem:[%s273 + $0x188] sm:$0xf]
      %v665 = vld [vmem:[%s273 + $0x18c] sm:$0xf]
      %v666 = vld [vmem:[%s273 + $0x190] sm:$0xf]
      %v667 = vld [vmem:[%s273 + $0x194] sm:$0xf]
      %v668 = vld [vmem:[%s273 + $0x198] sm:$0xf]
      %v669 = vld [vmem:[%s273 + $0x19c] sm:$0xf]
      %v670 = vld [vmem:[%s273 + $0x1a0] sm:$0xf]
      %v671 = vld [vmem:[%s273 + $0x1a4] sm:$0xf]
      %v672 = vld [vmem:[%s273 + $0x1a8] sm:$0xf]
      %v673 = vld [vmem:[%s273 + $0x1ac] sm:$0xf]
      %v674 = vld [vmem:[%s273 + $0x1b0] sm:$0xf]
      %v675 = vld [vmem:[%s273 + $0x1b4] sm:$0xf]
      %v676 = vld [vmem:[%s273 + $0x1b8] sm:$0xf]
      %v677 = vld [vmem:[%s273 + $0x1bc] sm:$0xf]
      %v678 = vld [vmem:[%s273 + $0x1c0] sm:$0xf]
      %v679 = vld [vmem:[%s273 + $0x1c4] sm:$0xf]
      %v680 = vld [vmem:[%s273 + $0x1c8] sm:$0xf]
      %v681 = vld [vmem:[%s273 + $0x1cc] sm:$0xf]
      %v682 = vld [vmem:[%s273 + $0x1d0] sm:$0xf]
      %v683 = vld [vmem:[%s273 + $0x1d4] sm:$0xf]
      %v684 = vld [vmem:[%s273 + $0x1d8] sm:$0xf]
      %v685 = vld [vmem:[%s273 + $0x1dc] sm:$0xf]
      %v686 = vld [vmem:[%s273 + $0x1e0] sm:$0xf]
      %v687 = vld [vmem:[%s273 + $0x1e4] sm:$0xf]
      %v688 = vld [vmem:[%s273 + $0x1e8] sm:$0xf]
      %v689 = vld [vmem:[%s273 + $0x1ec] sm:$0xf]
      %v690 = vld [vmem:[%s273 + $0x1f0] sm:$0xf]
      %v691 = vld [vmem:[%s273 + $0x1f4] sm:$0xf]
      %v692 = vld [vmem:[%s273 + $0x1f8] sm:$0xf]
      %v693 = vld [vmem:[%s273 + $0x1fc] sm:$0xf]
      %v694 = vld [vmem:[%s286] sm:$0xf]
      %v695 = vld [vmem:[%s286 + $0x4] sm:$0xf]
      %v824 = vunpack.c.l.b16 %v566
      %v825 = vunpack.c.l.b16 %v567
      %v826 = vunpack.c.l.b16 %v568
      %v827 = vunpack.c.l.b16 %v569
      %v828 = vunpack.c.l.b16 %v570
      %v829 = vunpack.c.l.b16 %v571
      %v830 = vunpack.c.l.b16 %v572
      %v831 = vunpack.c.l.b16 %v573
      %v832 = vunpack.c.l.b16 %v574
      %v833 = vunpack.c.l.b16 %v575
      %v834 = vunpack.c.l.b16 %v576
      %v835 = vunpack.c.l.b16 %v577
      %v836 = vunpack.c.l.b16 %v578
      %v837 = vunpack.c.l.b16 %v579
      %v838 = vunpack.c.l.b16 %v580
      %v839 = vunpack.c.l.b16 %v581
      %v840 = vunpack.c.l.b16 %v582
      %v841 = vunpack.c.l.b16 %v583
      %v842 = vunpack.c.l.b16 %v584
      %v843 = vunpack.c.l.b16 %v585
      %v844 = vunpack.c.l.b16 %v586
      %v845 = vunpack.c.l.b16 %v587
      %v846 = vunpack.c.l.b16 %v588
      %v847 = vunpack.c.l.b16 %v589
      %v848 = vunpack.c.l.b16 %v590
      %v849 = vunpack.c.l.b16 %v591
      %v850 = vunpack.c.l.b16 %v592
      %v851 = vunpack.c.l.b16 %v593
      %v852 = vunpack.c.l.b16 %v594
      %v853 = vunpack.c.l.b16 %v595
      %v854 = vunpack.c.l.b16 %v596
      %v855 = vunpack.c.l.b16 %v597
      %v856 = vunpack.c.l.b16 %v598
      %v857 = vunpack.c.l.b16 %v599
      %v858 = vunpack.c.l.b16 %v600
      %v859 = vunpack.c.l.b16 %v601
      %v860 = vunpack.c.l.b16 %v602
      %v861 = vunpack.c.l.b16 %v603
      %v862 = vunpack.c.l.b16 %v604
      %v863 = vunpack.c.l.b16 %v605
      %v864 = vunpack.c.l.b16 %v606
      %v865 = vunpack.c.l.b16 %v607
      %v866 = vunpack.c.l.b16 %v608
      %v867 = vunpack.c.l.b16 %v609
      %v868 = vunpack.c.l.b16 %v610
      %v869 = vunpack.c.l.b16 %v611
      %v870 = vunpack.c.l.b16 %v612
      %v871 = vunpack.c.l.b16 %v613
      %v872 = vunpack.c.l.b16 %v614
      %v873 = vunpack.c.l.b16 %v615
      %v874 = vunpack.c.l.b16 %v616
      %v875 = vunpack.c.l.b16 %v617
      %v876 = vunpack.c.l.b16 %v618
      %v877 = vunpack.c.l.b16 %v619
      %v878 = vunpack.c.l.b16 %v620
      %v879 = vunpack.c.l.b16 %v621
      %v880 = vunpack.c.l.b16 %v622
      %v881 = vunpack.c.l.b16 %v623
      %v882 = vunpack.c.l.b16 %v624
      %v883 = vunpack.c.l.b16 %v625
      %v884 = vunpack.c.l.b16 %v626
      %v885 = vunpack.c.l.b16 %v627
      %v886 = vunpack.c.l.b16 %v628
      %v887 = vunpack.c.l.b16 %v629
      %v888 = vunpack.c.l.b16 %v630
      %v889 = vunpack.c.l.b16 %v631
      %v890 = vunpack.c.l.b16 %v632
      %v891 = vunpack.c.l.b16 %v633
      %v892 = vunpack.c.l.b16 %v634
      %v893 = vunpack.c.l.b16 %v635
      %v894 = vunpack.c.l.b16 %v636
      %v895 = vunpack.c.l.b16 %v637
      %v896 = vunpack.c.l.b16 %v638
      %v897 = vunpack.c.l.b16 %v639
      %v898 = vunpack.c.l.b16 %v640
      %v899 = vunpack.c.l.b16 %v641
      %v900 = vunpack.c.l.b16 %v642
      %v901 = vunpack.c.l.b16 %v643
      %v902 = vunpack.c.l.b16 %v644
      %v903 = vunpack.c.l.b16 %v645
      %v904 = vunpack.c.l.b16 %v646
      %v905 = vunpack.c.l.b16 %v647
      %v906 = vunpack.c.l.b16 %v648
      %v907 = vunpack.c.l.b16 %v649
      %v908 = vunpack.c.l.b16 %v650
      %v909 = vunpack.c.l.b16 %v651
      %v910 = vunpack.c.l.b16 %v652
      %v911 = vunpack.c.l.b16 %v653
      %v912 = vunpack.c.l.b16 %v654
      %v913 = vunpack.c.l.b16 %v655
      %v914 = vunpack.c.l.b16 %v656
      %v915 = vunpack.c.l.b16 %v657
      %v916 = vunpack.c.l.b16 %v658
      %v917 = vunpack.c.l.b16 %v659
      %v918 = vunpack.c.l.b16 %v660
      %v919 = vunpack.c.l.b16 %v661
      %v920 = vunpack.c.l.b16 %v662
      %v921 = vunpack.c.l.b16 %v663
      %v922 = vunpack.c.l.b16 %v664
      %v923 = vunpack.c.l.b16 %v665
      %v924 = vunpack.c.l.b16 %v666
      %v925 = vunpack.c.l.b16 %v667
      %v926 = vunpack.c.l.b16 %v668
      %v927 = vunpack.c.l.b16 %v669
      %v928 = vunpack.c.l.b16 %v670
      %v929 = vunpack.c.l.b16 %v671
      %v930 = vunpack.c.l.b16 %v672
      %v931 = vunpack.c.l.b16 %v673
      %v932 = vunpack.c.l.b16 %v674
      %v933 = vunpack.c.l.b16 %v675
      %v934 = vunpack.c.l.b16 %v676
      %v935 = vunpack.c.l.b16 %v677
      %v936 = vunpack.c.l.b16 %v678
      %v937 = vunpack.c.l.b16 %v679
      %v938 = vunpack.c.l.b16 %v680
      %v939 = vunpack.c.l.b16 %v681
      %v940 = vunpack.c.l.b16 %v682
      %v941 = vunpack.c.l.b16 %v683
      %v942 = vunpack.c.l.b16 %v684
      %v943 = vunpack.c.l.b16 %v685
      %v944 = vunpack.c.l.b16 %v686
      %v945 = vunpack.c.l.b16 %v687
      %v946 = vunpack.c.l.b16 %v688
      %v947 = vunpack.c.l.b16 %v689
      %v948 = vunpack.c.l.b16 %v690
      %v949 = vunpack.c.l.b16 %v691
      %v950 = vunpack.c.l.b16 %v692
      %v951 = vunpack.c.l.b16 %v693
      %v952 = vpack.c.b16 %v825, %v824
      %v953 = vpack.c.b16 %v827, %v826
      %v954 = vpack.c.b16 %v829, %v828
      %v955 = vpack.c.b16 %v831, %v830
      %v956 = vpack.c.b16 %v833, %v832
      %v957 = vpack.c.b16 %v835, %v834
      %v958 = vpack.c.b16 %v837, %v836
      %v959 = vpack.c.b16 %v839, %v838
      %v960 = vpack.c.b16 %v841, %v840
      %v961 = vpack.c.b16 %v843, %v842
      %v962 = vpack.c.b16 %v845, %v844
      %v963 = vpack.c.b16 %v847, %v846
      %v964 = vpack.c.b16 %v849, %v848
      %v965 = vpack.c.b16 %v851, %v850
      %v966 = vpack.c.b16 %v853, %v852
      %v967 = vpack.c.b16 %v855, %v854
      %v968 = vpack.c.b16 %v857, %v856
      %v969 = vpack.c.b16 %v859, %v858
      %v970 = vpack.c.b16 %v861, %v860
      %v971 = vpack.c.b16 %v863, %v862
      %v972 = vpack.c.b16 %v865, %v864
      %v973 = vpack.c.b16 %v867, %v866
      %v974 = vpack.c.b16 %v869, %v868
      %v975 = vpack.c.b16 %v871, %v870
      %v976 = vpack.c.b16 %v873, %v872
      %v977 = vpack.c.b16 %v875, %v874
      %v978 = vpack.c.b16 %v877, %v876
      %v979 = vpack.c.b16 %v879, %v878
      %v980 = vpack.c.b16 %v881, %v880
      %v981 = vpack.c.b16 %v883, %v882
      %v982 = vpack.c.b16 %v885, %v884
      %v983 = vpack.c.b16 %v887, %v886
      %v984 = vpack.c.b16 %v889, %v888
      %v985 = vpack.c.b16 %v891, %v890
      %v986 = vpack.c.b16 %v893, %v892
      %v987 = vpack.c.b16 %v895, %v894
      %v988 = vpack.c.b16 %v897, %v896
      %v989 = vpack.c.b16 %v899, %v898
      %v990 = vpack.c.b16 %v901, %v900
      %v991 = vpack.c.b16 %v903, %v902
      %v992 = vpack.c.b16 %v905, %v904
      %v993 = vpack.c.b16 %v907, %v906
      %v994 = vpack.c.b16 %v909, %v908
      %v995 = vpack.c.b16 %v911, %v910
      %v996 = vpack.c.b16 %v913, %v912
      %v997 = vpack.c.b16 %v915, %v914
      %v998 = vpack.c.b16 %v917, %v916
      %v999 = vpack.c.b16 %v919, %v918
      %v1000 = vpack.c.b16 %v921, %v920
      %v1001 = vpack.c.b16 %v923, %v922
      %v1002 = vpack.c.b16 %v925, %v924
      %v1003 = vpack.c.b16 %v927, %v926
      %v1004 = vpack.c.b16 %v929, %v928
      %v1005 = vpack.c.b16 %v931, %v930
      %v1006 = vpack.c.b16 %v933, %v932
      %v1007 = vpack.c.b16 %v935, %v934
      %v1008 = vpack.c.b16 %v937, %v936
      %v1009 = vpack.c.b16 %v939, %v938
      %v1010 = vpack.c.b16 %v941, %v940
      %v1011 = vpack.c.b16 %v943, %v942
      %v1012 = vpack.c.b16 %v945, %v944
      %v1013 = vpack.c.b16 %v947, %v946
      %v1014 = vpack.c.b16 %v949, %v948
      %v1015 = vpack.c.b16 %v951, %v950
      %v1018 = vunpack.c.l.b16 %v694
      %v1019 = vunpack.c.l.b16 %v695
      %v1020 = vpack.c.b16 %v1019, %v1018
      %vm1022 = vcmask 130048
      %v1024 = vsel %vm1022, %v952, 0
      %v1027 = vsel %vm1022, %v953, 0
      %v1030 = vsel %vm1022, %v954, 0
      %v1033 = vsel %vm1022, %v955, 0
      %v1036 = vsel %vm1022, %v956, 0
      %v1039 = vsel %vm1022, %v957, 0
      %v1042 = vsel %vm1022, %v958, 0
      %v1045 = vsel %vm1022, %v959, 0
      %v1048 = vsel %vm1022, %v960, 0
      %v1051 = vsel %vm1022, %v961, 0
      %v1054 = vsel %vm1022, %v962, 0
      %v1057 = vsel %vm1022, %v963, 0
      %v1060 = vsel %vm1022, %v964, 0
      %v1063 = vsel %vm1022, %v965, 0
      %v1066 = vsel %vm1022, %v966, 0
      %v1069 = vsel %vm1022, %v967, 0
      %v1072 = vsel %vm1022, %v968, 0
      %v1075 = vsel %vm1022, %v969, 0
      %v1078 = vsel %vm1022, %v970, 0
      %v1081 = vsel %vm1022, %v971, 0
      %v1084 = vsel %vm1022, %v972, 0
      %v1087 = vsel %vm1022, %v973, 0
      %v1090 = vsel %vm1022, %v974, 0
      %v1093 = vsel %vm1022, %v975, 0
      %v1096 = vsel %vm1022, %v976, 0
      %v1099 = vsel %vm1022, %v977, 0
      %v1102 = vsel %vm1022, %v978, 0
      %v1105 = vsel %vm1022, %v979, 0
      %v1108 = vsel %vm1022, %v980, 0
      %v1111 = vsel %vm1022, %v981, 0
      %v1114 = vsel %vm1022, %v982, 0
      %v1117 = vsel %vm1022, %v983, 0
      %v1120 = vsel %vm1022, %v984, 0
      %v1123 = vsel %vm1022, %v985, 0
      %v1126 = vsel %vm1022, %v986, 0
      %v1129 = vsel %vm1022, %v987, 0
      %v1132 = vsel %vm1022, %v988, 0
      %v1135 = vsel %vm1022, %v989, 0
      %v1138 = vsel %vm1022, %v990, 0
      %v1141 = vsel %vm1022, %v991, 0
      %v1144 = vsel %vm1022, %v992, 0
      %v1147 = vsel %vm1022, %v993, 0
      %v1150 = vsel %vm1022, %v994, 0
      %v1153 = vsel %vm1022, %v995, 0
      %v1156 = vsel %vm1022, %v996, 0
      %v1159 = vsel %vm1022, %v997, 0
      %v1162 = vsel %vm1022, %v998, 0
      %v1165 = vsel %vm1022, %v999, 0
      %v1168 = vsel %vm1022, %v1000, 0
      %v1171 = vsel %vm1022, %v1001, 0
      %v1174 = vsel %vm1022, %v1002, 0
      %v1177 = vsel %vm1022, %v1003, 0
      %v1180 = vsel %vm1022, %v1004, 0
      %v1183 = vsel %vm1022, %v1005, 0
      %v1186 = vsel %vm1022, %v1006, 0
      %v1189 = vsel %vm1022, %v1007, 0
      %v1192 = vsel %vm1022, %v1008, 0
      %v1195 = vsel %vm1022, %v1009, 0
      %v1198 = vsel %vm1022, %v1010, 0
      %v1201 = vsel %vm1022, %v1011, 0
      %v1204 = vsel %vm1022, %v1012, 0
      %v1207 = vsel %vm1022, %v1013, 0
      %v1210 = vsel %vm1022, %v1014, 0
      %v1213 = vsel %vm1022, %v1015, 0
      %1215 = vmatpush.bf16.msra.mxu0 0
      %1216 = vmatpush.bf16.msra.mxu0 0
      %1217 = vmatpush.bf16.msra.mxu0 0
      %1218 = vmatpush.bf16.msra.mxu0 0
      %1219 = vmatpush.bf16.msra.mxu0 0
      %1220 = vmatpush.bf16.msra.mxu0 0
      %1221 = vmatpush.bf16.msra.mxu0 0
      %1222 = vmatpush.bf16.msra.mxu0 %v1020
      %1223 = vmatmul.bf16.gmra.mxu0 %v1024
      %v1224 = vpop.f32.mrf.mxu0
      %v1225 = vadd.f32 0.0, %v1224
      %v1226 = vpop.f32.mrf.mxu0
      %v1227 = vadd.f32 0.0, %v1226
      %1228 = vmatmul.bf16.gmra.mxu0 %v1027
      %v1229 = vpop.f32.mrf.mxu0
      %v1230 = vadd.f32 0.0, %v1229
      %v1231 = vpop.f32.mrf.mxu0
      %v1232 = vadd.f32 0.0, %v1231
      %1233 = vmatmul.bf16.gmra.mxu0 %v1030
      %v1234 = vpop.f32.mrf.mxu0
      %v1235 = vadd.f32 0.0, %v1234
      %v1236 = vpop.f32.mrf.mxu0
      %v1237 = vadd.f32 0.0, %v1236
      %1238 = vmatmul.bf16.gmra.mxu0 %v1033
      %v1239 = vpop.f32.mrf.mxu0
      %v1240 = vadd.f32 0.0, %v1239
      %v1241 = vpop.f32.mrf.mxu0
      %v1242 = vadd.f32 0.0, %v1241
      %1243 = vmatmul.bf16.gmra.mxu0 %v1036
      %v1244 = vpop.f32.mrf.mxu0
      %v1245 = vadd.f32 0.0, %v1244
      %v1246 = vpop.f32.mrf.mxu0
      %v1247 = vadd.f32 0.0, %v1246
      %1248 = vmatmul.bf16.gmra.mxu0 %v1039
      %v1249 = vpop.f32.mrf.mxu0
      %v1250 = vadd.f32 0.0, %v1249
      %v1251 = vpop.f32.mrf.mxu0
      %v1252 = vadd.f32 0.0, %v1251
      %1253 = vmatmul.bf16.gmra.mxu0 %v1042
      %v1254 = vpop.f32.mrf.mxu0
      %v1255 = vadd.f32 0.0, %v1254
      %v1256 = vpop.f32.mrf.mxu0
      %v1257 = vadd.f32 0.0, %v1256
      %1258 = vmatmul.bf16.gmra.mxu0 %v1045
      %v1259 = vpop.f32.mrf.mxu0
      %v1260 = vadd.f32 0.0, %v1259
      %v1261 = vpop.f32.mrf.mxu0
      %v1262 = vadd.f32 0.0, %v1261
      %1263 = vmatmul.bf16.gmra.mxu0 %v1048
      %v1264 = vpop.f32.mrf.mxu0
      %v1265 = vadd.f32 0.0, %v1264
      %v1266 = vpop.f32.mrf.mxu0
      %v1267 = vadd.f32 0.0, %v1266
      %1268 = vmatmul.bf16.gmra.mxu0 %v1051
      %v1269 = vpop.f32.mrf.mxu0
      %v1270 = vadd.f32 0.0, %v1269
      %v1271 = vpop.f32.mrf.mxu0
      %v1272 = vadd.f32 0.0, %v1271
      %1273 = vmatmul.bf16.gmra.mxu0 %v1054
      %v1274 = vpop.f32.mrf.mxu0
      %v1275 = vadd.f32 0.0, %v1274
      %v1276 = vpop.f32.mrf.mxu0
      %v1277 = vadd.f32 0.0, %v1276
      %1278 = vmatmul.bf16.gmra.mxu0 %v1057
      %v1279 = vpop.f32.mrf.mxu0
      %v1280 = vadd.f32 0.0, %v1279
      %v1281 = vpop.f32.mrf.mxu0
      %v1282 = vadd.f32 0.0, %v1281
      %1283 = vmatmul.bf16.gmra.mxu0 %v1060
      %v1284 = vpop.f32.mrf.mxu0
      %v1285 = vadd.f32 0.0, %v1284
      %v1286 = vpop.f32.mrf.mxu0
      %v1287 = vadd.f32 0.0, %v1286
      %1288 = vmatmul.bf16.gmra.mxu0 %v1063
      %v1289 = vpop.f32.mrf.mxu0
      %v1290 = vadd.f32 0.0, %v1289
      %v1291 = vpop.f32.mrf.mxu0
      %v1292 = vadd.f32 0.0, %v1291
      %1293 = vmatmul.bf16.gmra.mxu0 %v1066
      %v1294 = vpop.f32.mrf.mxu0
      %v1295 = vadd.f32 0.0, %v1294
      %v1296 = vpop.f32.mrf.mxu0
      %v1297 = vadd.f32 0.0, %v1296
      %1298 = vmatmul.bf16.gmra.mxu0 %v1069
      %v1299 = vpop.f32.mrf.mxu0
      %v1300 = vadd.f32 0.0, %v1299
      %v1301 = vpop.f32.mrf.mxu0
      %v1302 = vadd.f32 0.0, %v1301
      %1303 = vmatmul.bf16.gmra.mxu0 %v1072
      %v1304 = vpop.f32.mrf.mxu0
      %v1305 = vadd.f32 0.0, %v1304
      %v1306 = vpop.f32.mrf.mxu0
      %v1307 = vadd.f32 0.0, %v1306
      %1308 = vmatmul.bf16.gmra.mxu0 %v1075
      %v1309 = vpop.f32.mrf.mxu0
      %v1310 = vadd.f32 0.0, %v1309
      %v1311 = vpop.f32.mrf.mxu0
      %v1312 = vadd.f32 0.0, %v1311
      %1313 = vmatmul.bf16.gmra.mxu0 %v1078
      %v1314 = vpop.f32.mrf.mxu0
      %v1315 = vadd.f32 0.0, %v1314
      %v1316 = vpop.f32.mrf.mxu0
      %v1317 = vadd.f32 0.0, %v1316
      %1318 = vmatmul.bf16.gmra.mxu0 %v1081
      %v1319 = vpop.f32.mrf.mxu0
      %v1320 = vadd.f32 0.0, %v1319
      %v1321 = vpop.f32.mrf.mxu0
      %v1322 = vadd.f32 0.0, %v1321
      %1323 = vmatmul.bf16.gmra.mxu0 %v1084
      %v1324 = vpop.f32.mrf.mxu0
      %v1325 = vadd.f32 0.0, %v1324
      %v1326 = vpop.f32.mrf.mxu0
      %v1327 = vadd.f32 0.0, %v1326
      %1328 = vmatmul.bf16.gmra.mxu0 %v1087
      %v1329 = vpop.f32.mrf.mxu0
      %v1330 = vadd.f32 0.0, %v1329
      %v1331 = vpop.f32.mrf.mxu0
      %v1332 = vadd.f32 0.0, %v1331
      %1333 = vmatmul.bf16.gmra.mxu0 %v1090
      %v1334 = vpop.f32.mrf.mxu0
      %v1335 = vadd.f32 0.0, %v1334
      %v1336 = vpop.f32.mrf.mxu0
      %v1337 = vadd.f32 0.0, %v1336
      %1338 = vmatmul.bf16.gmra.mxu0 %v1093
      %v1339 = vpop.f32.mrf.mxu0
      %v1340 = vadd.f32 0.0, %v1339
      %v1341 = vpop.f32.mrf.mxu0
      %v1342 = vadd.f32 0.0, %v1341
      %1343 = vmatmul.bf16.gmra.mxu0 %v1096
      %v1344 = vpop.f32.mrf.mxu0
      %v1345 = vadd.f32 0.0, %v1344
      %v1346 = vpop.f32.mrf.mxu0
      %v1347 = vadd.f32 0.0, %v1346
      %1348 = vmatmul.bf16.gmra.mxu0 %v1099
      %v1349 = vpop.f32.mrf.mxu0
      %v1350 = vadd.f32 0.0, %v1349
      %v1351 = vpop.f32.mrf.mxu0
      %v1352 = vadd.f32 0.0, %v1351
      %1353 = vmatmul.bf16.gmra.mxu0 %v1102
      %v1354 = vpop.f32.mrf.mxu0
      %v1355 = vadd.f32 0.0, %v1354
      %v1356 = vpop.f32.mrf.mxu0
      %v1357 = vadd.f32 0.0, %v1356
      %1358 = vmatmul.bf16.gmra.mxu0 %v1105
      %v1359 = vpop.f32.mrf.mxu0
      %v1360 = vadd.f32 0.0, %v1359
      %v1361 = vpop.f32.mrf.mxu0
      %v1362 = vadd.f32 0.0, %v1361
      %1363 = vmatmul.bf16.gmra.mxu0 %v1108
      %v1364 = vpop.f32.mrf.mxu0
      %v1365 = vadd.f32 0.0, %v1364
      %v1366 = vpop.f32.mrf.mxu0
      %v1367 = vadd.f32 0.0, %v1366
      %1368 = vmatmul.bf16.gmra.mxu0 %v1111
      %v1369 = vpop.f32.mrf.mxu0
      %v1370 = vadd.f32 0.0, %v1369
      %v1371 = vpop.f32.mrf.mxu0
      %v1372 = vadd.f32 0.0, %v1371
      %1373 = vmatmul.bf16.gmra.mxu0 %v1114
      %v1374 = vpop.f32.mrf.mxu0
      %v1375 = vadd.f32 0.0, %v1374
      %v1376 = vpop.f32.mrf.mxu0
      %v1377 = vadd.f32 0.0, %v1376
      %1378 = vmatmul.bf16.gmra.mxu0 %v1117
      %v1379 = vpop.f32.mrf.mxu0
      %v1380 = vadd.f32 0.0, %v1379
      %v1381 = vpop.f32.mrf.mxu0
      %v1382 = vadd.f32 0.0, %v1381
      %1383 = vmatmul.bf16.gmra.mxu0 %v1120
      %v1384 = vpop.f32.mrf.mxu0
      %v1385 = vadd.f32 0.0, %v1384
      %v1386 = vpop.f32.mrf.mxu0
      %v1387 = vadd.f32 0.0, %v1386
      %1388 = vmatmul.bf16.gmra.mxu0 %v1123
      %v1389 = vpop.f32.mrf.mxu0
      %v1390 = vadd.f32 0.0, %v1389
      %v1391 = vpop.f32.mrf.mxu0
      %v1392 = vadd.f32 0.0, %v1391
      %1393 = vmatmul.bf16.gmra.mxu0 %v1126
      %v1394 = vpop.f32.mrf.mxu0
      %v1395 = vadd.f32 0.0, %v1394
      %v1396 = vpop.f32.mrf.mxu0
      %v1397 = vadd.f32 0.0, %v1396
      %1398 = vmatmul.bf16.gmra.mxu0 %v1129
      %v1399 = vpop.f32.mrf.mxu0
      %v1400 = vadd.f32 0.0, %v1399
      %v1401 = vpop.f32.mrf.mxu0
      %v1402 = vadd.f32 0.0, %v1401
      %1403 = vmatmul.bf16.gmra.mxu0 %v1132
      %v1404 = vpop.f32.mrf.mxu0
      %v1405 = vadd.f32 0.0, %v1404
      %v1406 = vpop.f32.mrf.mxu0
      %v1407 = vadd.f32 0.0, %v1406
      %1408 = vmatmul.bf16.gmra.mxu0 %v1135
      %v1409 = vpop.f32.mrf.mxu0
      %v1410 = vadd.f32 0.0, %v1409
      %v1411 = vpop.f32.mrf.mxu0
      %v1412 = vadd.f32 0.0, %v1411
      %1413 = vmatmul.bf16.gmra.mxu0 %v1138
      %v1414 = vpop.f32.mrf.mxu0
      %v1415 = vadd.f32 0.0, %v1414
      %v1416 = vpop.f32.mrf.mxu0
      %v1417 = vadd.f32 0.0, %v1416
      %1418 = vmatmul.bf16.gmra.mxu0 %v1141
      %v1419 = vpop.f32.mrf.mxu0
      %v1420 = vadd.f32 0.0, %v1419
      %v1421 = vpop.f32.mrf.mxu0
      %v1422 = vadd.f32 0.0, %v1421
      %1423 = vmatmul.bf16.gmra.mxu0 %v1144
      %v1424 = vpop.f32.mrf.mxu0
      %v1425 = vadd.f32 0.0, %v1424
      %v1426 = vpop.f32.mrf.mxu0
      %v1427 = vadd.f32 0.0, %v1426
      %1428 = vmatmul.bf16.gmra.mxu0 %v1147
      %v1429 = vpop.f32.mrf.mxu0
      %v1430 = vadd.f32 0.0, %v1429
      %v1431 = vpop.f32.mrf.mxu0
      %v1432 = vadd.f32 0.0, %v1431
      %1433 = vmatmul.bf16.gmra.mxu0 %v1150
      %v1434 = vpop.f32.mrf.mxu0
      %v1435 = vadd.f32 0.0, %v1434
      %v1436 = vpop.f32.mrf.mxu0
      %v1437 = vadd.f32 0.0, %v1436
      %1438 = vmatmul.bf16.gmra.mxu0 %v1153
      %v1439 = vpop.f32.mrf.mxu0
      %v1440 = vadd.f32 0.0, %v1439
      %v1441 = vpop.f32.mrf.mxu0
      %v1442 = vadd.f32 0.0, %v1441
      %1443 = vmatmul.bf16.gmra.mxu0 %v1156
      %v1444 = vpop.f32.mrf.mxu0
      %v1445 = vadd.f32 0.0, %v1444
      %v1446 = vpop.f32.mrf.mxu0
      %v1447 = vadd.f32 0.0, %v1446
      %1448 = vmatmul.bf16.gmra.mxu0 %v1159
      %v1449 = vpop.f32.mrf.mxu0
      %v1450 = vadd.f32 0.0, %v1449
      %v1451 = vpop.f32.mrf.mxu0
      %v1452 = vadd.f32 0.0, %v1451
      %1453 = vmatmul.bf16.gmra.mxu0 %v1162
      %v1454 = vpop.f32.mrf.mxu0
      %v1455 = vadd.f32 0.0, %v1454
      %v1456 = vpop.f32.mrf.mxu0
      %v1457 = vadd.f32 0.0, %v1456
      %1458 = vmatmul.bf16.gmra.mxu0 %v1165
      %v1459 = vpop.f32.mrf.mxu0
      %v1460 = vadd.f32 0.0, %v1459
      %v1461 = vpop.f32.mrf.mxu0
      %v1462 = vadd.f32 0.0, %v1461
      %1463 = vmatmul.bf16.gmra.mxu0 %v1168
      %v1464 = vpop.f32.mrf.mxu0
      %v1465 = vadd.f32 0.0, %v1464
      %v1466 = vpop.f32.mrf.mxu0
      %v1467 = vadd.f32 0.0, %v1466
      %1468 = vmatmul.bf16.gmra.mxu0 %v1171
      %v1469 = vpop.f32.mrf.mxu0
      %v1470 = vadd.f32 0.0, %v1469
      %v1471 = vpop.f32.mrf.mxu0
      %v1472 = vadd.f32 0.0, %v1471
      %1473 = vmatmul.bf16.gmra.mxu0 %v1174
      %v1474 = vpop.f32.mrf.mxu0
      %v1475 = vadd.f32 0.0, %v1474
      %v1476 = vpop.f32.mrf.mxu0
      %v1477 = vadd.f32 0.0, %v1476
      %1478 = vmatmul.bf16.gmra.mxu0 %v1177
      %v1479 = vpop.f32.mrf.mxu0
      %v1480 = vadd.f32 0.0, %v1479
      %v1481 = vpop.f32.mrf.mxu0
      %v1482 = vadd.f32 0.0, %v1481
      %1483 = vmatmul.bf16.gmra.mxu0 %v1180
      %v1484 = vpop.f32.mrf.mxu0
      %v1485 = vadd.f32 0.0, %v1484
      %v1486 = vpop.f32.mrf.mxu0
      %v1487 = vadd.f32 0.0, %v1486
      %1488 = vmatmul.bf16.gmra.mxu0 %v1183
      %v1489 = vpop.f32.mrf.mxu0
      %v1490 = vadd.f32 0.0, %v1489
      %v1491 = vpop.f32.mrf.mxu0
      %v1492 = vadd.f32 0.0, %v1491
      %1493 = vmatmul.bf16.gmra.mxu0 %v1186
      %v1494 = vpop.f32.mrf.mxu0
      %v1495 = vadd.f32 0.0, %v1494
      %v1496 = vpop.f32.mrf.mxu0
      %v1497 = vadd.f32 0.0, %v1496
      %1498 = vmatmul.bf16.gmra.mxu0 %v1189
      %v1499 = vpop.f32.mrf.mxu0
      %v1500 = vadd.f32 0.0, %v1499
      %v1501 = vpop.f32.mrf.mxu0
      %v1502 = vadd.f32 0.0, %v1501
      %1503 = vmatmul.bf16.gmra.mxu0 %v1192
      %v1504 = vpop.f32.mrf.mxu0
      %v1505 = vadd.f32 0.0, %v1504
      %v1506 = vpop.f32.mrf.mxu0
      %v1507 = vadd.f32 0.0, %v1506
      %1508 = vmatmul.bf16.gmra.mxu0 %v1195
      %v1509 = vpop.f32.mrf.mxu0
      %v1510 = vadd.f32 0.0, %v1509
      %v1511 = vpop.f32.mrf.mxu0
      %v1512 = vadd.f32 0.0, %v1511
      %1513 = vmatmul.bf16.gmra.mxu0 %v1198
      %v1514 = vpop.f32.mrf.mxu0
      %v1515 = vadd.f32 0.0, %v1514
      %v1516 = vpop.f32.mrf.mxu0
      %v1517 = vadd.f32 0.0, %v1516
      %1518 = vmatmul.bf16.gmra.mxu0 %v1201
      %v1519 = vpop.f32.mrf.mxu0
      %v1520 = vadd.f32 0.0, %v1519
      %v1521 = vpop.f32.mrf.mxu0
      %v1522 = vadd.f32 0.0, %v1521
      %1523 = vmatmul.bf16.gmra.mxu0 %v1204
      %v1524 = vpop.f32.mrf.mxu0
      %v1525 = vadd.f32 0.0, %v1524
      %v1526 = vpop.f32.mrf.mxu0
      %v1527 = vadd.f32 0.0, %v1526
      %1528 = vmatmul.bf16.gmra.mxu0 %v1207
      %v1529 = vpop.f32.mrf.mxu0
      %v1530 = vadd.f32 0.0, %v1529
      %v1531 = vpop.f32.mrf.mxu0
      %v1532 = vadd.f32 0.0, %v1531
      %1533 = vmatmul.bf16.gmra.mxu0 %v1210
      %v1534 = vpop.f32.mrf.mxu0
      %v1535 = vadd.f32 0.0, %v1534
      %v1536 = vpop.f32.mrf.mxu0
      %v1537 = vadd.f32 0.0, %v1536
      %1538 = vmatmul.bf16.gmra.mxu0 %v1213
      %v1539 = vpop.f32.mrf.mxu0
      %v1540 = vadd.f32 0.0, %v1539
      %v1541 = vpop.f32.mrf.mxu0
      %v1542 = vadd.f32 0.0, %v1541
      %1543 = vdwg.mxu0
      %v1544 = vadd.f32 %v438, %v1225
      %v1545 = vadd.f32 %v439, %v1227
      %v1546 = vadd.f32 %v440, %v1230
      %v1547 = vadd.f32 %v441, %v1232
      %v1548 = vadd.f32 %v442, %v1235
      %v1549 = vadd.f32 %v443, %v1237
      %v1550 = vadd.f32 %v444, %v1240
      %v1551 = vadd.f32 %v445, %v1242
      %v1552 = vadd.f32 %v446, %v1245
      %v1553 = vadd.f32 %v447, %v1247
      %v1554 = vadd.f32 %v448, %v1250
      %v1555 = vadd.f32 %v449, %v1252
      %v1556 = vadd.f32 %v450, %v1255
      %v1557 = vadd.f32 %v451, %v1257
      %v1558 = vadd.f32 %v452, %v1260
      %v1559 = vadd.f32 %v453, %v1262
      %v1560 = vadd.f32 %v454, %v1265
      %v1561 = vadd.f32 %v455, %v1267
      %v1562 = vadd.f32 %v456, %v1270
      %v1563 = vadd.f32 %v457, %v1272
      %v1564 = vadd.f32 %v458, %v1275
      %v1565 = vadd.f32 %v459, %v1277
      %v1566 = vadd.f32 %v460, %v1280
      %v1567 = vadd.f32 %v461, %v1282
      %v1568 = vadd.f32 %v462, %v1285
      %v1569 = vadd.f32 %v463, %v1287
      %v1570 = vadd.f32 %v464, %v1290
      %v1571 = vadd.f32 %v465, %v1292
      %v1572 = vadd.f32 %v466, %v1295
      %v1573 = vadd.f32 %v467, %v1297
      %v1574 = vadd.f32 %v468, %v1300
      %v1575 = vadd.f32 %v469, %v1302
      %v1576 = vadd.f32 %v470, %v1305
      %v1577 = vadd.f32 %v471, %v1307
      %v1578 = vadd.f32 %v472, %v1310
      %v1579 = vadd.f32 %v473, %v1312
      %v1580 = vadd.f32 %v474, %v1315
      %v1581 = vadd.f32 %v475, %v1317
      %v1582 = vadd.f32 %v476, %v1320
      %v1583 = vadd.f32 %v477, %v1322
      %v1584 = vadd.f32 %v478, %v1325
      %v1585 = vadd.f32 %v479, %v1327
      %v1586 = vadd.f32 %v480, %v1330
      %v1587 = vadd.f32 %v481, %v1332
      %v1588 = vadd.f32 %v482, %v1335
      %v1589 = vadd.f32 %v483, %v1337
      %v1590 = vadd.f32 %v484, %v1340
      %v1591 = vadd.f32 %v485, %v1342
      %v1592 = vadd.f32 %v486, %v1345
      %v1593 = vadd.f32 %v487, %v1347
      %v1594 = vadd.f32 %v488, %v1350
      %v1595 = vadd.f32 %v489, %v1352
      %v1596 = vadd.f32 %v490, %v1355
      %v1597 = vadd.f32 %v491, %v1357
      %v1598 = vadd.f32 %v492, %v1360
      %v1599 = vadd.f32 %v493, %v1362
      %v1600 = vadd.f32 %v494, %v1365
      %v1601 = vadd.f32 %v495, %v1367
      %v1602 = vadd.f32 %v496, %v1370
      %v1603 = vadd.f32 %v497, %v1372
      %v1604 = vadd.f32 %v498, %v1375
      %v1605 = vadd.f32 %v499, %v1377
      %v1606 = vadd.f32 %v500, %v1380
      %v1607 = vadd.f32 %v501, %v1382
      %v1608 = vadd.f32 %v502, %v1385
      %v1609 = vadd.f32 %v503, %v1387
      %v1610 = vadd.f32 %v504, %v1390
      %v1611 = vadd.f32 %v505, %v1392
      %v1612 = vadd.f32 %v506, %v1395
      %v1613 = vadd.f32 %v507, %v1397
      %v1614 = vadd.f32 %v508, %v1400
      %v1615 = vadd.f32 %v509, %v1402
      %v1616 = vadd.f32 %v510, %v1405
      %v1617 = vadd.f32 %v511, %v1407
      %v1618 = vadd.f32 %v512, %v1410
      %v1619 = vadd.f32 %v513, %v1412
      %v1620 = vadd.f32 %v514, %v1415
      %v1621 = vadd.f32 %v515, %v1417
      %v1622 = vadd.f32 %v516, %v1420
      %v1623 = vadd.f32 %v517, %v1422
      %v1624 = vadd.f32 %v518, %v1425
      %v1625 = vadd.f32 %v519, %v1427
      %v1626 = vadd.f32 %v520, %v1430
      %v1627 = vadd.f32 %v521, %v1432
      %v1628 = vadd.f32 %v522, %v1435
      %v1629 = vadd.f32 %v523, %v1437
      %v1630 = vadd.f32 %v524, %v1440
      %v1631 = vadd.f32 %v525, %v1442
      %v1632 = vadd.f32 %v526, %v1445
      %v1633 = vadd.f32 %v527, %v1447
      %v1634 = vadd.f32 %v528, %v1450
      %v1635 = vadd.f32 %v529, %v1452
      %v1636 = vadd.f32 %v530, %v1455
      %v1637 = vadd.f32 %v531, %v1457
      %v1638 = vadd.f32 %v532, %v1460
      %v1639 = vadd.f32 %v533, %v1462
      %v1640 = vadd.f32 %v534, %v1465
      %v1641 = vadd.f32 %v535, %v1467
      %v1642 = vadd.f32 %v536, %v1470
      %v1643 = vadd.f32 %v537, %v1472
      %v1644 = vadd.f32 %v538, %v1475
      %v1645 = vadd.f32 %v539, %v1477
      %v1646 = vadd.f32 %v540, %v1480
      %v1647 = vadd.f32 %v541, %v1482
      %v1648 = vadd.f32 %v542, %v1485
      %v1649 = vadd.f32 %v543, %v1487
      %v1650 = vadd.f32 %v544, %v1490
      %v1651 = vadd.f32 %v545, %v1492
      %v1652 = vadd.f32 %v546, %v1495
      %v1653 = vadd.f32 %v547, %v1497
      %v1654 = vadd.f32 %v548, %v1500
      %v1655 = vadd.f32 %v549, %v1502
      %v1656 = vadd.f32 %v550, %v1505
      %v1657 = vadd.f32 %v551, %v1507
      %v1658 = vadd.f32 %v552, %v1510
      %v1659 = vadd.f32 %v553, %v1512
      %v1660 = vadd.f32 %v554, %v1515
      %v1661 = vadd.f32 %v555, %v1517
      %v1662 = vadd.f32 %v556, %v1520
      %v1663 = vadd.f32 %v557, %v1522
      %v1664 = vadd.f32 %v558, %v1525
      %v1665 = vadd.f32 %v559, %v1527
      %v1666 = vadd.f32 %v560, %v1530
      %v1667 = vadd.f32 %v561, %v1532
      %v1668 = vadd.f32 %v562, %v1535
      %v1669 = vadd.f32 %v563, %v1537
      %v1670 = vadd.f32 %v564, %v1540
      %v1671 = vadd.f32 %v565, %v1542
      %vm1672 = vcmask 64512
      %1673 = vst.msk [vmem:[#allocation2] sm:$0xff] %vm1672, %v1544
      %1674 = vst.msk [vmem:[#allocation2 + $0x8] sm:$0xff] %vm1672, %v1545
      %1675 = vst.msk [vmem:[#allocation2 + $0x10] sm:$0xff] %vm1672, %v1546
      %1676 = vst.msk [vmem:[#allocation2 + $0x18] sm:$0xff] %vm1672, %v1547
      %1677 = vst.msk [vmem:[#allocation2 + $0x20] sm:$0xff] %vm1672, %v1548
      %1678 = vst.msk [vmem:[#allocation2 + $0x28] sm:$0xff] %vm1672, %v1549
      %1679 = vst.msk [vmem:[#allocation2 + $0x30] sm:$0xff] %vm1672, %v1550
      %1680 = vst.msk [vmem:[#allocation2 + $0x38] sm:$0xff] %vm1672, %v1551
      %1681 = vst.msk [vmem:[#allocation2 + $0x40] sm:$0xff] %vm1672, %v1552
      %1682 = vst.msk [vmem:[#allocation2 + $0x48] sm:$0xff] %vm1672, %v1553
      %1683 = vst.msk [vmem:[#allocation2 + $0x50] sm:$0xff] %vm1672, %v1554
      %1684 = vst.msk [vmem:[#allocation2 + $0x58] sm:$0xff] %vm1672, %v1555
      %1685 = vst.msk [vmem:[#allocation2 + $0x60] sm:$0xff] %vm1672, %v1556
      %1686 = vst.msk [vmem:[#allocation2 + $0x68] sm:$0xff] %vm1672, %v1557
      %1687 = vst.msk [vmem:[#allocation2 + $0x70] sm:$0xff] %vm1672, %v1558
      %1688 = vst.msk [vmem:[#allocation2 + $0x78] sm:$0xff] %vm1672, %v1559
      %1689 = vst.msk [vmem:[#allocation2 + $0x80] sm:$0xff] %vm1672, %v1560
      %1690 = vst.msk [vmem:[#allocation2 + $0x88] sm:$0xff] %vm1672, %v1561
      %1691 = vst.msk [vmem:[#allocation2 + $0x90] sm:$0xff] %vm1672, %v1562
      %1692 = vst.msk [vmem:[#allocation2 + $0x98] sm:$0xff] %vm1672, %v1563
      %1693 = vst.msk [vmem:[#allocation2 + $0xa0] sm:$0xff] %vm1672, %v1564
      %1694 = vst.msk [vmem:[#allocation2 + $0xa8] sm:$0xff] %vm1672, %v1565
      %1695 = vst.msk [vmem:[#allocation2 + $0xb0] sm:$0xff] %vm1672, %v1566
      %1696 = vst.msk [vmem:[#allocation2 + $0xb8] sm:$0xff] %vm1672, %v1567
      %1697 = vst.msk [vmem:[#allocation2 + $0xc0] sm:$0xff] %vm1672, %v1568
      %1698 = vst.msk [vmem:[#allocation2 + $0xc8] sm:$0xff] %vm1672, %v1569
      %1699 = vst.msk [vmem:[#allocation2 + $0xd0] sm:$0xff] %vm1672, %v1570
      %1700 = vst.msk [vmem:[#allocation2 + $0xd8] sm:$0xff] %vm1672, %v1571
      %1701 = vst.msk [vmem:[#allocation2 + $0xe0] sm:$0xff] %vm1672, %v1572
      %1702 = vst.msk [vmem:[#allocation2 + $0xe8] sm:$0xff] %vm1672, %v1573
      %1703 = vst.msk [vmem:[#allocation2 + $0xf0] sm:$0xff] %vm1672, %v1574
      %1704 = vst.msk [vmem:[#allocation2 + $0xf8] sm:$0xff] %vm1672, %v1575
      %1705 = vst.msk [vmem:[#allocation2 + $0x100] sm:$0xff] %vm1672, %v1576
      %1706 = vst.msk [vmem:[#allocation2 + $0x108] sm:$0xff] %vm1672, %v1577
      %1707 = vst.msk [vmem:[#allocation2 + $0x110] sm:$0xff] %vm1672, %v1578
      %1708 = vst.msk [vmem:[#allocation2 + $0x118] sm:$0xff] %vm1672, %v1579
      %1709 = vst.msk [vmem:[#allocation2 + $0x120] sm:$0xff] %vm1672, %v1580
      %1710 = vst.msk [vmem:[#allocation2 + $0x128] sm:$0xff] %vm1672, %v1581
      %1711 = vst.msk [vmem:[#allocation2 + $0x130] sm:$0xff] %vm1672, %v1582
      %1712 = vst.msk [vmem:[#allocation2 + $0x138] sm:$0xff] %vm1672, %v1583
      %1713 = vst.msk [vmem:[#allocation2 + $0x140] sm:$0xff] %vm1672, %v1584
      %1714 = vst.msk [vmem:[#allocation2 + $0x148] sm:$0xff] %vm1672, %v1585
      %1715 = vst.msk [vmem:[#allocation2 + $0x150] sm:$0xff] %vm1672, %v1586
      %1716 = vst.msk [vmem:[#allocation2 + $0x158] sm:$0xff] %vm1672, %v1587
      %1717 = vst.msk [vmem:[#allocation2 + $0x160] sm:$0xff] %vm1672, %v1588
      %1718 = vst.msk [vmem:[#allocation2 + $0x168] sm:$0xff] %vm1672, %v1589
      %1719 = vst.msk [vmem:[#allocation2 + $0x170] sm:$0xff] %vm1672, %v1590
      %1720 = vst.msk [vmem:[#allocation2 + $0x178] sm:$0xff] %vm1672, %v1591
      %1721 = vst.msk [vmem:[#allocation2 + $0x180] sm:$0xff] %vm1672, %v1592
      %1722 = vst.msk [vmem:[#allocation2 + $0x188] sm:$0xff] %vm1672, %v1593
      %1723 = vst.msk [vmem:[#allocation2 + $0x190] sm:$0xff] %vm1672, %v1594
      %1724 = vst.msk [vmem:[#allocation2 + $0x198] sm:$0xff] %vm1672, %v1595
      %1725 = vst.msk [vmem:[#allocation2 + $0x1a0] sm:$0xff] %vm1672, %v1596
      %1726 = vst.msk [vmem:[#allocation2 + $0x1a8] sm:$0xff] %vm1672, %v1597
      %1727 = vst.msk [vmem:[#allocation2 + $0x1b0] sm:$0xff] %vm1672, %v1598
      %1728 = vst.msk [vmem:[#allocation2 + $0x1b8] sm:$0xff] %vm1672, %v1599
      %1729 = vst.msk [vmem:[#allocation2 + $0x1c0] sm:$0xff] %vm1672, %v1600
      %1730 = vst.msk [vmem:[#allocation2 + $0x1c8] sm:$0xff] %vm1672, %v1601
      %1731 = vst.msk [vmem:[#allocation2 + $0x1d0] sm:$0xff] %vm1672, %v1602
      %1732 = vst.msk [vmem:[#allocation2 + $0x1d8] sm:$0xff] %vm1672, %v1603
      %1733 = vst.msk [vmem:[#allocation2 + $0x1e0] sm:$0xff] %vm1672, %v1604
      %1734 = vst.msk [vmem:[#allocation2 + $0x1e8] sm:$0xff] %vm1672, %v1605
      %1735 = vst.msk [vmem:[#allocation2 + $0x1f0] sm:$0xff] %vm1672, %v1606
      %1736 = vst.msk [vmem:[#allocation2 + $0x1f8] sm:$0xff] %vm1672, %v1607
      %1737 = vst.msk [vmem:[#allocation2 + $0x200] sm:$0xff] %vm1672, %v1608
      %1738 = vst.msk [vmem:[#allocation2 + $0x208] sm:$0xff] %vm1672, %v1609
      %1739 = vst.msk [vmem:[#allocation2 + $0x210] sm:$0xff] %vm1672, %v1610
      %1740 = vst.msk [vmem:[#allocation2 + $0x218] sm:$0xff] %vm1672, %v1611
      %1741 = vst.msk [vmem:[#allocation2 + $0x220] sm:$0xff] %vm1672, %v1612
      %1742 = vst.msk [vmem:[#allocation2 + $0x228] sm:$0xff] %vm1672, %v1613
      %1743 = vst.msk [vmem:[#allocation2 + $0x230] sm:$0xff] %vm1672, %v1614
      %1744 = vst.msk [vmem:[#allocation2 + $0x238] sm:$0xff] %vm1672, %v1615
      %1745 = vst.msk [vmem:[#allocation2 + $0x240] sm:$0xff] %vm1672, %v1616
      %1746 = vst.msk [vmem:[#allocation2 + $0x248] sm:$0xff] %vm1672, %v1617
      %1747 = vst.msk [vmem:[#allocation2 + $0x250] sm:$0xff] %vm1672, %v1618
      %1748 = vst.msk [vmem:[#allocation2 + $0x258] sm:$0xff] %vm1672, %v1619
      %1749 = vst.msk [vmem:[#allocation2 + $0x260] sm:$0xff] %vm1672, %v1620
      %1750 = vst.msk [vmem:[#allocation2 + $0x268] sm:$0xff] %vm1672, %v1621
      %1751 = vst.msk [vmem:[#allocation2 + $0x270] sm:$0xff] %vm1672, %v1622
      %1752 = vst.msk [vmem:[#allocation2 + $0x278] sm:$0xff] %vm1672, %v1623
      %1753 = vst.msk [vmem:[#allocation2 + $0x280] sm:$0xff] %vm1672, %v1624
      %1754 = vst.msk [vmem:[#allocation2 + $0x288] sm:$0xff] %vm1672, %v1625
      %1755 = vst.msk [vmem:[#allocation2 + $0x290] sm:$0xff] %vm1672, %v1626
      %1756 = vst.msk [vmem:[#allocation2 + $0x298] sm:$0xff] %vm1672, %v1627
      %1757 = vst.msk [vmem:[#allocation2 + $0x2a0] sm:$0xff] %vm1672, %v1628
      %1758 = vst.msk [vmem:[#allocation2 + $0x2a8] sm:$0xff] %vm1672, %v1629
      %1759 = vst.msk [vmem:[#allocation2 + $0x2b0] sm:$0xff] %vm1672, %v1630
      %1760 = vst.msk [vmem:[#allocation2 + $0x2b8] sm:$0xff] %vm1672, %v1631
      %1761 = vst.msk [vmem:[#allocation2 + $0x2c0] sm:$0xff] %vm1672, %v1632
      %1762 = vst.msk [vmem:[#allocation2 + $0x2c8] sm:$0xff] %vm1672, %v1633
      %1763 = vst.msk [vmem:[#allocation2 + $0x2d0] sm:$0xff] %vm1672, %v1634
      %1764 = vst.msk [vmem:[#allocation2 + $0x2d8] sm:$0xff] %vm1672, %v1635
      %1765 = vst.msk [vmem:[#allocation2 + $0x2e0] sm:$0xff] %vm1672, %v1636
      %1766 = vst.msk [vmem:[#allocation2 + $0x2e8] sm:$0xff] %vm1672, %v1637
      %1767 = vst.msk [vmem:[#allocation2 + $0x2f0] sm:$0xff] %vm1672, %v1638
      %1768 = vst.msk [vmem:[#allocation2 + $0x2f8] sm:$0xff] %vm1672, %v1639
      %1769 = vst.msk [vmem:[#allocation2 + $0x300] sm:$0xff] %vm1672, %v1640
      %1770 = vst.msk [vmem:[#allocation2 + $0x308] sm:$0xff] %vm1672, %v1641
      %1771 = vst.msk [vmem:[#allocation2 + $0x310] sm:$0xff] %vm1672, %v1642
      %1772 = vst.msk [vmem:[#allocation2 + $0x318] sm:$0xff] %vm1672, %v1643
      %1773 = vst.msk [vmem:[#allocation2 + $0x320] sm:$0xff] %vm1672, %v1644
      %1774 = vst.msk [vmem:[#allocation2 + $0x328] sm:$0xff] %vm1672, %v1645
      %1775 = vst.msk [vmem:[#allocation2 + $0x330] sm:$0xff] %vm1672, %v1646
      %1776 = vst.msk [vmem:[#allocation2 + $0x338] sm:$0xff] %vm1672, %v1647
      %1777 = vst.msk [vmem:[#allocation2 + $0x340] sm:$0xff] %vm1672, %v1648
      %1778 = vst.msk [vmem:[#allocation2 + $0x348] sm:$0xff] %vm1672, %v1649
      %1779 = vst.msk [vmem:[#allocation2 + $0x350] sm:$0xff] %vm1672, %v1650
      %1780 = vst.msk [vmem:[#allocation2 + $0x358] sm:$0xff] %vm1672, %v1651
      %1781 = vst.msk [vmem:[#allocation2 + $0x360] sm:$0xff] %vm1672, %v1652
      %1782 = vst.msk [vmem:[#allocation2 + $0x368] sm:$0xff] %vm1672, %v1653
      %1783 = vst.msk [vmem:[#allocation2 + $0x370] sm:$0xff] %vm1672, %v1654
      %1784 = vst.msk [vmem:[#allocation2 + $0x378] sm:$0xff] %vm1672, %v1655
      %1785 = vst.msk [vmem:[#allocation2 + $0x380] sm:$0xff] %vm1672, %v1656
      %1786 = vst.msk [vmem:[#allocation2 + $0x388] sm:$0xff] %vm1672, %v1657
      %1787 = vst.msk [vmem:[#allocation2 + $0x390] sm:$0xff] %vm1672, %v1658
      %1788 = vst.msk [vmem:[#allocation2 + $0x398] sm:$0xff] %vm1672, %v1659
      %1789 = vst.msk [vmem:[#allocation2 + $0x3a0] sm:$0xff] %vm1672, %v1660
      %1790 = vst.msk [vmem:[#allocation2 + $0x3a8] sm:$0xff] %vm1672, %v1661
      %1791 = vst.msk [vmem:[#allocation2 + $0x3b0] sm:$0xff] %vm1672, %v1662
      %1792 = vst.msk [vmem:[#allocation2 + $0x3b8] sm:$0xff] %vm1672, %v1663
      %1793 = vst.msk [vmem:[#allocation2 + $0x3c0] sm:$0xff] %vm1672, %v1664
      %1794 = vst.msk [vmem:[#allocation2 + $0x3c8] sm:$0xff] %vm1672, %v1665
      %1795 = vst.msk [vmem:[#allocation2 + $0x3d0] sm:$0xff] %vm1672, %v1666
      %1796 = vst.msk [vmem:[#allocation2 + $0x3d8] sm:$0xff] %vm1672, %v1667
      %1797 = vst.msk [vmem:[#allocation2 + $0x3e0] sm:$0xff] %vm1672, %v1668
      %1798 = vst.msk [vmem:[#allocation2 + $0x3e8] sm:$0xff] %vm1672, %v1669
      %1799 = vst.msk [vmem:[#allocation2 + $0x3f0] sm:$0xff] %vm1672, %v1670
      %1800 = vst.msk [vmem:[#allocation2 + $0x3f8] sm:$0xff] %vm1672, %v1671
      // Predicated region
      $region37: #{_bmm_core.1} parent=31 // pred_check
        %p1801 = pneg %p305
      $region38: #{_bmm_core.1} parent=31 // pred_check_branch
        %1803 = sbr.rel (%p1801) target = $region40
      $region39: #{_bmm_core.1} parent=31 // pred_region
        %v1804 = vld [vmem:[#allocation2] sm:$0xff]
        %v1805 = vld [vmem:[#allocation2 + $0x8] sm:$0xff]
        %v1806 = vld [vmem:[#allocation2 + $0x10] sm:$0xff]
        %v1807 = vld [vmem:[#allocation2 + $0x18] sm:$0xff]
        %v1808 = vld [vmem:[#allocation2 + $0x20] sm:$0xff]
        %v1809 = vld [vmem:[#allocation2 + $0x28] sm:$0xff]
        %v1810 = vld [vmem:[#allocation2 + $0x30] sm:$0xff]
        %v1811 = vld [vmem:[#allocation2 + $0x38] sm:$0xff]
        %v1812 = vld [vmem:[#allocation2 + $0x40] sm:$0xff]
        %v1813 = vld [vmem:[#allocation2 + $0x48] sm:$0xff]
        %v1814 = vld [vmem:[#allocation2 + $0x50] sm:$0xff]
        %v1815 = vld [vmem:[#allocation2 + $0x58] sm:$0xff]
        %v1816 = vld [vmem:[#allocation2 + $0x60] sm:$0xff]
        %v1817 = vld [vmem:[#allocation2 + $0x68] sm:$0xff]
        %v1818 = vld [vmem:[#allocation2 + $0x70] sm:$0xff]
        %v1819 = vld [vmem:[#allocation2 + $0x78] sm:$0xff]
        %v1820 = vld [vmem:[#allocation2 + $0x80] sm:$0xff]
        %v1821 = vld [vmem:[#allocation2 + $0x88] sm:$0xff]
        %v1822 = vld [vmem:[#allocation2 + $0x90] sm:$0xff]
        %v1823 = vld [vmem:[#allocation2 + $0x98] sm:$0xff]
        %v1824 = vld [vmem:[#allocation2 + $0xa0] sm:$0xff]
        %v1825 = vld [vmem:[#allocation2 + $0xa8] sm:$0xff]
        %v1826 = vld [vmem:[#allocation2 + $0xb0] sm:$0xff]
        %v1827 = vld [vmem:[#allocation2 + $0xb8] sm:$0xff]
        %v1828 = vld [vmem:[#allocation2 + $0xc0] sm:$0xff]
        %v1829 = vld [vmem:[#allocation2 + $0xc8] sm:$0xff]
        %v1830 = vld [vmem:[#allocation2 + $0xd0] sm:$0xff]
        %v1831 = vld [vmem:[#allocation2 + $0xd8] sm:$0xff]
        %v1832 = vld [vmem:[#allocation2 + $0xe0] sm:$0xff]
        %v1833 = vld [vmem:[#allocation2 + $0xe8] sm:$0xff]
        %v1834 = vld [vmem:[#allocation2 + $0xf0] sm:$0xff]
        %v1835 = vld [vmem:[#allocation2 + $0xf8] sm:$0xff]
        %v1836 = vld [vmem:[#allocation2 + $0x100] sm:$0xff]
        %v1837 = vld [vmem:[#allocation2 + $0x108] sm:$0xff]
        %v1838 = vld [vmem:[#allocation2 + $0x110] sm:$0xff]
        %v1839 = vld [vmem:[#allocation2 + $0x118] sm:$0xff]
        %v1840 = vld [vmem:[#allocation2 + $0x120] sm:$0xff]
        %v1841 = vld [vmem:[#allocation2 + $0x128] sm:$0xff]
        %v1842 = vld [vmem:[#allocation2 + $0x130] sm:$0xff]
        %v1843 = vld [vmem:[#allocation2 + $0x138] sm:$0xff]
        %v1844 = vld [vmem:[#allocation2 + $0x140] sm:$0xff]
        %v1845 = vld [vmem:[#allocation2 + $0x148] sm:$0xff]
        %v1846 = vld [vmem:[#allocation2 + $0x150] sm:$0xff]
        %v1847 = vld [vmem:[#allocation2 + $0x158] sm:$0xff]
        %v1848 = vld [vmem:[#allocation2 + $0x160] sm:$0xff]
        %v1849 = vld [vmem:[#allocation2 + $0x168] sm:$0xff]
        %v1850 = vld [vmem:[#allocation2 + $0x170] sm:$0xff]
        %v1851 = vld [vmem:[#allocation2 + $0x178] sm:$0xff]
        %v1852 = vld [vmem:[#allocation2 + $0x180] sm:$0xff]
        %v1853 = vld [vmem:[#allocation2 + $0x188] sm:$0xff]
        %v1854 = vld [vmem:[#allocation2 + $0x190] sm:$0xff]
        %v1855 = vld [vmem:[#allocation2 + $0x198] sm:$0xff]
        %v1856 = vld [vmem:[#allocation2 + $0x1a0] sm:$0xff]
        %v1857 = vld [vmem:[#allocation2 + $0x1a8] sm:$0xff]
        %v1858 = vld [vmem:[#allocation2 + $0x1b0] sm:$0xff]
        %v1859 = vld [vmem:[#allocation2 + $0x1b8] sm:$0xff]
        %v1860 = vld [vmem:[#allocation2 + $0x1c0] sm:$0xff]
        %v1861 = vld [vmem:[#allocation2 + $0x1c8] sm:$0xff]
        %v1862 = vld [vmem:[#allocation2 + $0x1d0] sm:$0xff]
        %v1863 = vld [vmem:[#allocation2 + $0x1d8] sm:$0xff]
        %v1864 = vld [vmem:[#allocation2 + $0x1e0] sm:$0xff]
        %v1865 = vld [vmem:[#allocation2 + $0x1e8] sm:$0xff]
        %v1866 = vld [vmem:[#allocation2 + $0x1f0] sm:$0xff]
        %v1867 = vld [vmem:[#allocation2 + $0x1f8] sm:$0xff]
        %v1868 = vld [vmem:[#allocation2 + $0x200] sm:$0xff]
        %v1869 = vld [vmem:[#allocation2 + $0x208] sm:$0xff]
        %v1870 = vld [vmem:[#allocation2 + $0x210] sm:$0xff]
        %v1871 = vld [vmem:[#allocation2 + $0x218] sm:$0xff]
        %v1872 = vld [vmem:[#allocation2 + $0x220] sm:$0xff]
        %v1873 = vld [vmem:[#allocation2 + $0x228] sm:$0xff]
        %v1874 = vld [vmem:[#allocation2 + $0x230] sm:$0xff]
        %v1875 = vld [vmem:[#allocation2 + $0x238] sm:$0xff]
        %v1876 = vld [vmem:[#allocation2 + $0x240] sm:$0xff]
        %v1877 = vld [vmem:[#allocation2 + $0x248] sm:$0xff]
        %v1878 = vld [vmem:[#allocation2 + $0x250] sm:$0xff]
        %v1879 = vld [vmem:[#allocation2 + $0x258] sm:$0xff]
        %v1880 = vld [vmem:[#allocation2 + $0x260] sm:$0xff]
        %v1881 = vld [vmem:[#allocation2 + $0x268] sm:$0xff]
        %v1882 = vld [vmem:[#allocation2 + $0x270] sm:$0xff]
        %v1883 = vld [vmem:[#allocation2 + $0x278] sm:$0xff]
        %v1884 = vld [vmem:[#allocation2 + $0x280] sm:$0xff]
        %v1885 = vld [vmem:[#allocation2 + $0x288] sm:$0xff]
        %v1886 = vld [vmem:[#allocation2 + $0x290] sm:$0xff]
        %v1887 = vld [vmem:[#allocation2 + $0x298] sm:$0xff]
        %v1888 = vld [vmem:[#allocation2 + $0x2a0] sm:$0xff]
        %v1889 = vld [vmem:[#allocation2 + $0x2a8] sm:$0xff]
        %v1890 = vld [vmem:[#allocation2 + $0x2b0] sm:$0xff]
        %v1891 = vld [vmem:[#allocation2 + $0x2b8] sm:$0xff]
        %v1892 = vld [vmem:[#allocation2 + $0x2c0] sm:$0xff]
        %v1893 = vld [vmem:[#allocation2 + $0x2c8] sm:$0xff]
        %v1894 = vld [vmem:[#allocation2 + $0x2d0] sm:$0xff]
        %v1895 = vld [vmem:[#allocation2 + $0x2d8] sm:$0xff]
        %v1896 = vld [vmem:[#allocation2 + $0x2e0] sm:$0xff]
        %v1897 = vld [vmem:[#allocation2 + $0x2e8] sm:$0xff]
        %v1898 = vld [vmem:[#allocation2 + $0x2f0] sm:$0xff]
        %v1899 = vld [vmem:[#allocation2 + $0x2f8] sm:$0xff]
        %v1900 = vld [vmem:[#allocation2 + $0x300] sm:$0xff]
        %v1901 = vld [vmem:[#allocation2 + $0x308] sm:$0xff]
        %v1902 = vld [vmem:[#allocation2 + $0x310] sm:$0xff]
        %v1903 = vld [vmem:[#allocation2 + $0x318] sm:$0xff]
        %v1904 = vld [vmem:[#allocation2 + $0x320] sm:$0xff]
        %v1905 = vld [vmem:[#allocation2 + $0x328] sm:$0xff]
        %v1906 = vld [vmem:[#allocation2 + $0x330] sm:$0xff]
        %v1907 = vld [vmem:[#allocation2 + $0x338] sm:$0xff]
        %v1908 = vld [vmem:[#allocation2 + $0x340] sm:$0xff]
        %v1909 = vld [vmem:[#allocation2 + $0x348] sm:$0xff]
        %v1910 = vld [vmem:[#allocation2 + $0x350] sm:$0xff]
        %v1911 = vld [vmem:[#allocation2 + $0x358] sm:$0xff]
        %v1912 = vld [vmem:[#allocation2 + $0x360] sm:$0xff]
        %v1913 = vld [vmem:[#allocation2 + $0x368] sm:$0xff]
        %v1914 = vld [vmem:[#allocation2 + $0x370] sm:$0xff]
        %v1915 = vld [vmem:[#allocation2 + $0x378] sm:$0xff]
        %v1916 = vld [vmem:[#allocation2 + $0x380] sm:$0xff]
        %v1917 = vld [vmem:[#allocation2 + $0x388] sm:$0xff]
        %v1918 = vld [vmem:[#allocation2 + $0x390] sm:$0xff]
        %v1919 = vld [vmem:[#allocation2 + $0x398] sm:$0xff]
        %v1920 = vld [vmem:[#allocation2 + $0x3a0] sm:$0xff]
        %v1921 = vld [vmem:[#allocation2 + $0x3a8] sm:$0xff]
        %v1922 = vld [vmem:[#allocation2 + $0x3b0] sm:$0xff]
        %v1923 = vld [vmem:[#allocation2 + $0x3b8] sm:$0xff]
        %v1924 = vld [vmem:[#allocation2 + $0x3c0] sm:$0xff]
        %v1925 = vld [vmem:[#allocation2 + $0x3c8] sm:$0xff]
        %v1926 = vld [vmem:[#allocation2 + $0x3d0] sm:$0xff]
        %v1927 = vld [vmem:[#allocation2 + $0x3d8] sm:$0xff]
        %v1928 = vld [vmem:[#allocation2 + $0x3e0] sm:$0xff]
        %v1929 = vld [vmem:[#allocation2 + $0x3e8] sm:$0xff]
        %v1930 = vld [vmem:[#allocation2 + $0x3f0] sm:$0xff]
        %v1931 = vld [vmem:[#allocation2 + $0x3f8] sm:$0xff]
        %v1932 = vld [vmem:[%s290] sm:$0x1]
        %v1934 = vperm.slane %v1932, 0
        %v1936 = vadd.f32 %v1804, %v1934
        %v1937 = vadd.f32 %v1805, %v1934
        %v1938 = vadd.f32 %v1806, %v1934
        %v1939 = vadd.f32 %v1807, %v1934
        %v1940 = vadd.f32 %v1808, %v1934
        %v1941 = vadd.f32 %v1809, %v1934
        %v1942 = vadd.f32 %v1810, %v1934
        %v1943 = vadd.f32 %v1811, %v1934
        %v1944 = vadd.f32 %v1812, %v1934
        %v1945 = vadd.f32 %v1813, %v1934
        %v1946 = vadd.f32 %v1814, %v1934
        %v1947 = vadd.f32 %v1815, %v1934
        %v1948 = vadd.f32 %v1816, %v1934
        %v1949 = vadd.f32 %v1817, %v1934
        %v1950 = vadd.f32 %v1818, %v1934
        %v1951 = vadd.f32 %v1819, %v1934
        %v1952 = vadd.f32 %v1820, %v1934
        %v1953 = vadd.f32 %v1821, %v1934
        %v1954 = vadd.f32 %v1822, %v1934
        %v1955 = vadd.f32 %v1823, %v1934
        %v1956 = vadd.f32 %v1824, %v1934
        %v1957 = vadd.f32 %v1825, %v1934
        %v1958 = vadd.f32 %v1826, %v1934
        %v1959 = vadd.f32 %v1827, %v1934
        %v1960 = vadd.f32 %v1828, %v1934
        %v1961 = vadd.f32 %v1829, %v1934
        %v1962 = vadd.f32 %v1830, %v1934
        %v1963 = vadd.f32 %v1831, %v1934
        %v1964 = vadd.f32 %v1832, %v1934
        %v1965 = vadd.f32 %v1833, %v1934
        %v1966 = vadd.f32 %v1834, %v1934
        %v1967 = vadd.f32 %v1835, %v1934
        %v1968 = vadd.f32 %v1836, %v1934
        %v1969 = vadd.f32 %v1837, %v1934
        %v1970 = vadd.f32 %v1838, %v1934
        %v1971 = vadd.f32 %v1839, %v1934
        %v1972 = vadd.f32 %v1840, %v1934
        %v1973 = vadd.f32 %v1841, %v1934
        %v1974 = vadd.f32 %v1842, %v1934
        %v1975 = vadd.f32 %v1843, %v1934
        %v1976 = vadd.f32 %v1844, %v1934
        %v1977 = vadd.f32 %v1845, %v1934
        %v1978 = vadd.f32 %v1846, %v1934
        %v1979 = vadd.f32 %v1847, %v1934
        %v1980 = vadd.f32 %v1848, %v1934
        %v1981 = vadd.f32 %v1849, %v1934
        %v1982 = vadd.f32 %v1850, %v1934
        %v1983 = vadd.f32 %v1851, %v1934
        %v1984 = vadd.f32 %v1852, %v1934
        %v1985 = vadd.f32 %v1853, %v1934
        %v1986 = vadd.f32 %v1854, %v1934
        %v1987 = vadd.f32 %v1855, %v1934
        %v1988 = vadd.f32 %v1856, %v1934
        %v1989 = vadd.f32 %v1857, %v1934
        %v1990 = vadd.f32 %v1858, %v1934
        %v1991 = vadd.f32 %v1859, %v1934
        %v1992 = vadd.f32 %v1860, %v1934
        %v1993 = vadd.f32 %v1861, %v1934
        %v1994 = vadd.f32 %v1862, %v1934
        %v1995 = vadd.f32 %v1863, %v1934
        %v1996 = vadd.f32 %v1864, %v1934
        %v1997 = vadd.f32 %v1865, %v1934
        %v1998 = vadd.f32 %v1866, %v1934
        %v1999 = vadd.f32 %v1867, %v1934
        %v2000 = vadd.f32 %v1868, %v1934
        %v2001 = vadd.f32 %v1869, %v1934
        %v2002 = vadd.f32 %v1870, %v1934
        %v2003 = vadd.f32 %v1871, %v1934
        %v2004 = vadd.f32 %v1872, %v1934
        %v2005 = vadd.f32 %v1873, %v1934
        %v2006 = vadd.f32 %v1874, %v1934
        %v2007 = vadd.f32 %v1875, %v1934
        %v2008 = vadd.f32 %v1876, %v1934
        %v2009 = vadd.f32 %v1877, %v1934
        %v2010 = vadd.f32 %v1878, %v1934
        %v2011 = vadd.f32 %v1879, %v1934
        %v2012 = vadd.f32 %v1880, %v1934
        %v2013 = vadd.f32 %v1881, %v1934
        %v2014 = vadd.f32 %v1882, %v1934
        %v2015 = vadd.f32 %v1883, %v1934
        %v2016 = vadd.f32 %v1884, %v1934
        %v2017 = vadd.f32 %v1885, %v1934
        %v2018 = vadd.f32 %v1886, %v1934
        %v2019 = vadd.f32 %v1887, %v1934
        %v2020 = vadd.f32 %v1888, %v1934
        %v2021 = vadd.f32 %v1889, %v1934
        %v2022 = vadd.f32 %v1890, %v1934
        %v2023 = vadd.f32 %v1891, %v1934
        %v2024 = vadd.f32 %v1892, %v1934
        %v2025 = vadd.f32 %v1893, %v1934
        %v2026 = vadd.f32 %v1894, %v1934
        %v2027 = vadd.f32 %v1895, %v1934
        %v2028 = vadd.f32 %v1896, %v1934
        %v2029 = vadd.f32 %v1897, %v1934
        %v2030 = vadd.f32 %v1898, %v1934
        %v2031 = vadd.f32 %v1899, %v1934
        %v2032 = vadd.f32 %v1900, %v1934
        %v2033 = vadd.f32 %v1901, %v1934
        %v2034 = vadd.f32 %v1902, %v1934
        %v2035 = vadd.f32 %v1903, %v1934
        %v2036 = vadd.f32 %v1904, %v1934
        %v2037 = vadd.f32 %v1905, %v1934
        %v2038 = vadd.f32 %v1906, %v1934
        %v2039 = vadd.f32 %v1907, %v1934
        %v2040 = vadd.f32 %v1908, %v1934
        %v2041 = vadd.f32 %v1909, %v1934
        %v2042 = vadd.f32 %v1910, %v1934
        %v2043 = vadd.f32 %v1911, %v1934
        %v2044 = vadd.f32 %v1912, %v1934
        %v2045 = vadd.f32 %v1913, %v1934
        %v2046 = vadd.f32 %v1914, %v1934
        %v2047 = vadd.f32 %v1915, %v1934
        %v2048 = vadd.f32 %v1916, %v1934
        %v2049 = vadd.f32 %v1917, %v1934
        %v2050 = vadd.f32 %v1918, %v1934
        %v2051 = vadd.f32 %v1919, %v1934
        %v2052 = vadd.f32 %v1920, %v1934
        %v2053 = vadd.f32 %v1921, %v1934
        %v2054 = vadd.f32 %v1922, %v1934
        %v2055 = vadd.f32 %v1923, %v1934
        %v2056 = vadd.f32 %v1924, %v1934
        %v2057 = vadd.f32 %v1925, %v1934
        %v2058 = vadd.f32 %v1926, %v1934
        %v2059 = vadd.f32 %v1927, %v1934
        %v2060 = vadd.f32 %v1928, %v1934
        %v2061 = vadd.f32 %v1929, %v1934
        %v2062 = vadd.f32 %v1930, %v1934
        %v2063 = vadd.f32 %v1931, %v1934
        %vm2064 = vcmp.gt.f32.partialorder %v1936, 0.0
        %vm2065 = vcmp.gt.f32.partialorder %v1937, 0.0
        %vm2066 = vcmp.gt.f32.partialorder %v1938, 0.0
        %vm2067 = vcmp.gt.f32.partialorder %v1939, 0.0
        %vm2068 = vcmp.gt.f32.partialorder %v1940, 0.0
        %vm2069 = vcmp.gt.f32.partialorder %v1941, 0.0
        %vm2070 = vcmp.gt.f32.partialorder %v1942, 0.0
        %vm2071 = vcmp.gt.f32.partialorder %v1943, 0.0
        %vm2072 = vcmp.gt.f32.partialorder %v1944, 0.0
        %vm2073 = vcmp.gt.f32.partialorder %v1945, 0.0
        %vm2074 = vcmp.gt.f32.partialorder %v1946, 0.0
        %vm2075 = vcmp.gt.f32.partialorder %v1947, 0.0
        %vm2076 = vcmp.gt.f32.partialorder %v1948, 0.0
        %vm2077 = vcmp.gt.f32.partialorder %v1949, 0.0
        %vm2078 = vcmp.gt.f32.partialorder %v1950, 0.0
        %vm2079 = vcmp.gt.f32.partialorder %v1951, 0.0
        %vm2080 = vcmp.gt.f32.partialorder %v1952, 0.0
        %vm2081 = vcmp.gt.f32.partialorder %v1953, 0.0
        %vm2082 = vcmp.gt.f32.partialorder %v1954, 0.0
        %vm2083 = vcmp.gt.f32.partialorder %v1955, 0.0
        %vm2084 = vcmp.gt.f32.partialorder %v1956, 0.0
        %vm2085 = vcmp.gt.f32.partialorder %v1957, 0.0
        %vm2086 = vcmp.gt.f32.partialorder %v1958, 0.0
        %vm2087 = vcmp.gt.f32.partialorder %v1959, 0.0
        %vm2088 = vcmp.gt.f32.partialorder %v1960, 0.0
        %vm2089 = vcmp.gt.f32.partialorder %v1961, 0.0
        %vm2090 = vcmp.gt.f32.partialorder %v1962, 0.0
        %vm2091 = vcmp.gt.f32.partialorder %v1963, 0.0
        %vm2092 = vcmp.gt.f32.partialorder %v1964, 0.0
        %vm2093 = vcmp.gt.f32.partialorder %v1965, 0.0
        %vm2094 = vcmp.gt.f32.partialorder %v1966, 0.0
        %vm2095 = vcmp.gt.f32.partialorder %v1967, 0.0
        %vm2096 = vcmp.gt.f32.partialorder %v1968, 0.0
        %vm2097 = vcmp.gt.f32.partialorder %v1969, 0.0
        %vm2098 = vcmp.gt.f32.partialorder %v1970, 0.0
        %vm2099 = vcmp.gt.f32.partialorder %v1971, 0.0
        %vm2100 = vcmp.gt.f32.partialorder %v1972, 0.0
        %vm2101 = vcmp.gt.f32.partialorder %v1973, 0.0
        %vm2102 = vcmp.gt.f32.partialorder %v1974, 0.0
        %vm2103 = vcmp.gt.f32.partialorder %v1975, 0.0
        %vm2104 = vcmp.gt.f32.partialorder %v1976, 0.0
        %vm2105 = vcmp.gt.f32.partialorder %v1977, 0.0
        %vm2106 = vcmp.gt.f32.partialorder %v1978, 0.0
        %vm2107 = vcmp.gt.f32.partialorder %v1979, 0.0
        %vm2108 = vcmp.gt.f32.partialorder %v1980, 0.0
        %vm2109 = vcmp.gt.f32.partialorder %v1981, 0.0
        %vm2110 = vcmp.gt.f32.partialorder %v1982, 0.0
        %vm2111 = vcmp.gt.f32.partialorder %v1983, 0.0
        %vm2112 = vcmp.gt.f32.partialorder %v1984, 0.0
        %vm2113 = vcmp.gt.f32.partialorder %v1985, 0.0
        %vm2114 = vcmp.gt.f32.partialorder %v1986, 0.0
        %vm2115 = vcmp.gt.f32.partialorder %v1987, 0.0
        %vm2116 = vcmp.gt.f32.partialorder %v1988, 0.0
        %vm2117 = vcmp.gt.f32.partialorder %v1989, 0.0
        %vm2118 = vcmp.gt.f32.partialorder %v1990, 0.0
        %vm2119 = vcmp.gt.f32.partialorder %v1991, 0.0
        %vm2120 = vcmp.gt.f32.partialorder %v1992, 0.0
        %vm2121 = vcmp.gt.f32.partialorder %v1993, 0.0
        %vm2122 = vcmp.gt.f32.partialorder %v1994, 0.0
        %vm2123 = vcmp.gt.f32.partialorder %v1995, 0.0
        %vm2124 = vcmp.gt.f32.partialorder %v1996, 0.0
        %vm2125 = vcmp.gt.f32.partialorder %v1997, 0.0
        %vm2126 = vcmp.gt.f32.partialorder %v1998, 0.0
        %vm2127 = vcmp.gt.f32.partialorder %v1999, 0.0
        %vm2128 = vcmp.gt.f32.partialorder %v2000, 0.0
        %vm2129 = vcmp.gt.f32.partialorder %v2001, 0.0
        %vm2130 = vcmp.gt.f32.partialorder %v2002, 0.0
        %vm2131 = vcmp.gt.f32.partialorder %v2003, 0.0
        %vm2132 = vcmp.gt.f32.partialorder %v2004, 0.0
        %vm2133 = vcmp.gt.f32.partialorder %v2005, 0.0
        %vm2134 = vcmp.gt.f32.partialorder %v2006, 0.0
        %vm2135 = vcmp.gt.f32.partialorder %v2007, 0.0
        %vm2136 = vcmp.gt.f32.partialorder %v2008, 0.0
        %vm2137 = vcmp.gt.f32.partialorder %v2009, 0.0
        %vm2138 = vcmp.gt.f32.partialorder %v2010, 0.0
        %vm2139 = vcmp.gt.f32.partialorder %v2011, 0.0
        %vm2140 = vcmp.gt.f32.partialorder %v2012, 0.0
        %vm2141 = vcmp.gt.f32.partialorder %v2013, 0.0
        %vm2142 = vcmp.gt.f32.partialorder %v2014, 0.0
        %vm2143 = vcmp.gt.f32.partialorder %v2015, 0.0
        %vm2144 = vcmp.gt.f32.partialorder %v2016, 0.0
        %vm2145 = vcmp.gt.f32.partialorder %v2017, 0.0
        %vm2146 = vcmp.gt.f32.partialorder %v2018, 0.0
        %vm2147 = vcmp.gt.f32.partialorder %v2019, 0.0
        %vm2148 = vcmp.gt.f32.partialorder %v2020, 0.0
        %vm2149 = vcmp.gt.f32.partialorder %v2021, 0.0
        %vm2150 = vcmp.gt.f32.partialorder %v2022, 0.0
        %vm2151 = vcmp.gt.f32.partialorder %v2023, 0.0
        %vm2152 = vcmp.gt.f32.partialorder %v2024, 0.0
        %vm2153 = vcmp.gt.f32.partialorder %v2025, 0.0
        %vm2154 = vcmp.gt.f32.partialorder %v2026, 0.0
        %vm2155 = vcmp.gt.f32.partialorder %v2027, 0.0
        %vm2156 = vcmp.gt.f32.partialorder %v2028, 0.0
        %vm2157 = vcmp.gt.f32.partialorder %v2029, 0.0
        %vm2158 = vcmp.gt.f32.partialorder %v2030, 0.0
        %vm2159 = vcmp.gt.f32.partialorder %v2031, 0.0
        %vm2160 = vcmp.gt.f32.partialorder %v2032, 0.0
        %vm2161 = vcmp.gt.f32.partialorder %v2033, 0.0
        %vm2162 = vcmp.gt.f32.partialorder %v2034, 0.0
        %vm2163 = vcmp.gt.f32.partialorder %v2035, 0.0
        %vm2164 = vcmp.gt.f32.partialorder %v2036, 0.0
        %vm2165 = vcmp.gt.f32.partialorder %v2037, 0.0
        %vm2166 = vcmp.gt.f32.partialorder %v2038, 0.0
        %vm2167 = vcmp.gt.f32.partialorder %v2039, 0.0
        %vm2168 = vcmp.gt.f32.partialorder %v2040, 0.0
        %vm2169 = vcmp.gt.f32.partialorder %v2041, 0.0
        %vm2170 = vcmp.gt.f32.partialorder %v2042, 0.0
        %vm2171 = vcmp.gt.f32.partialorder %v2043, 0.0
        %vm2172 = vcmp.gt.f32.partialorder %v2044, 0.0
        %vm2173 = vcmp.gt.f32.partialorder %v2045, 0.0
        %vm2174 = vcmp.gt.f32.partialorder %v2046, 0.0
        %vm2175 = vcmp.gt.f32.partialorder %v2047, 0.0
        %vm2176 = vcmp.gt.f32.partialorder %v2048, 0.0
        %vm2177 = vcmp.gt.f32.partialorder %v2049, 0.0
        %vm2178 = vcmp.gt.f32.partialorder %v2050, 0.0
        %vm2179 = vcmp.gt.f32.partialorder %v2051, 0.0
        %vm2180 = vcmp.gt.f32.partialorder %v2052, 0.0
        %vm2181 = vcmp.gt.f32.partialorder %v2053, 0.0
        %vm2182 = vcmp.gt.f32.partialorder %v2054, 0.0
        %vm2183 = vcmp.gt.f32.partialorder %v2055, 0.0
        %vm2184 = vcmp.gt.f32.partialorder %v2056, 0.0
        %vm2185 = vcmp.gt.f32.partialorder %v2057, 0.0
        %vm2186 = vcmp.gt.f32.partialorder %v2058, 0.0
        %vm2187 = vcmp.gt.f32.partialorder %v2059, 0.0
        %vm2188 = vcmp.gt.f32.partialorder %v2060, 0.0
        %vm2189 = vcmp.gt.f32.partialorder %v2061, 0.0
        %vm2190 = vcmp.gt.f32.partialorder %v2062, 0.0
        %vm2191 = vcmp.gt.f32.partialorder %v2063, 0.0
        %v2192 = vmul.f32 %v1936, 0.2
        %v2193 = vmul.f32 %v1937, 0.2
        %v2194 = vmul.f32 %v1938, 0.2
        %v2195 = vmul.f32 %v1939, 0.2
        %v2196 = vmul.f32 %v1940, 0.2
        %v2197 = vmul.f32 %v1941, 0.2
        %v2198 = vmul.f32 %v1942, 0.2
        %v2199 = vmul.f32 %v1943, 0.2
        %v2200 = vmul.f32 %v1944, 0.2
        %v2201 = vmul.f32 %v1945, 0.2
        %v2202 = vmul.f32 %v1946, 0.2
        %v2203 = vmul.f32 %v1947, 0.2
        %v2204 = vmul.f32 %v1948, 0.2
        %v2205 = vmul.f32 %v1949, 0.2
        %v2206 = vmul.f32 %v1950, 0.2
        %v2207 = vmul.f32 %v1951, 0.2
        %v2208 = vmul.f32 %v1952, 0.2
        %v2209 = vmul.f32 %v1953, 0.2
        %v2210 = vmul.f32 %v1954, 0.2
        %v2211 = vmul.f32 %v1955, 0.2
        %v2212 = vmul.f32 %v1956, 0.2
        %v2213 = vmul.f32 %v1957, 0.2
        %v2214 = vmul.f32 %v1958, 0.2
        %v2215 = vmul.f32 %v1959, 0.2
        %v2216 = vmul.f32 %v1960, 0.2
        %v2217 = vmul.f32 %v1961, 0.2
        %v2218 = vmul.f32 %v1962, 0.2
        %v2219 = vmul.f32 %v1963, 0.2
        %v2220 = vmul.f32 %v1964, 0.2
        %v2221 = vmul.f32 %v1965, 0.2
        %v2222 = vmul.f32 %v1966, 0.2
        %v2223 = vmul.f32 %v1967, 0.2
        %v2224 = vmul.f32 %v1968, 0.2
        %v2225 = vmul.f32 %v1969, 0.2
        %v2226 = vmul.f32 %v1970, 0.2
        %v2227 = vmul.f32 %v1971, 0.2
        %v2228 = vmul.f32 %v1972, 0.2
        %v2229 = vmul.f32 %v1973, 0.2
        %v2230 = vmul.f32 %v1974, 0.2
        %v2231 = vmul.f32 %v1975, 0.2
        %v2232 = vmul.f32 %v1976, 0.2
        %v2233 = vmul.f32 %v1977, 0.2
        %v2234 = vmul.f32 %v1978, 0.2
        %v2235 = vmul.f32 %v1979, 0.2
        %v2236 = vmul.f32 %v1980, 0.2
        %v2237 = vmul.f32 %v1981, 0.2
        %v2238 = vmul.f32 %v1982, 0.2
        %v2239 = vmul.f32 %v1983, 0.2
        %v2240 = vmul.f32 %v1984, 0.2
        %v2241 = vmul.f32 %v1985, 0.2
        %v2242 = vmul.f32 %v1986, 0.2
        %v2243 = vmul.f32 %v1987, 0.2
        %v2244 = vmul.f32 %v1988, 0.2
        %v2245 = vmul.f32 %v1989, 0.2
        %v2246 = vmul.f32 %v1990, 0.2
        %v2247 = vmul.f32 %v1991, 0.2
        %v2248 = vmul.f32 %v1992, 0.2
        %v2249 = vmul.f32 %v1993, 0.2
        %v2250 = vmul.f32 %v1994, 0.2
        %v2251 = vmul.f32 %v1995, 0.2
        %v2252 = vmul.f32 %v1996, 0.2
        %v2253 = vmul.f32 %v1997, 0.2
        %v2254 = vmul.f32 %v1998, 0.2
        %v2255 = vmul.f32 %v1999, 0.2
        %v2256 = vmul.f32 %v2000, 0.2
        %v2257 = vmul.f32 %v2001, 0.2
        %v2258 = vmul.f32 %v2002, 0.2
        %v2259 = vmul.f32 %v2003, 0.2
        %v2260 = vmul.f32 %v2004, 0.2
        %v2261 = vmul.f32 %v2005, 0.2
        %v2262 = vmul.f32 %v2006, 0.2
        %v2263 = vmul.f32 %v2007, 0.2
        %v2264 = vmul.f32 %v2008, 0.2
        %v2265 = vmul.f32 %v2009, 0.2
        %v2266 = vmul.f32 %v2010, 0.2
        %v2267 = vmul.f32 %v2011, 0.2
        %v2268 = vmul.f32 %v2012, 0.2
        %v2269 = vmul.f32 %v2013, 0.2
        %v2270 = vmul.f32 %v2014, 0.2
        %v2271 = vmul.f32 %v2015, 0.2
        %v2272 = vmul.f32 %v2016, 0.2
        %v2273 = vmul.f32 %v2017, 0.2
        %v2274 = vmul.f32 %v2018, 0.2
        %v2275 = vmul.f32 %v2019, 0.2
        %v2276 = vmul.f32 %v2020, 0.2
        %v2277 = vmul.f32 %v2021, 0.2
        %v2278 = vmul.f32 %v2022, 0.2
        %v2279 = vmul.f32 %v2023, 0.2
        %v2280 = vmul.f32 %v2024, 0.2
        %v2281 = vmul.f32 %v2025, 0.2
        %v2282 = vmul.f32 %v2026, 0.2
        %v2283 = vmul.f32 %v2027, 0.2
        %v2284 = vmul.f32 %v2028, 0.2
        %v2285 = vmul.f32 %v2029, 0.2
        %v2286 = vmul.f32 %v2030, 0.2
        %v2287 = vmul.f32 %v2031, 0.2
        %v2288 = vmul.f32 %v2032, 0.2
        %v2289 = vmul.f32 %v2033, 0.2
        %v2290 = vmul.f32 %v2034, 0.2
        %v2291 = vmul.f32 %v2035, 0.2
        %v2292 = vmul.f32 %v2036, 0.2
        %v2293 = vmul.f32 %v2037, 0.2
        %v2294 = vmul.f32 %v2038, 0.2
        %v2295 = vmul.f32 %v2039, 0.2
        %v2296 = vmul.f32 %v2040, 0.2
        %v2297 = vmul.f32 %v2041, 0.2
        %v2298 = vmul.f32 %v2042, 0.2
        %v2299 = vmul.f32 %v2043, 0.2
        %v2300 = vmul.f32 %v2044, 0.2
        %v2301 = vmul.f32 %v2045, 0.2
        %v2302 = vmul.f32 %v2046, 0.2
        %v2303 = vmul.f32 %v2047, 0.2
        %v2304 = vmul.f32 %v2048, 0.2
        %v2305 = vmul.f32 %v2049, 0.2
        %v2306 = vmul.f32 %v2050, 0.2
        %v2307 = vmul.f32 %v2051, 0.2
        %v2308 = vmul.f32 %v2052, 0.2
        %v2309 = vmul.f32 %v2053, 0.2
        %v2310 = vmul.f32 %v2054, 0.2
        %v2311 = vmul.f32 %v2055, 0.2
        %v2312 = vmul.f32 %v2056, 0.2
        %v2313 = vmul.f32 %v2057, 0.2
        %v2314 = vmul.f32 %v2058, 0.2
        %v2315 = vmul.f32 %v2059, 0.2
        %v2316 = vmul.f32 %v2060, 0.2
        %v2317 = vmul.f32 %v2061, 0.2
        %v2318 = vmul.f32 %v2062, 0.2
        %v2319 = vmul.f32 %v2063, 0.2
        %v2320 = vsel %vm2064, %v1936, %v2192
        %v2321 = vsel %vm2065, %v1937, %v2193
        %v2322 = vsel %vm2066, %v1938, %v2194
        %v2323 = vsel %vm2067, %v1939, %v2195
        %v2324 = vsel %vm2068, %v1940, %v2196
        %v2325 = vsel %vm2069, %v1941, %v2197
        %v2326 = vsel %vm2070, %v1942, %v2198
        %v2327 = vsel %vm2071, %v1943, %v2199
        %v2328 = vsel %vm2072, %v1944, %v2200
        %v2329 = vsel %vm2073, %v1945, %v2201
        %v2330 = vsel %vm2074, %v1946, %v2202
        %v2331 = vsel %vm2075, %v1947, %v2203
        %v2332 = vsel %vm2076, %v1948, %v2204
        %v2333 = vsel %vm2077, %v1949, %v2205
        %v2334 = vsel %vm2078, %v1950, %v2206
        %v2335 = vsel %vm2079, %v1951, %v2207
        %v2336 = vsel %vm2080, %v1952, %v2208
        %v2337 = vsel %vm2081, %v1953, %v2209
        %v2338 = vsel %vm2082, %v1954, %v2210
        %v2339 = vsel %vm2083, %v1955, %v2211
        %v2340 = vsel %vm2084, %v1956, %v2212
        %v2341 = vsel %vm2085, %v1957, %v2213
        %v2342 = vsel %vm2086, %v1958, %v2214
        %v2343 = vsel %vm2087, %v1959, %v2215
        %v2344 = vsel %vm2088, %v1960, %v2216
        %v2345 = vsel %vm2089, %v1961, %v2217
        %v2346 = vsel %vm2090, %v1962, %v2218
        %v2347 = vsel %vm2091, %v1963, %v2219
        %v2348 = vsel %vm2092, %v1964, %v2220
        %v2349 = vsel %vm2093, %v1965, %v2221
        %v2350 = vsel %vm2094, %v1966, %v2222
        %v2351 = vsel %vm2095, %v1967, %v2223
        %v2352 = vsel %vm2096, %v1968, %v2224
        %v2353 = vsel %vm2097, %v1969, %v2225
        %v2354 = vsel %vm2098, %v1970, %v2226
        %v2355 = vsel %vm2099, %v1971, %v2227
        %v2356 = vsel %vm2100, %v1972, %v2228
        %v2357 = vsel %vm2101, %v1973, %v2229
        %v2358 = vsel %vm2102, %v1974, %v2230
        %v2359 = vsel %vm2103, %v1975, %v2231
        %v2360 = vsel %vm2104, %v1976, %v2232
        %v2361 = vsel %vm2105, %v1977, %v2233
        %v2362 = vsel %vm2106, %v1978, %v2234
        %v2363 = vsel %vm2107, %v1979, %v2235
        %v2364 = vsel %vm2108, %v1980, %v2236
        %v2365 = vsel %vm2109, %v1981, %v2237
        %v2366 = vsel %vm2110, %v1982, %v2238
        %v2367 = vsel %vm2111, %v1983, %v2239
        %v2368 = vsel %vm2112, %v1984, %v2240
        %v2369 = vsel %vm2113, %v1985, %v2241
        %v2370 = vsel %vm2114, %v1986, %v2242
        %v2371 = vsel %vm2115, %v1987, %v2243
        %v2372 = vsel %vm2116, %v1988, %v2244
        %v2373 = vsel %vm2117, %v1989, %v2245
        %v2374 = vsel %vm2118, %v1990, %v2246
        %v2375 = vsel %vm2119, %v1991, %v2247
        %v2376 = vsel %vm2120, %v1992, %v2248
        %v2377 = vsel %vm2121, %v1993, %v2249
        %v2378 = vsel %vm2122, %v1994, %v2250
        %v2379 = vsel %vm2123, %v1995, %v2251
        %v2380 = vsel %vm2124, %v1996, %v2252
        %v2381 = vsel %vm2125, %v1997, %v2253
        %v2382 = vsel %vm2126, %v1998, %v2254
        %v2383 = vsel %vm2127, %v1999, %v2255
        %v2384 = vsel %vm2128, %v2000, %v2256
        %v2385 = vsel %vm2129, %v2001, %v2257
        %v2386 = vsel %vm2130, %v2002, %v2258
        %v2387 = vsel %vm2131, %v2003, %v2259
        %v2388 = vsel %vm2132, %v2004, %v2260
        %v2389 = vsel %vm2133, %v2005, %v2261
        %v2390 = vsel %vm2134, %v2006, %v2262
        %v2391 = vsel %vm2135, %v2007, %v2263
        %v2392 = vsel %vm2136, %v2008, %v2264
        %v2393 = vsel %vm2137, %v2009, %v2265
        %v2394 = vsel %vm2138, %v2010, %v2266
        %v2395 = vsel %vm2139, %v2011, %v2267
        %v2396 = vsel %vm2140, %v2012, %v2268
        %v2397 = vsel %vm2141, %v2013, %v2269
        %v2398 = vsel %vm2142, %v2014, %v2270
        %v2399 = vsel %vm2143, %v2015, %v2271
        %v2400 = vsel %vm2144, %v2016, %v2272
        %v2401 = vsel %vm2145, %v2017, %v2273
        %v2402 = vsel %vm2146, %v2018, %v2274
        %v2403 = vsel %vm2147, %v2019, %v2275
        %v2404 = vsel %vm2148, %v2020, %v2276
        %v2405 = vsel %vm2149, %v2021, %v2277
        %v2406 = vsel %vm2150, %v2022, %v2278
        %v2407 = vsel %vm2151, %v2023, %v2279
        %v2408 = vsel %vm2152, %v2024, %v2280
        %v2409 = vsel %vm2153, %v2025, %v2281
        %v2410 = vsel %vm2154, %v2026, %v2282
        %v2411 = vsel %vm2155, %v2027, %v2283
        %v2412 = vsel %vm2156, %v2028, %v2284
        %v2413 = vsel %vm2157, %v2029, %v2285
        %v2414 = vsel %vm2158, %v2030, %v2286
        %v2415 = vsel %vm2159, %v2031, %v2287
        %v2416 = vsel %vm2160, %v2032, %v2288
        %v2417 = vsel %vm2161, %v2033, %v2289
        %v2418 = vsel %vm2162, %v2034, %v2290
        %v2419 = vsel %vm2163, %v2035, %v2291
        %v2420 = vsel %vm2164, %v2036, %v2292
        %v2421 = vsel %vm2165, %v2037, %v2293
        %v2422 = vsel %vm2166, %v2038, %v2294
        %v2423 = vsel %vm2167, %v2039, %v2295
        %v2424 = vsel %vm2168, %v2040, %v2296
        %v2425 = vsel %vm2169, %v2041, %v2297
        %v2426 = vsel %vm2170, %v2042, %v2298
        %v2427 = vsel %vm2171, %v2043, %v2299
        %v2428 = vsel %vm2172, %v2044, %v2300
        %v2429 = vsel %vm2173, %v2045, %v2301
        %v2430 = vsel %vm2174, %v2046, %v2302
        %v2431 = vsel %vm2175, %v2047, %v2303
        %v2432 = vsel %vm2176, %v2048, %v2304
        %v2433 = vsel %vm2177, %v2049, %v2305
        %v2434 = vsel %vm2178, %v2050, %v2306
        %v2435 = vsel %vm2179, %v2051, %v2307
        %v2436 = vsel %vm2180, %v2052, %v2308
        %v2437 = vsel %vm2181, %v2053, %v2309
        %v2438 = vsel %vm2182, %v2054, %v2310
        %v2439 = vsel %vm2183, %v2055, %v2311
        %v2440 = vsel %vm2184, %v2056, %v2312
        %v2441 = vsel %vm2185, %v2057, %v2313
        %v2442 = vsel %vm2186, %v2058, %v2314
        %v2443 = vsel %vm2187, %v2059, %v2315
        %v2444 = vsel %vm2188, %v2060, %v2316
        %v2445 = vsel %vm2189, %v2061, %v2317
        %v2446 = vsel %vm2190, %v2062, %v2318
        %v2447 = vsel %vm2191, %v2063, %v2319
        %v2448 = vpack.c.bf16 %v2320, %v2320
        %v2449 = vpack.c.bf16 %v2321, %v2321
        %v2450 = vpack.c.bf16 %v2322, %v2322
        %v2451 = vpack.c.bf16 %v2323, %v2323
        %v2452 = vpack.c.bf16 %v2324, %v2324
        %v2453 = vpack.c.bf16 %v2325, %v2325
        %v2454 = vpack.c.bf16 %v2326, %v2326
        %v2455 = vpack.c.bf16 %v2327, %v2327
        %v2456 = vpack.c.bf16 %v2328, %v2328
        %v2457 = vpack.c.bf16 %v2329, %v2329
        %v2458 = vpack.c.bf16 %v2330, %v2330
        %v2459 = vpack.c.bf16 %v2331, %v2331
        %v2460 = vpack.c.bf16 %v2332, %v2332
        %v2461 = vpack.c.bf16 %v2333, %v2333
        %v2462 = vpack.c.bf16 %v2334, %v2334
        %v2463 = vpack.c.bf16 %v2335, %v2335
        %v2464 = vpack.c.bf16 %v2336, %v2336
        %v2465 = vpack.c.bf16 %v2337, %v2337
        %v2466 = vpack.c.bf16 %v2338, %v2338
        %v2467 = vpack.c.bf16 %v2339, %v2339
        %v2468 = vpack.c.bf16 %v2340, %v2340
        %v2469 = vpack.c.bf16 %v2341, %v2341
        %v2470 = vpack.c.bf16 %v2342, %v2342
        %v2471 = vpack.c.bf16 %v2343, %v2343
        %v2472 = vpack.c.bf16 %v2344, %v2344
        %v2473 = vpack.c.bf16 %v2345, %v2345
        %v2474 = vpack.c.bf16 %v2346, %v2346
        %v2475 = vpack.c.bf16 %v2347, %v2347
        %v2476 = vpack.c.bf16 %v2348, %v2348
        %v2477 = vpack.c.bf16 %v2349, %v2349
        %v2478 = vpack.c.bf16 %v2350, %v2350
        %v2479 = vpack.c.bf16 %v2351, %v2351
        %v2480 = vpack.c.bf16 %v2352, %v2352
        %v2481 = vpack.c.bf16 %v2353, %v2353
        %v2482 = vpack.c.bf16 %v2354, %v2354
        %v2483 = vpack.c.bf16 %v2355, %v2355
        %v2484 = vpack.c.bf16 %v2356, %v2356
        %v2485 = vpack.c.bf16 %v2357, %v2357
        %v2486 = vpack.c.bf16 %v2358, %v2358
        %v2487 = vpack.c.bf16 %v2359, %v2359
        %v2488 = vpack.c.bf16 %v2360, %v2360
        %v2489 = vpack.c.bf16 %v2361, %v2361
        %v2490 = vpack.c.bf16 %v2362, %v2362
        %v2491 = vpack.c.bf16 %v2363, %v2363
        %v2492 = vpack.c.bf16 %v2364, %v2364
        %v2493 = vpack.c.bf16 %v2365, %v2365
        %v2494 = vpack.c.bf16 %v2366, %v2366
        %v2495 = vpack.c.bf16 %v2367, %v2367
        %v2496 = vpack.c.bf16 %v2368, %v2368
        %v2497 = vpack.c.bf16 %v2369, %v2369
        %v2498 = vpack.c.bf16 %v2370, %v2370
        %v2499 = vpack.c.bf16 %v2371, %v2371
        %v2500 = vpack.c.bf16 %v2372, %v2372
        %v2501 = vpack.c.bf16 %v2373, %v2373
        %v2502 = vpack.c.bf16 %v2374, %v2374
        %v2503 = vpack.c.bf16 %v2375, %v2375
        %v2504 = vpack.c.bf16 %v2376, %v2376
        %v2505 = vpack.c.bf16 %v2377, %v2377
        %v2506 = vpack.c.bf16 %v2378, %v2378
        %v2507 = vpack.c.bf16 %v2379, %v2379
        %v2508 = vpack.c.bf16 %v2380, %v2380
        %v2509 = vpack.c.bf16 %v2381, %v2381
        %v2510 = vpack.c.bf16 %v2382, %v2382
        %v2511 = vpack.c.bf16 %v2383, %v2383
        %v2512 = vpack.c.bf16 %v2384, %v2384
        %v2513 = vpack.c.bf16 %v2385, %v2385
        %v2514 = vpack.c.bf16 %v2386, %v2386
        %v2515 = vpack.c.bf16 %v2387, %v2387
        %v2516 = vpack.c.bf16 %v2388, %v2388
        %v2517 = vpack.c.bf16 %v2389, %v2389
        %v2518 = vpack.c.bf16 %v2390, %v2390
        %v2519 = vpack.c.bf16 %v2391, %v2391
        %v2520 = vpack.c.bf16 %v2392, %v2392
        %v2521 = vpack.c.bf16 %v2393, %v2393
        %v2522 = vpack.c.bf16 %v2394, %v2394
        %v2523 = vpack.c.bf16 %v2395, %v2395
        %v2524 = vpack.c.bf16 %v2396, %v2396
        %v2525 = vpack.c.bf16 %v2397, %v2397
        %v2526 = vpack.c.bf16 %v2398, %v2398
        %v2527 = vpack.c.bf16 %v2399, %v2399
        %v2528 = vpack.c.bf16 %v2400, %v2400
        %v2529 = vpack.c.bf16 %v2401, %v2401
        %v2530 = vpack.c.bf16 %v2402, %v2402
        %v2531 = vpack.c.bf16 %v2403, %v2403
        %v2532 = vpack.c.bf16 %v2404, %v2404
        %v2533 = vpack.c.bf16 %v2405, %v2405
        %v2534 = vpack.c.bf16 %v2406, %v2406
        %v2535 = vpack.c.bf16 %v2407, %v2407
        %v2536 = vpack.c.bf16 %v2408, %v2408
        %v2537 = vpack.c.bf16 %v2409, %v2409
        %v2538 = vpack.c.bf16 %v2410, %v2410
        %v2539 = vpack.c.bf16 %v2411, %v2411
        %v2540 = vpack.c.bf16 %v2412, %v2412
        %v2541 = vpack.c.bf16 %v2413, %v2413
        %v2542 = vpack.c.bf16 %v2414, %v2414
        %v2543 = vpack.c.bf16 %v2415, %v2415
        %v2544 = vpack.c.bf16 %v2416, %v2416
        %v2545 = vpack.c.bf16 %v2417, %v2417
        %v2546 = vpack.c.bf16 %v2418, %v2418
        %v2547 = vpack.c.bf16 %v2419, %v2419
        %v2548 = vpack.c.bf16 %v2420, %v2420
        %v2549 = vpack.c.bf16 %v2421, %v2421
        %v2550 = vpack.c.bf16 %v2422, %v2422
        %v2551 = vpack.c.bf16 %v2423, %v2423
        %v2552 = vpack.c.bf16 %v2424, %v2424
        %v2553 = vpack.c.bf16 %v2425, %v2425
        %v2554 = vpack.c.bf16 %v2426, %v2426
        %v2555 = vpack.c.bf16 %v2427, %v2427
        %v2556 = vpack.c.bf16 %v2428, %v2428
        %v2557 = vpack.c.bf16 %v2429, %v2429
        %v2558 = vpack.c.bf16 %v2430, %v2430
        %v2559 = vpack.c.bf16 %v2431, %v2431
        %v2560 = vpack.c.bf16 %v2432, %v2432
        %v2561 = vpack.c.bf16 %v2433, %v2433
        %v2562 = vpack.c.bf16 %v2434, %v2434
        %v2563 = vpack.c.bf16 %v2435, %v2435
        %v2564 = vpack.c.bf16 %v2436, %v2436
        %v2565 = vpack.c.bf16 %v2437, %v2437
        %v2566 = vpack.c.bf16 %v2438, %v2438
        %v2567 = vpack.c.bf16 %v2439, %v2439
        %v2568 = vpack.c.bf16 %v2440, %v2440
        %v2569 = vpack.c.bf16 %v2441, %v2441
        %v2570 = vpack.c.bf16 %v2442, %v2442
        %v2571 = vpack.c.bf16 %v2443, %v2443
        %v2572 = vpack.c.bf16 %v2444, %v2444
        %v2573 = vpack.c.bf16 %v2445, %v2445
        %v2574 = vpack.c.bf16 %v2446, %v2446
        %v2575 = vpack.c.bf16 %v2447, %v2447
        %vm2576 = vcmask 60416
        %2577 = vst.msk [vmem:[%s302] sm:$0xf] %vm2576, %v2448
        %2578 = vst.msk [vmem:[%s302 + $0x4] sm:$0xf] %vm2576, %v2449
        %2579 = vst.msk [vmem:[%s302 + $0x8] sm:$0xf] %vm2576, %v2450
        %2580 = vst.msk [vmem:[%s302 + $0xc] sm:$0xf] %vm2576, %v2451
        %2581 = vst.msk [vmem:[%s302 + $0x10] sm:$0xf] %vm2576, %v2452
        %2582 = vst.msk [vmem:[%s302 + $0x14] sm:$0xf] %vm2576, %v2453
        %2583 = vst.msk [vmem:[%s302 + $0x18] sm:$0xf] %vm2576, %v2454
        %2584 = vst.msk [vmem:[%s302 + $0x1c] sm:$0xf] %vm2576, %v2455
        %2585 = vst.msk [vmem:[%s302 + $0x20] sm:$0xf] %vm2576, %v2456
        %2586 = vst.msk [vmem:[%s302 + $0x24] sm:$0xf] %vm2576, %v2457
        %2587 = vst.msk [vmem:[%s302 + $0x28] sm:$0xf] %vm2576, %v2458
        %2588 = vst.msk [vmem:[%s302 + $0x2c] sm:$0xf] %vm2576, %v2459
        %2589 = vst.msk [vmem:[%s302 + $0x30] sm:$0xf] %vm2576, %v2460
        %2590 = vst.msk [vmem:[%s302 + $0x34] sm:$0xf] %vm2576, %v2461
        %2591 = vst.msk [vmem:[%s302 + $0x38] sm:$0xf] %vm2576, %v2462
        %2592 = vst.msk [vmem:[%s302 + $0x3c] sm:$0xf] %vm2576, %v2463
        %2593 = vst.msk [vmem:[%s302 + $0x40] sm:$0xf] %vm2576, %v2464
        %2594 = vst.msk [vmem:[%s302 + $0x44] sm:$0xf] %vm2576, %v2465
        %2595 = vst.msk [vmem:[%s302 + $0x48] sm:$0xf] %vm2576, %v2466
        %2596 = vst.msk [vmem:[%s302 + $0x4c] sm:$0xf] %vm2576, %v2467
        %2597 = vst.msk [vmem:[%s302 + $0x50] sm:$0xf] %vm2576, %v2468
        %2598 = vst.msk [vmem:[%s302 + $0x54] sm:$0xf] %vm2576, %v2469
        %2599 = vst.msk [vmem:[%s302 + $0x58] sm:$0xf] %vm2576, %v2470
        %2600 = vst.msk [vmem:[%s302 + $0x5c] sm:$0xf] %vm2576, %v2471
        %2601 = vst.msk [vmem:[%s302 + $0x60] sm:$0xf] %vm2576, %v2472
        %2602 = vst.msk [vmem:[%s302 + $0x64] sm:$0xf] %vm2576, %v2473
        %2603 = vst.msk [vmem:[%s302 + $0x68] sm:$0xf] %vm2576, %v2474
        %2604 = vst.msk [vmem:[%s302 + $0x6c] sm:$0xf] %vm2576, %v2475
        %2605 = vst.msk [vmem:[%s302 + $0x70] sm:$0xf] %vm2576, %v2476
        %2606 = vst.msk [vmem:[%s302 + $0x74] sm:$0xf] %vm2576, %v2477
        %2607 = vst.msk [vmem:[%s302 + $0x78] sm:$0xf] %vm2576, %v2478
        %2608 = vst.msk [vmem:[%s302 + $0x7c] sm:$0xf] %vm2576, %v2479
        %2609 = vst.msk [vmem:[%s302 + $0x80] sm:$0xf] %vm2576, %v2480
        %2610 = vst.msk [vmem:[%s302 + $0x84] sm:$0xf] %vm2576, %v2481
        %2611 = vst.msk [vmem:[%s302 + $0x88] sm:$0xf] %vm2576, %v2482
        %2612 = vst.msk [vmem:[%s302 + $0x8c] sm:$0xf] %vm2576, %v2483
        %2613 = vst.msk [vmem:[%s302 + $0x90] sm:$0xf] %vm2576, %v2484
        %2614 = vst.msk [vmem:[%s302 + $0x94] sm:$0xf] %vm2576, %v2485
        %2615 = vst.msk [vmem:[%s302 + $0x98] sm:$0xf] %vm2576, %v2486
        %2616 = vst.msk [vmem:[%s302 + $0x9c] sm:$0xf] %vm2576, %v2487
        %2617 = vst.msk [vmem:[%s302 + $0xa0] sm:$0xf] %vm2576, %v2488
        %2618 = vst.msk [vmem:[%s302 + $0xa4] sm:$0xf] %vm2576, %v2489
        %2619 = vst.msk [vmem:[%s302 + $0xa8] sm:$0xf] %vm2576, %v2490
        %2620 = vst.msk [vmem:[%s302 + $0xac] sm:$0xf] %vm2576, %v2491
        %2621 = vst.msk [vmem:[%s302 + $0xb0] sm:$0xf] %vm2576, %v2492
        %2622 = vst.msk [vmem:[%s302 + $0xb4] sm:$0xf] %vm2576, %v2493
        %2623 = vst.msk [vmem:[%s302 + $0xb8] sm:$0xf] %vm2576, %v2494
        %2624 = vst.msk [vmem:[%s302 + $0xbc] sm:$0xf] %vm2576, %v2495
        %2625 = vst.msk [vmem:[%s302 + $0xc0] sm:$0xf] %vm2576, %v2496
        %2626 = vst.msk [vmem:[%s302 + $0xc4] sm:$0xf] %vm2576, %v2497
        %2627 = vst.msk [vmem:[%s302 + $0xc8] sm:$0xf] %vm2576, %v2498
        %2628 = vst.msk [vmem:[%s302 + $0xcc] sm:$0xf] %vm2576, %v2499
        %2629 = vst.msk [vmem:[%s302 + $0xd0] sm:$0xf] %vm2576, %v2500
        %2630 = vst.msk [vmem:[%s302 + $0xd4] sm:$0xf] %vm2576, %v2501
        %2631 = vst.msk [vmem:[%s302 + $0xd8] sm:$0xf] %vm2576, %v2502
        %2632 = vst.msk [vmem:[%s302 + $0xdc] sm:$0xf] %vm2576, %v2503
        %2633 = vst.msk [vmem:[%s302 + $0xe0] sm:$0xf] %vm2576, %v2504
        %2634 = vst.msk [vmem:[%s302 + $0xe4] sm:$0xf] %vm2576, %v2505
        %2635 = vst.msk [vmem:[%s302 + $0xe8] sm:$0xf] %vm2576, %v2506
        %2636 = vst.msk [vmem:[%s302 + $0xec] sm:$0xf] %vm2576, %v2507
        %2637 = vst.msk [vmem:[%s302 + $0xf0] sm:$0xf] %vm2576, %v2508
        %2638 = vst.msk [vmem:[%s302 + $0xf4] sm:$0xf] %vm2576, %v2509
        %2639 = vst.msk [vmem:[%s302 + $0xf8] sm:$0xf] %vm2576, %v2510
        %2640 = vst.msk [vmem:[%s302 + $0xfc] sm:$0xf] %vm2576, %v2511
        %2641 = vst.msk [vmem:[%s302 + $0x100] sm:$0xf] %vm2576, %v2512
        %2642 = vst.msk [vmem:[%s302 + $0x104] sm:$0xf] %vm2576, %v2513
        %2643 = vst.msk [vmem:[%s302 + $0x108] sm:$0xf] %vm2576, %v2514
        %2644 = vst.msk [vmem:[%s302 + $0x10c] sm:$0xf] %vm2576, %v2515
        %2645 = vst.msk [vmem:[%s302 + $0x110] sm:$0xf] %vm2576, %v2516
        %2646 = vst.msk [vmem:[%s302 + $0x114] sm:$0xf] %vm2576, %v2517
        %2647 = vst.msk [vmem:[%s302 + $0x118] sm:$0xf] %vm2576, %v2518
        %2648 = vst.msk [vmem:[%s302 + $0x11c] sm:$0xf] %vm2576, %v2519
        %2649 = vst.msk [vmem:[%s302 + $0x120] sm:$0xf] %vm2576, %v2520
        %2650 = vst.msk [vmem:[%s302 + $0x124] sm:$0xf] %vm2576, %v2521
        %2651 = vst.msk [vmem:[%s302 + $0x128] sm:$0xf] %vm2576, %v2522
        %2652 = vst.msk [vmem:[%s302 + $0x12c] sm:$0xf] %vm2576, %v2523
        %2653 = vst.msk [vmem:[%s302 + $0x130] sm:$0xf] %vm2576, %v2524
        %2654 = vst.msk [vmem:[%s302 + $0x134] sm:$0xf] %vm2576, %v2525
        %2655 = vst.msk [vmem:[%s302 + $0x138] sm:$0xf] %vm2576, %v2526
        %2656 = vst.msk [vmem:[%s302 + $0x13c] sm:$0xf] %vm2576, %v2527
        %2657 = vst.msk [vmem:[%s302 + $0x140] sm:$0xf] %vm2576, %v2528
        %2658 = vst.msk [vmem:[%s302 + $0x144] sm:$0xf] %vm2576, %v2529
        %2659 = vst.msk [vmem:[%s302 + $0x148] sm:$0xf] %vm2576, %v2530
        %2660 = vst.msk [vmem:[%s302 + $0x14c] sm:$0xf] %vm2576, %v2531
        %2661 = vst.msk [vmem:[%s302 + $0x150] sm:$0xf] %vm2576, %v2532
        %2662 = vst.msk [vmem:[%s302 + $0x154] sm:$0xf] %vm2576, %v2533
        %2663 = vst.msk [vmem:[%s302 + $0x158] sm:$0xf] %vm2576, %v2534
        %2664 = vst.msk [vmem:[%s302 + $0x15c] sm:$0xf] %vm2576, %v2535
        %2665 = vst.msk [vmem:[%s302 + $0x160] sm:$0xf] %vm2576, %v2536
        %2666 = vst.msk [vmem:[%s302 + $0x164] sm:$0xf] %vm2576, %v2537
        %2667 = vst.msk [vmem:[%s302 + $0x168] sm:$0xf] %vm2576, %v2538
        %2668 = vst.msk [vmem:[%s302 + $0x16c] sm:$0xf] %vm2576, %v2539
        %2669 = vst.msk [vmem:[%s302 + $0x170] sm:$0xf] %vm2576, %v2540
        %2670 = vst.msk [vmem:[%s302 + $0x174] sm:$0xf] %vm2576, %v2541
        %2671 = vst.msk [vmem:[%s302 + $0x178] sm:$0xf] %vm2576, %v2542
        %2672 = vst.msk [vmem:[%s302 + $0x17c] sm:$0xf] %vm2576, %v2543
        %2673 = vst.msk [vmem:[%s302 + $0x180] sm:$0xf] %vm2576, %v2544
        %2674 = vst.msk [vmem:[%s302 + $0x184] sm:$0xf] %vm2576, %v2545
        %2675 = vst.msk [vmem:[%s302 + $0x188] sm:$0xf] %vm2576, %v2546
        %2676 = vst.msk [vmem:[%s302 + $0x18c] sm:$0xf] %vm2576, %v2547
        %2677 = vst.msk [vmem:[%s302 + $0x190] sm:$0xf] %vm2576, %v2548
        %2678 = vst.msk [vmem:[%s302 + $0x194] sm:$0xf] %vm2576, %v2549
        %2679 = vst.msk [vmem:[%s302 + $0x198] sm:$0xf] %vm2576, %v2550
        %2680 = vst.msk [vmem:[%s302 + $0x19c] sm:$0xf] %vm2576, %v2551
        %2681 = vst.msk [vmem:[%s302 + $0x1a0] sm:$0xf] %vm2576, %v2552
        %2682 = vst.msk [vmem:[%s302 + $0x1a4] sm:$0xf] %vm2576, %v2553
        %2683 = vst.msk [vmem:[%s302 + $0x1a8] sm:$0xf] %vm2576, %v2554
        %2684 = vst.msk [vmem:[%s302 + $0x1ac] sm:$0xf] %vm2576, %v2555
        %2685 = vst.msk [vmem:[%s302 + $0x1b0] sm:$0xf] %vm2576, %v2556
        %2686 = vst.msk [vmem:[%s302 + $0x1b4] sm:$0xf] %vm2576, %v2557
        %2687 = vst.msk [vmem:[%s302 + $0x1b8] sm:$0xf] %vm2576, %v2558
        %2688 = vst.msk [vmem:[%s302 + $0x1bc] sm:$0xf] %vm2576, %v2559
        %2689 = vst.msk [vmem:[%s302 + $0x1c0] sm:$0xf] %vm2576, %v2560
        %2690 = vst.msk [vmem:[%s302 + $0x1c4] sm:$0xf] %vm2576, %v2561
        %2691 = vst.msk [vmem:[%s302 + $0x1c8] sm:$0xf] %vm2576, %v2562
        %2692 = vst.msk [vmem:[%s302 + $0x1cc] sm:$0xf] %vm2576, %v2563
        %2693 = vst.msk [vmem:[%s302 + $0x1d0] sm:$0xf] %vm2576, %v2564
        %2694 = vst.msk [vmem:[%s302 + $0x1d4] sm:$0xf] %vm2576, %v2565
        %2695 = vst.msk [vmem:[%s302 + $0x1d8] sm:$0xf] %vm2576, %v2566
        %2696 = vst.msk [vmem:[%s302 + $0x1dc] sm:$0xf] %vm2576, %v2567
        %2697 = vst.msk [vmem:[%s302 + $0x1e0] sm:$0xf] %vm2576, %v2568
        %2698 = vst.msk [vmem:[%s302 + $0x1e4] sm:$0xf] %vm2576, %v2569
        %2699 = vst.msk [vmem:[%s302 + $0x1e8] sm:$0xf] %vm2576, %v2570
        %2700 = vst.msk [vmem:[%s302 + $0x1ec] sm:$0xf] %vm2576, %v2571
        %2701 = vst.msk [vmem:[%s302 + $0x1f0] sm:$0xf] %vm2576, %v2572
        %2702 = vst.msk [vmem:[%s302 + $0x1f4] sm:$0xf] %vm2576, %v2573
        %2703 = vst.msk [vmem:[%s302 + $0x1f8] sm:$0xf] %vm2576, %v2574
        %2704 = vst.msk [vmem:[%s302 + $0x1fc] sm:$0xf] %vm2576, %v2575
      $region40: #{_bmm_core.1} parent=31 // pred_fallthru
        _
      %s2705 = smul.u32 128, %s21
      %p2706 = scmp.lt.s32.totalorder %s20, 0
      %s2707 = scalar_select %p2706, %s20, 0
      %p2708 = scmp.lt.s32.totalorder %s2705, 2047
      %s2709 = scalar_select %p2708, %s2705, 2047
      %p2710 = scmp.lt.s32.totalorder %s22, 0
      %s2711 = scalar_select %p2710, %s22, 0
      %s2712 = sadd.s32 %s2711, %s2709
      %s2713 = smul.addr %s2707, 2048
      %s2714 = sadd.s32 %s2712, %s2713
      %s2715 = smul.addr %s2714, 4
      %s2716 = scalar_lea.vmem %s3, %s2715
      // Predicated region
      $region41: #{_bmm_core.1} parent=31 // pred_check
        %p2717 = pneg %p148
      $region42: #{_bmm_core.1} parent=31 // pred_check_branch
        %2719 = sbr.rel (%p2717) target = $region44
      $region43: #{_bmm_core.1} parent=31 // pred_region
        %s2720 = smul.u32 128, %s21
      $region44: #{_bmm_core.1} parent=31 // pred_fallthru
        _
    $region32: #{_bmm_core.1} parent=5 // pred_fallthru
      _
    %p2721 = scmp.le.s32.totalorder 2, %s9
    // Predicated region
    $region45: #{_bmm_core.1} parent=5 // pred_check
      %p2722 = pneg %p2721
    $region46: #{_bmm_core.1} parent=5 // pred_check_branch
      %2724 = sbr.rel (%p2722) target = $region48
    $region47: #{_bmm_core.1} parent=5 // pred_region
      %s2725 = ssub.s32 %s9, 2
      // Predicated region
      $region49: #{_bmm_core.1} parent=47 // pred_check
        %p2726 = pneg %p154
      $region50: #{_bmm_core.1} parent=47 // pred_check_branch
        %2728 = sbr.rel (%p2726) target = $region52
      $region51: #{_bmm_core.1} parent=47 // pred_region
        %s2729 = smul.u32 128, %s25
        %p2730 = scmp.lt.s32.totalorder %s24, 0
        %s2731 = scalar_select %p2730, %s24, 0
        %p2732 = scmp.lt.s32.totalorder %s2729, 2047
        %s2733 = scalar_select %p2732, %s2729, 2047
        %p2734 = scmp.lt.s32.totalorder %s26, 0
        %s2735 = scalar_select %p2734, %s26, 0
        %s2736 = sadd.s32 %s2735, %s2733
        %s2737 = smul.addr %s2731, 2048
        %s2738 = sadd.s32 %s2736, %s2737
        %s2739 = smul.addr %s2738, 4
        %s2740 = scalar_lea.vmem %s3, %s2739
      $region52: #{_bmm_core.1} parent=47 // pred_fallthru
        _
    $region48: #{_bmm_core.1} parent=5 // pred_fallthru
      _
  $region6: #{_bmm_core.1} parent=0 // loop_footer
    %s13 = sadd.s32 1, %s9
  $region7: #{_bmm_core.1} parent=0 // loop_footer_branch
    %8 = sbr.rel target = $region3
  $region8: #{_bmm_core.1} parent=0 // loop_exit
    _

</llo_original>
